<compile_context>
chip_gen: v5e
topology: v5e:2x2
jax: 0.10.0
libtpu: 0.0.40
codegen_flags: <defaults>
</compile_context>

<pallas_src>
import functools
import math

import jax
import jax.numpy as jnp
from jax.experimental import pallas as pl
from jax.experimental.pallas import tpu as pltpu


# ----------------------------------------------------------------------------
# Generation-aware VMEM budget and tile targets
# ----------------------------------------------------------------------------

def _vmem_capacity_bytes():
    try:
        return int(pltpu.get_tpu_info().vmem_capacity_bytes)
    except Exception:
        return 64 * 1024 * 1024  # conservative (v7x-like) fallback


_VMEM_CAP = _vmem_capacity_bytes()
if _VMEM_CAP >= 100 * 1024 * 1024:
    # v5e / v6e class parts (128 MiB physical VMEM): big tiles, big budget.
    _VMEM_LIMIT = 100 * 1024 * 1024
    _BM_TARGET, _BN_TARGET, _BK_TARGET = 512, 1024, 512
else:
    # v7x class parts (64 MiB physical VMEM): keep headroom.
    _VMEM_LIMIT = 48 * 1024 * 1024
    _BM_TARGET, _BN_TARGET, _BK_TARGET = 256, 512, 512
_VMEM_SAFE = _VMEM_LIMIT // 2  # per-kernel-step soft budget used by heuristics


def _block_rows(dim, target):
    """Largest multiple-of-8 divisor of dim that is <= target, else the full dim."""
    if dim <= target:
        return dim
    b = (target // 8) * 8
    while b >= 8:
        if dim % b == 0:
            return b
        b -= 8
    return dim


def _block_lanes(dim, target):
    """Largest divisor of dim <= target that is a multiple of 256 (wide-MXU friendly
    on v6e/v7x), else a multiple of 128, else the full dim (always layout-legal)."""
    if dim <= target:
        return dim
    for unit in (256, 128):
        b = (target // unit) * unit
        while b >= unit:
            if dim % b == 0:
                return b
            b -= unit
    return dim


# ----------------------------------------------------------------------------
# Fused tiled linear:
#   y = act( [pre-LN](x) @ W + b ) [+ residual] [-> post-LN]
# ----------------------------------------------------------------------------

def _linear_kernel(*refs, activation, has_pre, has_res, has_ln, pre_eps, eps):
    idx = 0
    x_ref = refs[idx]; idx += 1
    w_ref = refs[idx]; idx += 1
    b_ref = refs[idx]; idx += 1
    if has_pre:
        pg_ref, pb_ref = refs[idx], refs[idx + 1]; idx += 2
    if has_res:
        res_ref = refs[idx]; idx += 1
    if has_ln:
        g_ref, bt_ref = refs[idx], refs[idx + 1]; idx += 2
    o_ref, acc_ref = refs[idx], refs[idx + 1]

    k = pl.program_id(2)

    @pl.when(k == 0)
    def _():
        acc_ref[...] = jnp.zeros_like(acc_ref)

    x = x_ref[...]
    if has_pre:
        # pre-LayerNorm prologue (requires the full K dim in this block; see wrapper).
        xf = x.astype(jnp.float32)
        mu = jnp.mean(xf, axis=-1, keepdims=True)
        xc = xf - mu
        var = jnp.mean(xc * xc, axis=-1, keepdims=True)
        x = xc * jax.lax.rsqrt(var + pre_eps) * pg_ref[...] + pb_ref[...]
    x = x.astype(jnp.bfloat16)

    acc_ref[...] += jnp.dot(x, w_ref[...].astype(jnp.bfloat16),
                            preferred_element_type=jnp.float32)

    @pl.when(k == pl.num_programs(2) - 1)
    def _():
        y = acc_ref[...] + b_ref[...]
        if activation == "relu":
            y = jnp.maximum(y, 0.0)
        if has_res:
            y = y + res_ref[...].astype(jnp.float32)
        if has_ln:
            mu = jnp.mean(y, axis=-1, keepdims=True)
            yc = y - mu
            var = jnp.mean(yc * yc, axis=-1, keepdims=True)
            y = yc * jax.lax.rsqrt(var + eps) * g_ref[...] + bt_ref[...]
        o_ref[...] = y.astype(o_ref.dtype)


def linear(x, w, b, *, activation="none", residual=None, ln=None, pre_ln=None,
           eps=1e-5, pre_eps=1e-6, out_dtype=jnp.bfloat16):
    """x: (..., K) @ w: (K, N) + b, with optional fused pre-LN / ReLU / residual / post-LN."""
    orig_shape = x.shape
    K = orig_shape[-1]
    N = w.shape[1]
    x2 = x.reshape(-1, K)
    M = x2.shape[0]

    has_pre = pre_ln is not None
    has_res = residual is not None
    has_ln = ln is not None

    # pre-LN needs the whole feature (K) row per block; post-LN needs full N per block.
    bk = K if has_pre else _block_lanes(K, _BK_TARGET)
    bn = N if has_ln else _block_lanes(N, _BN_TARGET)
    bm_target = _BM_TARGET
    if has_ln or has_pre:
        # Full-feature blocks: cap rows so the f32 accumulator + double-buffered
        # in/out/residual tiles stay within the soft VMEM budget (v7x 64 MiB concern).
        per_row = bn * (4 + 2 * 2) + bk * 2 * 2 + (bn * 2 * 2 if has_res else 0)
        bm_target = min(bm_target, max(8, (_VMEM_SAFE // max(per_row, 1)) // 8 * 8))
    bm = _block_rows(M, bm_target)

    gm, gn, gk = M // bm, N // bn, K // bk

    inputs = [x2, w, b.reshape(1, N)]
    # TODO(synk): give pipeline_mode=pl.Buffered(1) to grid-invariant blocks (bias /
    # gamma / beta / residual) once verified on the deployed jax version — saves the
    # second VMEM buffer that the default double-buffering allocates for them.
    in_specs = [
        pl.BlockSpec((bm, bk), lambda i, j, k: (i, k)),
        pl.BlockSpec((bk, bn), lambda i, j, k: (k, j)),
        pl.BlockSpec((1, bn), lambda i, j, k: (0, j)),
    ]
    if has_pre:
        pg, pb = pre_ln
        inputs += [pg.reshape(1, K), pb.reshape(1, K)]
        in_specs += [pl.BlockSpec((1, bk), lambda i, j, k: (0, k)),
                     pl.BlockSpec((1, bk), lambda i, j, k: (0, k))]
    if has_res:
        inputs.append(residual.reshape(M, N))
        in_specs.append(pl.BlockSpec((bm, bn), lambda i, j, k: (i, j)))
    if has_ln:
        g, bt = ln
        inputs += [g.reshape(1, N), bt.reshape(1, N)]
        in_specs += [pl.BlockSpec((1, bn), lambda i, j, k: (0, j)),
                     pl.BlockSpec((1, bn), lambda i, j, k: (0, j))]

    out = pl.pallas_call(
        functools.partial(_linear_kernel, activation=activation, has_pre=has_pre,
                          has_res=has_res, has_ln=has_ln, pre_eps=pre_eps, eps=eps),
        out_shape=jax.ShapeDtypeStruct((M, N), out_dtype),
        grid=(gm, gn, gk),
        in_specs=in_specs,
        out_specs=pl.BlockSpec((bm, bn), lambda i, j, k: (i, j)),
        scratch_shapes=[pltpu.VMEM((bm, bn), jnp.float32)],
        compiler_params=pltpu.CompilerParams(
            dimension_semantics=("parallel", "parallel", "arbitrary"),
            vmem_limit_bytes=_VMEM_LIMIT,
        ),
    )(*inputs)
    return out.reshape(orig_shape[:-1] + (N,))


# ----------------------------------------------------------------------------
# Feed-forward block: LN3(x + relu(x @ W1 + b1) @ W2 + b2)
#   * fused single kernel when the resident weights fit VMEM
#   * otherwise two K-tiled linear() calls (bounded VMEM for any H)
# ----------------------------------------------------------------------------

def _ffn_kernel(x_ref, w1_ref, b1_ref, w2_ref, b2_ref, g_ref, bt_ref, o_ref, *, eps):
    x = x_ref[...].astype(jnp.float32)
    h = jnp.dot(x_ref[...].astype(jnp.bfloat16), w1_ref[...].astype(jnp.bfloat16),
                preferred_element_type=jnp.float32) + b1_ref[...]
    h = jnp.maximum(h, 0.0)
    y = jnp.dot(h.astype(jnp.bfloat16), w2_ref[...].astype(jnp.bfloat16),
                preferred_element_type=jnp.float32) + b2_ref[...]
    y = y + x                                   # post-norm residual
    mu = jnp.mean(y, axis=-1, keepdims=True)
    yc = y - mu
    var = jnp.mean(yc * yc, axis=-1, keepdims=True)
    o_ref[...] = (yc * jax.lax.rsqrt(var + eps) * g_ref[...] + bt_ref[...]).astype(o_ref.dtype)


def ffn_block(x, w1, b1, w2, b2, gamma, beta, *, eps=1e-5, out_dtype=jnp.bfloat16):
    orig_shape = x.shape
    H = orig_shape[-1]
    F = w1.shape[1]
    x2 = x.reshape(-1, H)
    M = x2.shape[0]
    bm = _block_rows(M, _BM_TARGET)

    # Estimate the resident footprint of the fully fused path: both bf16 weights
    # (double-buffered by the pipeliner), the (bm, F) f32 hidden intermediate, and
    # the x / out / accumulator-sized tiles.
    fused_bytes = (2 * (H * F + F * H) * 2
                   + bm * F * 4
                   + 4 * bm * H * 4)
    if fused_bytes <= _VMEM_SAFE:
        out = pl.pallas_call(
            functools.partial(_ffn_kernel, eps=eps),
            out_shape=jax.ShapeDtypeStruct((M, H), out_dtype),
            grid=(M // bm,),
            in_specs=[
                pl.BlockSpec((bm, H), lambda i: (i, 0)),
                pl.BlockSpec((H, F), lambda i: (0, 0)),
                pl.BlockSpec((1, F), lambda i: (0, 0)),
                pl.BlockSpec((F, H), lambda i: (0, 0)),
                pl.BlockSpec((1, H), lambda i: (0, 0)),
                pl.BlockSpec((1, H), lambda i: (0, 0)),
                pl.BlockSpec((1, H), lambda i: (0, 0)),
            ],
            out_specs=pl.BlockSpec((bm, H), lambda i: (i, 0)),
            compiler_params=pltpu.CompilerParams(
                dimension_semantics=("parallel",),
                vmem_limit_bytes=_VMEM_LIMIT,
            ),
        )(x2, w1, b1.reshape(1, F), w2, b2.reshape(1, H),
          gamma.reshape(1, H), beta.reshape(1, H))
        return out.reshape(orig_shape)

    # Large-H fallback: two K-tiled linears (VMEM stays a few MiB; the only cost is
    # one extra bf16 HBM round-trip of the (M, 4H) hidden activation).
    h = linear(x, w1, b1, activation="relu", out_dtype=jnp.bfloat16)
    return linear(h, w2, b2, residual=x, ln=(gamma, beta), eps=eps, out_dtype=out_dtype)


# ----------------------------------------------------------------------------
# Flash-style attention: grid = (batch*heads, Tq blocks, Tk blocks),
# online softmax over Tk with f32 m/l/acc scratch, causal-block skipping.
# ----------------------------------------------------------------------------

def _flash_kernel(q_ref, k_ref, v_ref, o_ref, m_sc, l_sc, acc_sc, *,
                  scale, causal, tq, tk):
    qi = pl.program_id(1)
    ki = pl.program_id(2)

    @pl.when(ki == 0)
    def _():
        m_sc[...] = jnp.full_like(m_sc, -jnp.inf)
        l_sc[...] = jnp.zeros_like(l_sc)
        acc_sc[...] = jnp.zeros_like(acc_sc)

    def body():
        q = q_ref[0].astype(jnp.bfloat16)           # (tq, Dh)
        k = k_ref[0].astype(jnp.bfloat16)           # (tk, Dh)
        # transpose-free: contract the head dims -> lane-dense (tq, tk) scores
        s = jax.lax.dot_general(q, k, (((1,), (1,)), ((), ())),
                                preferred_element_type=jnp.float32) * scale
        if causal:
            row = qi * tq + jax.lax.broadcasted_iota(jnp.int32, s.shape, 0)
            col = ki * tk + jax.lax.broadcasted_iota(jnp.int32, s.shape, 1)
            s = jnp.where(col > row, -1e30, s)
        m_prev = m_sc[...]
        m_new = jnp.maximum(m_prev, jnp.max(s, axis=-1, keepdims=True))
        alpha = jnp.exp(m_prev - m_new)
        p = jnp.exp(s - m_new)
        l_sc[...] = alpha * l_sc[...] + jnp.sum(p, axis=-1, keepdims=True)
        acc_sc[...] = alpha * acc_sc[...] + jnp.dot(
            p.astype(jnp.bfloat16), v_ref[0].astype(jnp.bfloat16),
            preferred_element_type=jnp.float32)
        m_sc[...] = m_new

    if causal:
        # Skip key blocks that are entirely in the strict upper triangle.
        @pl.when(ki * tk <= qi * tq + (tq - 1))
        def _():
            body()
    else:
        body()

    @pl.when(ki == pl.num_programs(2) - 1)
    def _():
        o_ref[0] = (acc_sc[...] * pl.reciprocal(l_sc[...], approx=True)
                    ).astype(o_ref.dtype)


def _flash_attention(q, k, v, *, causal, scale, out_dtype=jnp.bfloat16):
    """q: (BH, Tq, Dh), k/v: (BH, Tk, Dh) head-major -> (BH, Tq, Dh)."""
    BH, Tq, Dh = q.shape
    Tk = k.shape[1]
    tq = _block_rows(Tq, 256)
    tk = _block_rows(Tk, 256)
    return pl.pallas_call(
        functools.partial(_flash_kernel, scale=scale, causal=causal, tq=tq, tk=tk),
        out_shape=jax.ShapeDtypeStruct((BH, Tq, Dh), out_dtype),
        grid=(BH, Tq // tq, Tk // tk),
        in_specs=[
            pl.BlockSpec((1, tq, Dh), lambda b, qi, ki: (b, qi, 0)),
            pl.BlockSpec((1, tk, Dh), lambda b, qi, ki: (b, ki, 0)),
            pl.BlockSpec((1, tk, Dh), lambda b, qi, ki: (b, ki, 0)),
        ],
        out_specs=pl.BlockSpec((1, tq, Dh), lambda b, qi, ki: (b, qi, 0)),
        scratch_shapes=[
            pltpu.VMEM((tq, 1), jnp.float32),    # running max m
            pltpu.VMEM((tq, 1), jnp.float32),    # running denom l
            pltpu.VMEM((tq, Dh), jnp.float32),   # output accumulator
        ],
        compiler_params=pltpu.CompilerParams(
            dimension_semantics=("parallel", "parallel", "arbitrary"),
            vmem_limit_bytes=_VMEM_LIMIT,
        ),
    )(q, k, v)


# TODO(synk): head split/merge transposes below stay in plain JAX (layout plumbing);
# for tiny head dims (< 128 lanes, like the test config) consider padding Dh to 128
# or packing several heads per lane tile before calling the kernel.
def _split_heads(x, num_heads):
    B, T, H = x.shape
    Dh = H // num_heads
    return x.reshape(B, T, num_heads, Dh).transpose(0, 2, 1, 3).reshape(B * num_heads, T, Dh)


def _merge_heads(x, batch):
    BH, T, Dh = x.shape
    nh = BH // batch
    return x.reshape(batch, nh, T, Dh).transpose(0, 2, 1, 3).reshape(batch, T, nh * Dh)


def self_attention(qkv, num_heads):
    """Causal self-attention on packed qkv: (B, T, 3H) -> (B, T, H)."""
    B, T, H3 = qkv.shape
    H = H3 // 3
    Dh = H // num_heads
    scale = 1.0 / math.sqrt(Dh)
    q = _split_heads(qkv[..., :H], num_heads)
    k = _split_heads(qkv[..., H:2 * H], num_heads)
    v = _split_heads(qkv[..., 2 * H:], num_heads)
    out = _flash_attention(q, k, v, causal=True, scale=scale)
    return _merge_heads(out, B)


def cross_attention(q, kv, num_heads):
    """Cross-attention: q (B, Tq, H), packed kv (B, Tk, 2H) -> (B, Tq, H)."""
    B, Tq, H = q.shape
    Dh = H // num_heads
    scale = 1.0 / math.sqrt(Dh)
    qh = _split_heads(q, num_heads)
    kh = _split_heads(kv[..., :H], num_heads)
    vh = _split_heads(kv[..., H:], num_heads)
    out = _flash_attention(qh, kh, vh, causal=False, scale=scale)
    return _merge_heads(out, B)


# ----------------------------------------------------------------------------
# Model composition (glue in plain JAX, all heavy math in the Pallas kernels above)
# ----------------------------------------------------------------------------

def cross_attention_block(x_q, x_kv, p, num_heads):
    """CrossAttentionBlock.forward: pre-norm (eps=1e-6, shared LN fused into the
    projections), cross-attn, out_proj + residual fused."""
    q = linear(x_q, p["wq"], p["bq"], pre_ln=(p["ln_g"], p["ln_b"]), pre_eps=1e-6)
    kv = linear(x_kv, p["wkv"], p["bkv"], pre_ln=(p["ln_g"], p["ln_b"]), pre_eps=1e-6)
    attn = cross_attention(q, kv, num_heads)
    return linear(attn, p["out_w"], p["out_b"], residual=x_q)


def decoder_layer(x, memory, p, num_heads):
    """nn.TransformerDecoderLayer (post-norm, relu, batch_first=True), eval mode."""
    eps = 1e-5  # PyTorch layer_norm_eps default for TransformerDecoderLayer
    # --- causal self-attention (fused QKV projection) ---
    qkv = linear(x, p["sa_wqkv"], p["sa_bqkv"])
    sa = self_attention(qkv, num_heads)
    x = linear(sa, p["sa_wo"], p["sa_bo"], residual=x,
               ln=(p["ln1_g"], p["ln1_b"]), eps=eps)
    # --- cross-attention over memory (fused KV projection) ---
    q = linear(x, p["ca_wq"], p["ca_bq"])
    kv = linear(memory, p["ca_wkv"], p["ca_bkv"])
    ca = cross_attention(q, kv, num_heads)
    x = linear(ca, p["ca_wo"], p["ca_bo"], residual=x,
               ln=(p["ln2_g"], p["ln2_b"]), eps=eps)
    # --- feed-forward (fused kernel or K-tiled fallback) ---
    x = ffn_block(x, p["ff_w1"], p["ff_b1"], p["ff_w2"], p["ff_b2"],
                  p["ln3_g"], p["ln3_b"], eps=eps)
    return x


def local_decoder_forward(tgt_byte_seq, memory, params, num_heads):
    """LocalDecoder.forward: bytes (B,T) int32, memory (B,S,GH) -> logits (B,T,256)."""
    # TODO(synk): embedding gather stays in plain JAX (no clean tiny-gather Pallas path).
    tgt_embed = jnp.take(params["byte_emb"], tgt_byte_seq, axis=0)
    projected_memory = linear(memory, params["memproj_w"], params["memproj_b"])
    x = cross_attention_block(tgt_embed, projected_memory, params["init_ca"], num_heads)
    for lp in params["layers"]:
        x = decoder_layer(x, projected_memory, lp, num_heads)
    # final LayerNorm (eps=1e-6) fused into the prediction head as a prologue;
    # logits are emitted in f32.
    return linear(x, params["pred_w"], params["pred_b"],
                  pre_ln=(params["final_ln_g"], params["final_ln_b"]),
                  pre_eps=1e-6, out_dtype=jnp.float32)


# ----------------------------------------------------------------------------
# Deterministic parameter init (same logical shapes as the PyTorch module;
# matmul weights stored bf16 for MXU/DMA, biases & LN params f32)
# ----------------------------------------------------------------------------

def init_params(key, H, GH, num_layers):
    F = 4 * H
    ks = iter(jax.random.split(key, 8 + 8 * num_layers))

    def nrm(shape, std=0.02, dtype=jnp.bfloat16):
        return (std * jax.random.normal(next(ks), shape, jnp.float32)).astype(dtype)

    ones = lambda n: jnp.ones((n,), jnp.float32)
    zeros = lambda n: jnp.zeros((n,), jnp.float32)

    p = {
        "byte_emb": nrm((256, H), 1.0 / math.sqrt(H), dtype=jnp.float32),
        "memproj_w": nrm((GH, H)), "memproj_b": zeros(H),
        "init_ca": {
            "ln_g": ones(H), "ln_b": zeros(H),
            # shared qkv Linear, pre-split into q and kv column blocks
            "wq": nrm((H, H)), "bq": zeros(H),
            "wkv": nrm((H, 2 * H)), "bkv": zeros(2 * H),
            "out_w": nrm((H, H)), "out_b": zeros(H),
        },
        "final_ln_g": ones(H), "final_ln_b": zeros(H),
        "pred_w": nrm((H, 256)), "pred_b": zeros(256),
    }
    layers = []
    for _ in range(num_layers):
        lp = {
            "sa_wqkv": nrm((H, 3 * H)), "sa_bqkv": zeros(3 * H),
            "sa_wo": nrm((H, H)), "sa_bo": zeros(H),
            "ln1_g": ones(H), "ln1_b": zeros(H),
            "ca_wq": nrm((H, H)), "ca_bq": zeros(H),
            "ca_wkv": nrm((H, 2 * H)), "ca_bkv": zeros(2 * H),
            "ca_wo": nrm((H, H)), "ca_bo": zeros(H),
            "ln2_g": ones(H), "ln2_b": zeros(H),
            "ff_w1": nrm((H, F)), "ff_b1": zeros(F),
            "ff_w2": nrm((F, H)), "ff_b2": zeros(H),
            "ln3_g": ones(H), "ln3_b": zeros(H),
        }
        layers.append(lp)
    p["layers"] = layers
    return p


# ----------------------------------------------------------------------------
# Main
# ----------------------------------------------------------------------------

if __name__ == "__main__":
    B, T, S = 2, 8, 8           # batch, target byte seq len, memory (patch) seq len
    H, GH = 32, 64              # hidden_size, global_hidden_size
    NUM_HEADS, NUM_LAYERS = 4, 2

    key = jax.random.PRNGKey(0)
    k_tgt, k_mem, k_par = jax.random.split(key, 3)
    tgt_byte_seq = jax.random.randint(k_tgt, (B, T), 0, 256, dtype=jnp.int32)
    memory = jax.random.normal(k_mem, (B, S, GH), jnp.float32)
    params = init_params(k_par, H, GH, NUM_LAYERS)

    fwd = jax.jit(lambda t, m, p: local_decoder_forward(t, m, p, NUM_HEADS))
    logits = fwd(tgt_byte_seq, memory, params)
    jax.block_until_ready(logits)

    assert logits.shape == (B, T, 256), logits.shape
    assert logits.dtype == jnp.float32
    assert bool(jnp.all(jnp.isfinite(logits)))
    print("KERNEL_OK")
</pallas_src>

<mosaic_0001>
module attributes {stable_mosaic.version = 11 : i64} {
  func.func @_linear_kernel(%arg0: i32, %arg1: i32, %arg2: i32, %arg3: memref<16x32xf32, #tpu.memory_space<vmem>>, %arg4: memref<32x32xbf16, #tpu.memory_space<vmem>>, %arg5: memref<1x32xf32, #tpu.memory_space<vmem>>, %arg6: memref<1x32xf32, #tpu.memory_space<vmem>>, %arg7: memref<1x32xf32, #tpu.memory_space<vmem>>, %arg8: memref<16x32xbf16, #tpu.memory_space<vmem>>, %arg9: memref<16x32xf32, #tpu.memory_space<vmem>>) attributes {dimension_semantics = [#tpu.dimension_semantics<parallel>, #tpu.dimension_semantics<parallel>, #tpu.dimension_semantics<arbitrary>], iteration_bounds = array<i64: 1, 1, 1>, scalar_prefetch = 0 : i64, scratch_operands = 1 : i64, tpu.core_type = #tpu.core_type<tc>, window_params = [{transform_indices = @transform_0, window_bounds = array<i64: 16, 32>}, {transform_indices = @transform_1, window_bounds = array<i64: 32, 32>}, {transform_indices = @transform_2, window_bounds = array<i64: 1, 32>}, {transform_indices = @transform_3, window_bounds = array<i64: 1, 32>}, {transform_indices = @transform_4, window_bounds = array<i64: 1, 32>}, {transform_indices = @transform_5, window_bounds = array<i64: 16, 32>}]} {
    %c0_i32 = arith.constant 0 : i32
    %0 = arith.cmpi eq, %arg2, %c0_i32 : i32
    %1 = arith.extui %0 : i1 to i32
    %c0_i32_0 = arith.constant 0 : i32
    %2 = arith.cmpi ne, %1, %c0_i32_0 : i32
    scf.if %2 {
      %cst_19 = arith.constant 0.000000e+00 : f32
      %35 = vector.broadcast %cst_19 : f32 to vector<16x32xf32>
      %c0_20 = arith.constant 0 : index
      %c0_21 = arith.constant 0 : index
      %36 = vector.load %arg9[%c0_20, %c0_21] : memref<16x32xf32, #tpu.memory_space<vmem>>, vector<16x32xf32>
      tpu.vector_store %arg9[%c0_20, %c0_21], %35 {strides = array<i32>} : memref<16x32xf32, #tpu.memory_space<vmem>>, vector<16x32xf32>,
    } else {
    }
    %c0 = arith.constant 0 : index
    %c0_1 = arith.constant 0 : index
    %3 = vector.load %arg3[%c0, %c0_1] : memref<16x32xf32, #tpu.memory_space<vmem>>, vector<16x32xf32>
    %cst = arith.constant dense<0.000000e+00> : vector<16xf32>
    %4 = vector.multi_reduction <add>, %3, %cst [1] : vector<16x32xf32> to vector<16xf32>
    %5 = vector.shape_cast %4 : vector<16xf32> to vector<16x1xf32>
    %cst_2 = arith.constant 3.200000e+01 : f32
    %6 = vector.broadcast %cst_2 : f32 to vector<16x1xf32>
    %7 = arith.divf %5, %6 : vector<16x1xf32>
    %8 = vector.broadcast %7 : vector<16x1xf32> to vector<16x32xf32>
    %9 = arith.subf %3, %8 : vector<16x32xf32>
    %10 = arith.mulf %9, %9 : vector<16x32xf32>
    %cst_3 = arith.constant dense<0.000000e+00> : vector<16xf32>
    %11 = vector.multi_reduction <add>, %10, %cst_3 [1] : vector<16x32xf32> to vector<16xf32>
    %12 = vector.shape_cast %11 : vector<16xf32> to vector<16x1xf32>
    %cst_4 = arith.constant 3.200000e+01 : f32
    %13 = vector.broadcast %cst_4 : f32 to vector<16x1xf32>
    %14 = arith.divf %12, %13 : vector<16x1xf32>
    %cst_5 = arith.constant 9.99999997E-7 : f32
    %15 = vector.broadcast %cst_5 : f32 to vector<16x1xf32>
    %16 = arith.addf %14, %15 : vector<16x1xf32>
    %17 = math.rsqrt %16 : vector<16x1xf32>
    %18 = vector.broadcast %17 : vector<16x1xf32> to vector<16x32xf32>
    %19 = arith.mulf %9, %18 : vector<16x32xf32>
    %c0_6 = arith.constant 0 : index
    %c0_7 = arith.constant 0 : index
    %20 = vector.load %arg6[%c0_6, %c0_7] : memref<1x32xf32, #tpu.memory_space<vmem>>, vector<1x32xf32>
    %21 = vector.broadcast %20 : vector<1x32xf32> to vector<16x32xf32>
    %22 = arith.mulf %19, %21 : vector<16x32xf32>
    %c0_8 = arith.constant 0 : index
    %c0_9 = arith.constant 0 : index
    %23 = vector.load %arg7[%c0_8, %c0_9] : memref<1x32xf32, #tpu.memory_space<vmem>>, vector<1x32xf32>
    %24 = vector.broadcast %23 : vector<1x32xf32> to vector<16x32xf32>
    %25 = arith.addf %22, %24 : vector<16x32xf32>
    %26 = arith.truncf %25 : vector<16x32xf32> to vector<16x32xbf16>
    %c0_10 = arith.constant 0 : index
    %c0_11 = arith.constant 0 : index
    %27 = vector.load %arg9[%c0_10, %c0_11] : memref<16x32xf32, #tpu.memory_space<vmem>>, vector<16x32xf32>
    %c0_12 = arith.constant 0 : index
    %c0_13 = arith.constant 0 : index
    %28 = vector.load %arg4[%c0_12, %c0_13] : memref<32x32xbf16, #tpu.memory_space<vmem>>, vector<32x32xbf16>
    %cst_14 = arith.constant dense<0.000000e+00> : vector<16x32xf32>
    %29 = tpu.matmul %26, %28, %cst_14 {dimension_numbers = #tpu.dot_dimension_numbers<[1], [0], [0], [1], [0, 0, 1, 1], [], []>} : vector<16x32xbf16>, vector<32x32xbf16>, vector<16x32xf32> -> vector<16x32xf32>
    %30 = arith.addf %27, %29 : vector<16x32xf32>
    %c0_15 = arith.constant 0 : index
    %c0_16 = arith.constant 0 : index
    %31 = vector.load %arg9[%c0_15, %c0_16] : memref<16x32xf32, #tpu.memory_space<vmem>>, vector<16x32xf32>
    tpu.vector_store %arg9[%c0_15, %c0_16], %30 {strides = array<i32>} : memref<16x32xf32, #tpu.memory_space<vmem>>, vector<16x32xf32>,
    %c0_i32_17 = arith.constant 0 : i32
    %32 = arith.cmpi eq, %arg2, %c0_i32_17 : i32
    %33 = arith.extui %32 : i1 to i32
    %c0_i32_18 = arith.constant 0 : i32
    %34 = arith.cmpi ne, %33, %c0_i32_18 : i32
    scf.if %34 {
      %c0_19 = arith.constant 0 : index
      %c0_20 = arith.constant 0 : index
      %35 = vector.load %arg9[%c0_19, %c0_20] : memref<16x32xf32, #tpu.memory_space<vmem>>, vector<16x32xf32>
      %c0_21 = arith.constant 0 : index
      %c0_22 = arith.constant 0 : index
      %36 = vector.load %arg5[%c0_21, %c0_22] : memref<1x32xf32, #tpu.memory_space<vmem>>, vector<1x32xf32>
      %37 = vector.broadcast %36 : vector<1x32xf32> to vector<16x32xf32>
      %38 = arith.addf %35, %37 : vector<16x32xf32>
      %39 = arith.truncf %38 : vector<16x32xf32> to vector<16x32xbf16>
      %c0_23 = arith.constant 0 : index
      %c0_24 = arith.constant 0 : index
      %40 = vector.load %arg8[%c0_23, %c0_24] : memref<16x32xbf16, #tpu.memory_space<vmem>>, vector<16x32xbf16>
      tpu.vector_store %arg8[%c0_23, %c0_24], %39 {strides = array<i32>} : memref<16x32xbf16, #tpu.memory_space<vmem>>, vector<16x32xbf16>,
    } else {
    }
    return
  }
  func.func @transform_0(%arg0: i32, %arg1: i32, %arg2: i32) -> (i32, i32) {
    %c0_i32 = arith.constant 0 : i32
    return %arg0, %arg2 : i32, i32
  }
  func.func @transform_1(%arg0: i32, %arg1: i32, %arg2: i32) -> (i32, i32) {
    %c0_i32 = arith.constant 0 : i32
    return %arg2, %arg1 : i32, i32
  }
  func.func @transform_2(%arg0: i32, %arg1: i32, %arg2: i32) -> (i32, i32) {
    %c0_i32 = arith.constant 0 : i32
    %c0_i32_0 = arith.constant 0 : i32
    return %c0_i32, %arg1 : i32, i32
  }
  func.func @transform_3(%arg0: i32, %arg1: i32, %arg2: i32) -> (i32, i32) {
    %c0_i32 = arith.constant 0 : i32
    %c0_i32_0 = arith.constant 0 : i32
    return %c0_i32, %arg2 : i32, i32
  }
  func.func @transform_4(%arg0: i32, %arg1: i32, %arg2: i32) -> (i32, i32) {
    %c0_i32 = arith.constant 0 : i32
    %c0_i32_0 = arith.constant 0 : i32
    return %c0_i32, %arg2 : i32, i32
  }
  func.func @transform_5(%arg0: i32, %arg1: i32, %arg2: i32) -> (i32, i32) {
    %c0_i32 = arith.constant 0 : i32
    return %arg0, %arg1 : i32, i32
  }
}

module attributes {stable_mosaic.version = 11 : i64} {
  func.func @_linear_kernel(%arg0: i32, %arg1: i32, %arg2: i32, %arg3: memref<16x64xf32, #tpu.memory_space<vmem>>, %arg4: memref<64x32xbf16, #tpu.memory_space<vmem>>, %arg5: memref<1x32xf32, #tpu.memory_space<vmem>>, %arg6: memref<16x32xbf16, #tpu.memory_space<vmem>>, %arg7: memref<16x32xf32, #tpu.memory_space<vmem>>) attributes {dimension_semantics = [#tpu.dimension_semantics<parallel>, #tpu.dimension_semantics<parallel>, #tpu.dimension_semantics<arbitrary>], iteration_bounds = array<i64: 1, 1, 1>, scalar_prefetch = 0 : i64, scratch_operands = 1 : i64, tpu.core_type = #tpu.core_type<tc>, window_params = [{transform_indices = @transform_0, window_bounds = array<i64: 16, 64>}, {transform_indices = @transform_1, window_bounds = array<i64: 64, 32>}, {transform_indices = @transform_2, window_bounds = array<i64: 1, 32>}, {transform_indices = @transform_3, window_bounds = array<i64: 16, 32>}]} {
    %c0_i32 = arith.constant 0 : i32
    %0 = arith.cmpi eq, %arg2, %c0_i32 : i32
    %1 = arith.extui %0 : i1 to i32
    %c0_i32_0 = arith.constant 0 : i32
    %2 = arith.cmpi ne, %1, %c0_i32_0 : i32
    scf.if %2 {
      %cst_10 = arith.constant 0.000000e+00 : f32
      %13 = vector.broadcast %cst_10 : f32 to vector<16x32xf32>
      %c0_11 = arith.constant 0 : index
      %c0_12 = arith.constant 0 : index
      %14 = vector.load %arg7[%c0_11, %c0_12] : memref<16x32xf32, #tpu.memory_space<vmem>>, vector<16x32xf32>
      tpu.vector_store %arg7[%c0_11, %c0_12], %13 {strides = array<i32>} : memref<16x32xf32, #tpu.memory_space<vmem>>, vector<16x32xf32>,
    } else {
    }
    %c0 = arith.constant 0 : index
    %c0_1 = arith.constant 0 : index
    %3 = vector.load %arg3[%c0, %c0_1] : memref<16x64xf32, #tpu.memory_space<vmem>>, vector<16x64xf32>
    %4 = arith.truncf %3 : vector<16x64xf32> to vector<16x64xbf16>
    %c0_2 = arith.constant 0 : index
    %c0_3 = arith.constant 0 : index
    %5 = vector.load %arg7[%c0_2, %c0_3] : memref<16x32xf32, #tpu.memory_space<vmem>>, vector<16x32xf32>
    %c0_4 = arith.constant 0 : index
    %c0_5 = arith.constant 0 : index
    %6 = vector.load %arg4[%c0_4, %c0_5] : memref<64x32xbf16, #tpu.memory_space<vmem>>, vector<64x32xbf16>
    %cst = arith.constant dense<0.000000e+00> : vector<16x32xf32>
    %7 = tpu.matmul %4, %6, %cst {dimension_numbers = #tpu.dot_dimension_numbers<[1], [0], [0], [1], [0, 0, 1, 1], [], []>} : vector<16x64xbf16>, vector<64x32xbf16>, vector<16x32xf32> -> vector<16x32xf32>
    %8 = arith.addf %5, %7 : vector<16x32xf32>
    %c0_6 = arith.constant 0 : index
    %c0_7 = arith.constant 0 : index
    %9 = vector.load %arg7[%c0_6, %c0_7] : memref<16x32xf32, #tpu.memory_space<vmem>>, vector<16x32xf32>
    tpu.vector_store %arg7[%c0_6, %c0_7], %8 {strides = array<i32>} : memref<16x32xf32, #tpu.memory_space<vmem>>, vector<16x32xf32>,
    %c0_i32_8 = arith.constant 0 : i32
    %10 = arith.cmpi eq, %arg2, %c0_i32_8 : i32
    %11 = arith.extui %10 : i1 to i32
    %c0_i32_9 = arith.constant 0 : i32
    %12 = arith.cmpi ne, %11, %c0_i32_9 : i32
    scf.if %12 {
      %c0_10 = arith.constant 0 : index
      %c0_11 = arith.constant 0 : index
      %13 = vector.load %arg7[%c0_10, %c0_11] : memref<16x32xf32, #tpu.memory_space<vmem>>, vector<16x32xf32>
      %c0_12 = arith.constant 0 : index
      %c0_13 = arith.constant 0 : index
      %14 = vector.load %arg5[%c0_12, %c0_13] : memref<1x32xf32, #tpu.memory_space<vmem>>, vector<1x32xf32>
      %15 = vector.broadcast %14 : vector<1x32xf32> to vector<16x32xf32>
      %16 = arith.addf %13, %15 : vector<16x32xf32>
      %17 = arith.truncf %16 : vector<16x32xf32> to vector<16x32xbf16>
      %c0_14 = arith.constant 0 : index
      %c0_15 = arith.constant 0 : index
      %18 = vector.load %arg6[%c0_14, %c0_15] : memref<16x32xbf16, #tpu.memory_space<vmem>>, vector<16x32xbf16>
      tpu.vector_store %arg6[%c0_14, %c0_15], %17 {strides = array<i32>} : memref<16x32xbf16, #tpu.memory_space<vmem>>, vector<16x32xbf16>,
    } else {
    }
    return
  }
  func.func @transform_0(%arg0: i32, %arg1: i32, %arg2: i32) -> (i32, i32) {
    %c0_i32 = arith.constant 0 : i32
    return %arg0, %arg2 : i32, i32
  }
  func.func @transform_1(%arg0: i32, %arg1: i32, %arg2: i32) -> (i32, i32) {
    %c0_i32 = arith.constant 0 : i32
    return %arg2, %arg1 : i32, i32
  }
  func.func @transform_2(%arg0: i32, %arg1: i32, %arg2: i32) -> (i32, i32) {
    %c0_i32 = arith.constant 0 : i32
    %c0_i32_0 = arith.constant 0 : i32
    return %c0_i32, %arg1 : i32, i32
  }
  func.func @transform_3(%arg0: i32, %arg1: i32, %arg2: i32) -> (i32, i32) {
    %c0_i32 = arith.constant 0 : i32
    return %arg0, %arg1 : i32, i32
  }
}

module attributes {stable_mosaic.version = 11 : i64} {
  func.func @_linear_kernel(%arg0: i32, %arg1: i32, %arg2: i32, %arg3: memref<16x32xbf16, #tpu.memory_space<vmem>>, %arg4: memref<32x64xbf16, #tpu.memory_space<vmem>>, %arg5: memref<1x64xf32, #tpu.memory_space<vmem>>, %arg6: memref<1x32xf32, #tpu.memory_space<vmem>>, %arg7: memref<1x32xf32, #tpu.memory_space<vmem>>, %arg8: memref<16x64xbf16, #tpu.memory_space<vmem>>, %arg9: memref<16x64xf32, #tpu.memory_space<vmem>>) attributes {dimension_semantics = [#tpu.dimension_semantics<parallel>, #tpu.dimension_semantics<parallel>, #tpu.dimension_semantics<arbitrary>], iteration_bounds = array<i64: 1, 1, 1>, scalar_prefetch = 0 : i64, scratch_operands = 1 : i64, tpu.core_type = #tpu.core_type<tc>, window_params = [{transform_indices = @transform_0, window_bounds = array<i64: 16, 32>}, {transform_indices = @transform_1, window_bounds = array<i64: 32, 64>}, {transform_indices = @transform_2, window_bounds = array<i64: 1, 64>}, {transform_indices = @transform_3, window_bounds = array<i64: 1, 32>}, {transform_indices = @transform_4, window_bounds = array<i64: 1, 32>}, {transform_indices = @transform_5, window_bounds = array<i64: 16, 64>}]} {
    %c0_i32 = arith.constant 0 : i32
    %0 = arith.cmpi eq, %arg2, %c0_i32 : i32
    %1 = arith.extui %0 : i1 to i32
    %c0_i32_0 = arith.constant 0 : i32
    %2 = arith.cmpi ne, %1, %c0_i32_0 : i32
    scf.if %2 {
      %cst_19 = arith.constant 0.000000e+00 : f32
      %36 = vector.broadcast %cst_19 : f32 to vector<16x64xf32>
      %c0_20 = arith.constant 0 : index
      %c0_21 = arith.constant 0 : index
      %37 = vector.load %arg9[%c0_20, %c0_21] : memref<16x64xf32, #tpu.memory_space<vmem>>, vector<16x64xf32>
      tpu.vector_store %arg9[%c0_20, %c0_21], %36 {strides = array<i32>} : memref<16x64xf32, #tpu.memory_space<vmem>>, vector<16x64xf32>,
    } else {
    }
    %c0 = arith.constant 0 : index
    %c0_1 = arith.constant 0 : index
    %3 = vector.load %arg3[%c0, %c0_1] : memref<16x32xbf16, #tpu.memory_space<vmem>>, vector<16x32xbf16>
    %4 = arith.extf %3 : vector<16x32xbf16> to vector<16x32xf32>
    %cst = arith.constant dense<0.000000e+00> : vector<16xf32>
    %5 = vector.multi_reduction <add>, %4, %cst [1] : vector<16x32xf32> to vector<16xf32>
    %6 = vector.shape_cast %5 : vector<16xf32> to vector<16x1xf32>
    %cst_2 = arith.constant 3.200000e+01 : f32
    %7 = vector.broadcast %cst_2 : f32 to vector<16x1xf32>
    %8 = arith.divf %6, %7 : vector<16x1xf32>
    %9 = vector.broadcast %8 : vector<16x1xf32> to vector<16x32xf32>
    %10 = arith.subf %4, %9 : vector<16x32xf32>
    %11 = arith.mulf %10, %10 : vector<16x32xf32>
    %cst_3 = arith.constant dense<0.000000e+00> : vector<16xf32>
    %12 = vector.multi_reduction <add>, %11, %cst_3 [1] : vector<16x32xf32> to vector<16xf32>
    %13 = vector.shape_cast %12 : vector<16xf32> to vector<16x1xf32>
    %cst_4 = arith.constant 3.200000e+01 : f32
    %14 = vector.broadcast %cst_4 : f32 to vector<16x1xf32>
    %15 = arith.divf %13, %14 : vector<16x1xf32>
    %cst_5 = arith.constant 9.99999997E-7 : f32
    %16 = vector.broadcast %cst_5 : f32 to vector<16x1xf32>
    %17 = arith.addf %15, %16 : vector<16x1xf32>
    %18 = math.rsqrt %17 : vector<16x1xf32>
    %19 = vector.broadcast %18 : vector<16x1xf32> to vector<16x32xf32>
    %20 = arith.mulf %10, %19 : vector<16x32xf32>
    %c0_6 = arith.constant 0 : index
    %c0_7 = arith.constant 0 : index
    %21 = vector.load %arg6[%c0_6, %c0_7] : memref<1x32xf32, #tpu.memory_space<vmem>>, vector<1x32xf32>
    %22 = vector.broadcast %21 : vector<1x32xf32> to vector<16x32xf32>
    %23 = arith.mulf %20, %22 : vector<16x32xf32>
    %c0_8 = arith.constant 0 : index
    %c0_9 = arith.constant 0 : index
    %24 = vector.load %arg7[%c0_8, %c0_9] : memref<1x32xf32, #tpu.memory_space<vmem>>, vector<1x32xf32>
    %25 = vector.broadcast %24 : vector<1x32xf32> to vector<16x32xf32>
    %26 = arith.addf %23, %25 : vector<16x32xf32>
    %27 = arith.truncf %26 : vector<16x32xf32> to vector<16x32xbf16>
    %c0_10 = arith.constant 0 : index
    %c0_11 = arith.constant 0 : index
    %28 = vector.load %arg9[%c0_10, %c0_11] : memref<16x64xf32, #tpu.memory_space<vmem>>, vector<16x64xf32>
    %c0_12 = arith.constant 0 : index
    %c0_13 = arith.constant 0 : index
    %29 = vector.load %arg4[%c0_12, %c0_13] : memref<32x64xbf16, #tpu.memory_space<vmem>>, vector<32x64xbf16>
    %cst_14 = arith.constant dense<0.000000e+00> : vector<16x64xf32>
    %30 = tpu.matmul %27, %29, %cst_14 {dimension_numbers = #tpu.dot_dimension_numbers<[1], [0], [0], [1], [0, 0, 1, 1], [], []>} : vector<16x32xbf16>, vector<32x64xbf16>, vector<16x64xf32> -> vector<16x64xf32>
    %31 = arith.addf %28, %30 : vector<16x64xf32>
    %c0_15 = arith.constant 0 : index
    %c0_16 = arith.constant 0 : index
    %32 = vector.load %arg9[%c0_15, %c0_16] : memref<16x64xf32, #tpu.memory_space<vmem>>, vector<16x64xf32>
    tpu.vector_store %arg9[%c0_15, %c0_16], %31 {strides = array<i32>} : memref<16x64xf32, #tpu.memory_space<vmem>>, vector<16x64xf32>,
    %c0_i32_17 = arith.constant 0 : i32
    %33 = arith.cmpi eq, %arg2, %c0_i32_17 : i32
    %34 = arith.extui %33 : i1 to i32
    %c0_i32_18 = arith.constant 0 : i32
    %35 = arith.cmpi ne, %34, %c0_i32_18 : i32
    scf.if %35 {
      %c0_19 = arith.constant 0 : index
      %c0_20 = arith.constant 0 : index
      %36 = vector.load %arg9[%c0_19, %c0_20] : memref<16x64xf32, #tpu.memory_space<vmem>>, vector<16x64xf32>
      %c0_21 = arith.constant 0 : index
      %c0_22 = arith.constant 0 : index
      %37 = vector.load %arg5[%c0_21, %c0_22] : memref<1x64xf32, #tpu.memory_space<vmem>>, vector<1x64xf32>
      %38 = vector.broadcast %37 : vector<1x64xf32> to vector<16x64xf32>
      %39 = arith.addf %36, %38 : vector<16x64xf32>
      %40 = arith.truncf %39 : vector<16x64xf32> to vector<16x64xbf16>
      %c0_23 = arith.constant 0 : index
      %c0_24 = arith.constant 0 : index
      %41 = vector.load %arg8[%c0_23, %c0_24] : memref<16x64xbf16, #tpu.memory_space<vmem>>, vector<16x64xbf16>
      tpu.vector_store %arg8[%c0_23, %c0_24], %40 {strides = array<i32>} : memref<16x64xbf16, #tpu.memory_space<vmem>>, vector<16x64xbf16>,
    } else {
    }
    return
  }
  func.func @transform_0(%arg0: i32, %arg1: i32, %arg2: i32) -> (i32, i32) {
    %c0_i32 = arith.constant 0 : i32
    return %arg0, %arg2 : i32, i32
  }
  func.func @transform_1(%arg0: i32, %arg1: i32, %arg2: i32) -> (i32, i32) {
    %c0_i32 = arith.constant 0 : i32
    return %arg2, %arg1 : i32, i32
  }
  func.func @transform_2(%arg0: i32, %arg1: i32, %arg2: i32) -> (i32, i32) {
    %c0_i32 = arith.constant 0 : i32
    %c0_i32_0 = arith.constant 0 : i32
    return %c0_i32, %arg1 : i32, i32
  }
  func.func @transform_3(%arg0: i32, %arg1: i32, %arg2: i32) -> (i32, i32) {
    %c0_i32 = arith.constant 0 : i32
    %c0_i32_0 = arith.constant 0 : i32
    return %c0_i32, %arg2 : i32, i32
  }
  func.func @transform_4(%arg0: i32, %arg1: i32, %arg2: i32) -> (i32, i32) {
    %c0_i32 = arith.constant 0 : i32
    %c0_i32_0 = arith.constant 0 : i32
    return %c0_i32, %arg2 : i32, i32
  }
  func.func @transform_5(%arg0: i32, %arg1: i32, %arg2: i32) -> (i32, i32) {
    %c0_i32 = arith.constant 0 : i32
    return %arg0, %arg1 : i32, i32
  }
}

module attributes {stable_mosaic.version = 11 : i64} {
  func.func @_flash_kernel(%arg0: i32, %arg1: i32, %arg2: i32, %arg3: memref<1x8x8xbf16, #tpu.memory_space<vmem>>, %arg4: memref<1x8x8xbf16, #tpu.memory_space<vmem>>, %arg5: memref<1x8x8xbf16, #tpu.memory_space<vmem>>, %arg6: memref<1x8x8xbf16, #tpu.memory_space<vmem>>, %arg7: memref<8x1xf32, #tpu.memory_space<vmem>>, %arg8: memref<8x1xf32, #tpu.memory_space<vmem>>, %arg9: memref<8x8xf32, #tpu.memory_space<vmem>>) attributes {dimension_semantics = [#tpu.dimension_semantics<parallel>, #tpu.dimension_semantics<parallel>, #tpu.dimension_semantics<arbitrary>], iteration_bounds = array<i64: 8, 1, 1>, scalar_prefetch = 0 : i64, scratch_operands = 3 : i64, tpu.core_type = #tpu.core_type<tc>, window_params = [{transform_indices = @transform_0, window_bounds = array<i64: 1, 8, 8>}, {transform_indices = @transform_1, window_bounds = array<i64: 1, 8, 8>}, {transform_indices = @transform_2, window_bounds = array<i64: 1, 8, 8>}, {transform_indices = @transform_3, window_bounds = array<i64: 1, 8, 8>}]} {
    %c0_i32 = arith.constant 0 : i32
    %0 = arith.cmpi eq, %arg2, %c0_i32 : i32
    %1 = arith.extui %0 : i1 to i32
    %c0_i32_0 = arith.constant 0 : i32
    %2 = arith.cmpi ne, %1, %c0_i32_0 : i32
    scf.if %2 {
      %cst_27 = arith.constant 0xFF800000 : f32
      %38 = vector.broadcast %cst_27 : f32 to vector<8x1xf32>
      %c0_28 = arith.constant 0 : index
      %c0_29 = arith.constant 0 : index
      %39 = vector.load %arg7[%c0_28, %c0_29] : memref<8x1xf32, #tpu.memory_space<vmem>>, vector<8x1xf32>
      tpu.vector_store %arg7[%c0_28, %c0_29], %38 {strides = array<i32>} : memref<8x1xf32, #tpu.memory_space<vmem>>, vector<8x1xf32>,
      %cst_30 = arith.constant 0.000000e+00 : f32
      %40 = vector.broadcast %cst_30 : f32 to vector<8x1xf32>
      %c0_31 = arith.constant 0 : index
      %c0_32 = arith.constant 0 : index
      %41 = vector.load %arg8[%c0_31, %c0_32] : memref<8x1xf32, #tpu.memory_space<vmem>>, vector<8x1xf32>
      tpu.vector_store %arg8[%c0_31, %c0_32], %40 {strides = array<i32>} : memref<8x1xf32, #tpu.memory_space<vmem>>, vector<8x1xf32>,
      %cst_33 = arith.constant 0.000000e+00 : f32
      %42 = vector.broadcast %cst_33 : f32 to vector<8x8xf32>
      %c0_34 = arith.constant 0 : index
      %c0_35 = arith.constant 0 : index
      %43 = vector.load %arg9[%c0_34, %c0_35] : memref<8x8xf32, #tpu.memory_space<vmem>>, vector<8x8xf32>
      tpu.vector_store %arg9[%c0_34, %c0_35], %42 {strides = array<i32>} : memref<8x8xf32, #tpu.memory_space<vmem>>, vector<8x8xf32>,
    } else {
    }
    %c0 = arith.constant 0 : index
    %c0_1 = arith.constant 0 : index
    %c0_2 = arith.constant 0 : index
    %3 = vector.load %arg3[%c0, %c0_1, %c0_2] : memref<1x8x8xbf16, #tpu.memory_space<vmem>>, vector<1x8x8xbf16>
    %4 = vector.shape_cast %3 : vector<1x8x8xbf16> to vector<8x8xbf16>
    %c0_3 = arith.constant 0 : index
    %c0_4 = arith.constant 0 : index
    %c0_5 = arith.constant 0 : index
    %5 = vector.load %arg4[%c0_3, %c0_4, %c0_5] : memref<1x8x8xbf16, #tpu.memory_space<vmem>>, vector<1x8x8xbf16>
    %6 = vector.shape_cast %5 : vector<1x8x8xbf16> to vector<8x8xbf16>
    %cst = arith.constant dense<0.000000e+00> : vector<8x8xf32>
    %7 = tpu.matmul %4, %6, %cst {dimension_numbers = #tpu.dot_dimension_numbers<[1], [1], [0], [0], [0, 0, 1, 0], [], []>} : vector<8x8xbf16>, vector<8x8xbf16>, vector<8x8xf32> -> vector<8x8xf32>
    %cst_6 = arith.constant 0.353553385 : f32
    %8 = vector.broadcast %cst_6 : f32 to vector<8x8xf32>
    %9 = arith.mulf %7, %8 : vector<8x8xf32>
    %c0_7 = arith.constant 0 : index
    %c0_8 = arith.constant 0 : index
    %10 = vector.load %arg7[%c0_7, %c0_8] : memref<8x1xf32, #tpu.memory_space<vmem>>, vector<8x1xf32>
    %cst_9 = arith.constant dense<0xFF800000> : vector<8xf32>
    %11 = vector.multi_reduction <maximumf>, %9, %cst_9 [1] : vector<8x8xf32> to vector<8xf32>
    %12 = vector.shape_cast %11 : vector<8xf32> to vector<8x1xf32>
    %13 = arith.maximumf %10, %12 : vector<8x1xf32>
    %14 = arith.subf %10, %13 : vector<8x1xf32>
    %15 = math.exp %14 : vector<8x1xf32>
    %16 = vector.broadcast %13 : vector<8x1xf32> to vector<8x8xf32>
    %17 = arith.subf %9, %16 : vector<8x8xf32>
    %18 = math.exp %17 : vector<8x8xf32>
    %c0_10 = arith.constant 0 : index
    %c0_11 = arith.constant 0 : index
    %19 = vector.load %arg8[%c0_10, %c0_11] : memref<8x1xf32, #tpu.memory_space<vmem>>, vector<8x1xf32>
    %20 = arith.mulf %15, %19 : vector<8x1xf32>
    %cst_12 = arith.constant dense<0.000000e+00> : vector<8xf32>
    %21 = vector.multi_reduction <add>, %18, %cst_12 [1] : vector<8x8xf32> to vector<8xf32>
    %22 = vector.shape_cast %21 : vector<8xf32> to vector<8x1xf32>
    %23 = arith.addf %20, %22 : vector<8x1xf32>
    %c0_13 = arith.constant 0 : index
    %c0_14 = arith.constant 0 : index
    %24 = vector.load %arg8[%c0_13, %c0_14] : memref<8x1xf32, #tpu.memory_space<vmem>>, vector<8x1xf32>
    tpu.vector_store %arg8[%c0_13, %c0_14], %23 {strides = array<i32>} : memref<8x1xf32, #tpu.memory_space<vmem>>, vector<8x1xf32>,
    %c0_15 = arith.constant 0 : index
    %c0_16 = arith.constant 0 : index
    %25 = vector.load %arg9[%c0_15, %c0_16] : memref<8x8xf32, #tpu.memory_space<vmem>>, vector<8x8xf32>
    %26 = vector.broadcast %15 : vector<8x1xf32> to vector<8x8xf32>
    %27 = arith.mulf %26, %25 : vector<8x8xf32>
    %28 = arith.truncf %18 : vector<8x8xf32> to vector<8x8xbf16>
    %c0_17 = arith.constant 0 : index
    %c0_18 = arith.constant 0 : index
    %c0_19 = arith.constant 0 : index
    %29 = vector.load %arg5[%c0_17, %c0_18, %c0_19] : memref<1x8x8xbf16, #tpu.memory_space<vmem>>, vector<1x8x8xbf16>
    %30 = vector.shape_cast %29 : vector<1x8x8xbf16> to vector<8x8xbf16>
    %cst_20 = arith.constant dense<0.000000e+00> : vector<8x8xf32>
    %31 = tpu.matmul %28, %30, %cst_20 {dimension_numbers = #tpu.dot_dimension_numbers<[1], [0], [0], [1], [0, 0, 1, 1], [], []>} : vector<8x8xbf16>, vector<8x8xbf16>, vector<8x8xf32> -> vector<8x8xf32>
    %32 = arith.addf %27, %31 : vector<8x8xf32>
    %c0_21 = arith.constant 0 : index
    %c0_22 = arith.constant 0 : index
    %33 = vector.load %arg9[%c0_21, %c0_22] : memref<8x8xf32, #tpu.memory_space<vmem>>, vector<8x8xf32>
    tpu.vector_store %arg9[%c0_21, %c0_22], %32 {strides = array<i32>} : memref<8x8xf32, #tpu.memory_space<vmem>>, vector<8x8xf32>,
    %c0_23 = arith.constant 0 : index
    %c0_24 = arith.constant 0 : index
    %34 = vector.load %arg7[%c0_23, %c0_24] : memref<8x1xf32, #tpu.memory_space<vmem>>, vector<8x1xf32>
    tpu.vector_store %arg7[%c0_23, %c0_24], %13 {strides = array<i32>} : memref<8x1xf32, #tpu.memory_space<vmem>>, vector<8x1xf32>,
    %c0_i32_25 = arith.constant 0 : i32
    %35 = arith.cmpi eq, %arg2, %c0_i32_25 : i32
    %36 = arith.extui %35 : i1 to i32
    %c0_i32_26 = arith.constant 0 : i32
    %37 = arith.cmpi ne, %36, %c0_i32_26 : i32
    scf.if %37 {
      %c0_27 = arith.constant 0 : index
      %c0_28 = arith.constant 0 : index
      %38 = vector.load %arg9[%c0_27, %c0_28] : memref<8x8xf32, #tpu.memory_space<vmem>>, vector<8x8xf32>
      %c0_29 = arith.constant 0 : index
      %c0_30 = arith.constant 0 : index
      %39 = vector.load %arg8[%c0_29, %c0_30] : memref<8x1xf32, #tpu.memory_space<vmem>>, vector<8x1xf32>
      %40 = tpu.reciprocal %39 {approx = true} : vector<8x1xf32> -> vector<8x1xf32>
      %41 = vector.broadcast %40 : vector<8x1xf32> to vector<8x8xf32>
      %42 = arith.mulf %38, %41 : vector<8x8xf32>
      %43 = arith.truncf %42 : vector<8x8xf32> to vector<8x8xbf16>
      %c0_31 = arith.constant 0 : index
      %c0_32 = arith.constant 0 : index
      %c0_33 = arith.constant 0 : index
      %44 = vector.load %arg6[%c0_31, %c0_32, %c0_33] : memref<1x8x8xbf16, #tpu.memory_space<vmem>>, vector<1x8x8xbf16>
      %45 = vector.shape_cast %44 : vector<1x8x8xbf16> to vector<8x8xbf16>
      %46 = vector.shape_cast %43 : vector<8x8xbf16> to vector<1x8x8xbf16>
      tpu.vector_store %arg6[%c0_31, %c0_32, %c0_33], %46 {strides = array<i32>} : memref<1x8x8xbf16, #tpu.memory_space<vmem>>, vector<1x8x8xbf16>,
    } else {
    }
    return
  }
  func.func @transform_0(%arg0: i32, %arg1: i32, %arg2: i32) -> (i32, i32, i32) {
    %c0_i32 = arith.constant 0 : i32
    %c0_i32_0 = arith.constant 0 : i32
    return %arg0, %arg1, %c0_i32 : i32, i32, i32
  }
  func.func @transform_1(%arg0: i32, %arg1: i32, %arg2: i32) -> (i32, i32, i32) {
    %c0_i32 = arith.constant 0 : i32
    %c0_i32_0 = arith.constant 0 : i32
    return %arg0, %arg2, %c0_i32 : i32, i32, i32
  }
  func.func @transform_2(%arg0: i32, %arg1: i32, %arg2: i32) -> (i32, i32, i32) {
    %c0_i32 = arith.constant 0 : i32
    %c0_i32_0 = arith.constant 0 : i32
    return %arg0, %arg2, %c0_i32 : i32, i32, i32
  }
  func.func @transform_3(%arg0: i32, %arg1: i32, %arg2: i32) -> (i32, i32, i32) {
    %c0_i32 = arith.constant 0 : i32
    %c0_i32_0 = arith.constant 0 : i32
    return %arg0, %arg1, %c0_i32 : i32, i32, i32
  }
}

module attributes {stable_mosaic.version = 11 : i64} {
  func.func @_linear_kernel(%arg0: i32, %arg1: i32, %arg2: i32, %arg3: memref<16x32xbf16, #tpu.memory_space<vmem>>, %arg4: memref<32x32xbf16, #tpu.memory_space<vmem>>, %arg5: memref<1x32xf32, #tpu.memory_space<vmem>>, %arg6: memref<16x32xf32, #tpu.memory_space<vmem>>, %arg7: memref<16x32xbf16, #tpu.memory_space<vmem>>, %arg8: memref<16x32xf32, #tpu.memory_space<vmem>>) attributes {dimension_semantics = [#tpu.dimension_semantics<parallel>, #tpu.dimension_semantics<parallel>, #tpu.dimension_semantics<arbitrary>], iteration_bounds = array<i64: 1, 1, 1>, scalar_prefetch = 0 : i64, scratch_operands = 1 : i64, tpu.core_type = #tpu.core_type<tc>, window_params = [{transform_indices = @transform_0, window_bounds = array<i64: 16, 32>}, {transform_indices = @transform_1, window_bounds = array<i64: 32, 32>}, {transform_indices = @transform_2, window_bounds = array<i64: 1, 32>}, {transform_indices = @transform_3, window_bounds = array<i64: 16, 32>}, {transform_indices = @transform_4, window_bounds = array<i64: 16, 32>}]} {
    %c0_i32 = arith.constant 0 : i32
    %0 = arith.cmpi eq, %arg2, %c0_i32 : i32
    %1 = arith.extui %0 : i1 to i32
    %c0_i32_0 = arith.constant 0 : i32
    %2 = arith.cmpi ne, %1, %c0_i32_0 : i32
    scf.if %2 {
      %cst_10 = arith.constant 0.000000e+00 : f32
      %12 = vector.broadcast %cst_10 : f32 to vector<16x32xf32>
      %c0_11 = arith.constant 0 : index
      %c0_12 = arith.constant 0 : index
      %13 = vector.load %arg8[%c0_11, %c0_12] : memref<16x32xf32, #tpu.memory_space<vmem>>, vector<16x32xf32>
      tpu.vector_store %arg8[%c0_11, %c0_12], %12 {strides = array<i32>} : memref<16x32xf32, #tpu.memory_space<vmem>>, vector<16x32xf32>,
    } else {
    }
    %c0 = arith.constant 0 : index
    %c0_1 = arith.constant 0 : index
    %3 = vector.load %arg3[%c0, %c0_1] : memref<16x32xbf16, #tpu.memory_space<vmem>>, vector<16x32xbf16>
    %c0_2 = arith.constant 0 : index
    %c0_3 = arith.constant 0 : index
    %4 = vector.load %arg8[%c0_2, %c0_3] : memref<16x32xf32, #tpu.memory_space<vmem>>, vector<16x32xf32>
    %c0_4 = arith.constant 0 : index
    %c0_5 = arith.constant 0 : index
    %5 = vector.load %arg4[%c0_4, %c0_5] : memref<32x32xbf16, #tpu.memory_space<vmem>>, vector<32x32xbf16>
    %cst = arith.constant dense<0.000000e+00> : vector<16x32xf32>
    %6 = tpu.matmul %3, %5, %cst {dimension_numbers = #tpu.dot_dimension_numbers<[1], [0], [0], [1], [0, 0, 1, 1], [], []>} : vector<16x32xbf16>, vector<32x32xbf16>, vector<16x32xf32> -> vector<16x32xf32>
    %7 = arith.addf %4, %6 : vector<16x32xf32>
    %c0_6 = arith.constant 0 : index
    %c0_7 = arith.constant 0 : index
    %8 = vector.load %arg8[%c0_6, %c0_7] : memref<16x32xf32, #tpu.memory_space<vmem>>, vector<16x32xf32>
    tpu.vector_store %arg8[%c0_6, %c0_7], %7 {strides = array<i32>} : memref<16x32xf32, #tpu.memory_space<vmem>>, vector<16x32xf32>,
    %c0_i32_8 = arith.constant 0 : i32
    %9 = arith.cmpi eq, %arg2, %c0_i32_8 : i32
    %10 = arith.extui %9 : i1 to i32
    %c0_i32_9 = arith.constant 0 : i32
    %11 = arith.cmpi ne, %10, %c0_i32_9 : i32
    scf.if %11 {
      %c0_10 = arith.constant 0 : index
      %c0_11 = arith.constant 0 : index
      %12 = vector.load %arg8[%c0_10, %c0_11] : memref<16x32xf32, #tpu.memory_space<vmem>>, vector<16x32xf32>
      %c0_12 = arith.constant 0 : index
      %c0_13 = arith.constant 0 : index
      %13 = vector.load %arg5[%c0_12, %c0_13] : memref<1x32xf32, #tpu.memory_space<vmem>>, vector<1x32xf32>
      %14 = vector.broadcast %13 : vector<1x32xf32> to vector<16x32xf32>
      %15 = arith.addf %12, %14 : vector<16x32xf32>
      %c0_14 = arith.constant 0 : index
      %c0_15 = arith.constant 0 : index
      %16 = vector.load %arg6[%c0_14, %c0_15] : memref<16x32xf32, #tpu.memory_space<vmem>>, vector<16x32xf32>
      %17 = arith.addf %15, %16 : vector<16x32xf32>
      %18 = arith.truncf %17 : vector<16x32xf32> to vector<16x32xbf16>
      %c0_16 = arith.constant 0 : index
      %c0_17 = arith.constant 0 : index
      %19 = vector.load %arg7[%c0_16, %c0_17] : memref<16x32xbf16, #tpu.memory_space<vmem>>, vector<16x32xbf16>
      tpu.vector_store %arg7[%c0_16, %c0_17], %18 {strides = array<i32>} : memref<16x32xbf16, #tpu.memory_space<vmem>>, vector<16x32xbf16>,
    } else {
    }
    return
  }
  func.func @transform_0(%arg0: i32, %arg1: i32, %arg2: i32) -> (i32, i32) {
    %c0_i32 = arith.constant 0 : i32
    return %arg0, %arg2 : i32, i32
  }
  func.func @transform_1(%arg0: i32, %arg1: i32, %arg2: i32) -> (i32, i32) {
    %c0_i32 = arith.constant 0 : i32
    return %arg2, %arg1 : i32, i32
  }
  func.func @transform_2(%arg0: i32, %arg1: i32, %arg2: i32) -> (i32, i32) {
    %c0_i32 = arith.constant 0 : i32
    %c0_i32_0 = arith.constant 0 : i32
    return %c0_i32, %arg1 : i32, i32
  }
  func.func @transform_3(%arg0: i32, %arg1: i32, %arg2: i32) -> (i32, i32) {
    %c0_i32 = arith.constant 0 : i32
    return %arg0, %arg1 : i32, i32
  }
  func.func @transform_4(%arg0: i32, %arg1: i32, %arg2: i32) -> (i32, i32) {
    %c0_i32 = arith.constant 0 : i32
    return %arg0, %arg1 : i32, i32
  }
}

module attributes {stable_mosaic.version = 11 : i64} {
  func.func @_linear_kernel(%arg0: i32, %arg1: i32, %arg2: i32, %arg3: memref<16x32xbf16, #tpu.memory_space<vmem>>, %arg4: memref<32x96xbf16, #tpu.memory_space<vmem>>, %arg5: memref<1x96xf32, #tpu.memory_space<vmem>>, %arg6: memref<16x96xbf16, #tpu.memory_space<vmem>>, %arg7: memref<16x96xf32, #tpu.memory_space<vmem>>) attributes {dimension_semantics = [#tpu.dimension_semantics<parallel>, #tpu.dimension_semantics<parallel>, #tpu.dimension_semantics<arbitrary>], iteration_bounds = array<i64: 1, 1, 1>, scalar_prefetch = 0 : i64, scratch_operands = 1 : i64, tpu.core_type = #tpu.core_type<tc>, window_params = [{transform_indices = @transform_0, window_bounds = array<i64: 16, 32>}, {transform_indices = @transform_1, window_bounds = array<i64: 32, 96>}, {transform_indices = @transform_2, window_bounds = array<i64: 1, 96>}, {transform_indices = @transform_3, window_bounds = array<i64: 16, 96>}]} {
    %c0_i32 = arith.constant 0 : i32
    %0 = arith.cmpi eq, %arg2, %c0_i32 : i32
    %1 = arith.extui %0 : i1 to i32
    %c0_i32_0 = arith.constant 0 : i32
    %2 = arith.cmpi ne, %1, %c0_i32_0 : i32
    scf.if %2 {
      %cst_10 = arith.constant 0.000000e+00 : f32
      %12 = vector.broadcast %cst_10 : f32 to vector<16x96xf32>
      %c0_11 = arith.constant 0 : index
      %c0_12 = arith.constant 0 : index
      %13 = vector.load %arg7[%c0_11, %c0_12] : memref<16x96xf32, #tpu.memory_space<vmem>>, vector<16x96xf32>
      tpu.vector_store %arg7[%c0_11, %c0_12], %12 {strides = array<i32>} : memref<16x96xf32, #tpu.memory_space<vmem>>, vector<16x96xf32>,
    } else {
    }
    %c0 = arith.constant 0 : index
    %c0_1 = arith.constant 0 : index
    %3 = vector.load %arg3[%c0, %c0_1] : memref<16x32xbf16, #tpu.memory_space<vmem>>, vector<16x32xbf16>
    %c0_2 = arith.constant 0 : index
    %c0_3 = arith.constant 0 : index
    %4 = vector.load %arg7[%c0_2, %c0_3] : memref<16x96xf32, #tpu.memory_space<vmem>>, vector<16x96xf32>
    %c0_4 = arith.constant 0 : index
    %c0_5 = arith.constant 0 : index
    %5 = vector.load %arg4[%c0_4, %c0_5] : memref<32x96xbf16, #tpu.memory_space<vmem>>, vector<32x96xbf16>
    %cst = arith.constant dense<0.000000e+00> : vector<16x96xf32>
    %6 = tpu.matmul %3, %5, %cst {dimension_numbers = #tpu.dot_dimension_numbers<[1], [0], [0], [1], [0, 0, 1, 1], [], []>} : vector<16x32xbf16>, vector<32x96xbf16>, vector<16x96xf32> -> vector<16x96xf32>
    %7 = arith.addf %4, %6 : vector<16x96xf32>
    %c0_6 = arith.constant 0 : index
    %c0_7 = arith.constant 0 : index
    %8 = vector.load %arg7[%c0_6, %c0_7] : memref<16x96xf32, #tpu.memory_space<vmem>>, vector<16x96xf32>
    tpu.vector_store %arg7[%c0_6, %c0_7], %7 {strides = array<i32>} : memref<16x96xf32, #tpu.memory_space<vmem>>, vector<16x96xf32>,
    %c0_i32_8 = arith.constant 0 : i32
    %9 = arith.cmpi eq, %arg2, %c0_i32_8 : i32
    %10 = arith.extui %9 : i1 to i32
    %c0_i32_9 = arith.constant 0 : i32
    %11 = arith.cmpi ne, %10, %c0_i32_9 : i32
    scf.if %11 {
      %c0_10 = arith.constant 0 : index
      %c0_11 = arith.constant 0 : index
      %12 = vector.load %arg7[%c0_10, %c0_11] : memref<16x96xf32, #tpu.memory_space<vmem>>, vector<16x96xf32>
      %c0_12 = arith.constant 0 : index
      %c0_13 = arith.constant 0 : index
      %13 = vector.load %arg5[%c0_12, %c0_13] : memref<1x96xf32, #tpu.memory_space<vmem>>, vector<1x96xf32>
      %14 = vector.broadcast %13 : vector<1x96xf32> to vector<16x96xf32>
      %15 = arith.addf %12, %14 : vector<16x96xf32>
      %16 = arith.truncf %15 : vector<16x96xf32> to vector<16x96xbf16>
      %c0_14 = arith.constant 0 : index
      %c0_15 = arith.constant 0 : index
      %17 = vector.load %arg6[%c0_14, %c0_15] : memref<16x96xbf16, #tpu.memory_space<vmem>>, vector<16x96xbf16>
      tpu.vector_store %arg6[%c0_14, %c0_15], %16 {strides = array<i32>} : memref<16x96xbf16, #tpu.memory_space<vmem>>, vector<16x96xbf16>,
    } else {
    }
    return
  }
  func.func @transform_0(%arg0: i32, %arg1: i32, %arg2: i32) -> (i32, i32) {
    %c0_i32 = arith.constant 0 : i32
    return %arg0, %arg2 : i32, i32
  }
  func.func @transform_1(%arg0: i32, %arg1: i32, %arg2: i32) -> (i32, i32) {
    %c0_i32 = arith.constant 0 : i32
    return %arg2, %arg1 : i32, i32
  }
  func.func @transform_2(%arg0: i32, %arg1: i32, %arg2: i32) -> (i32, i32) {
    %c0_i32 = arith.constant 0 : i32
    %c0_i32_0 = arith.constant 0 : i32
    return %c0_i32, %arg1 : i32, i32
  }
  func.func @transform_3(%arg0: i32, %arg1: i32, %arg2: i32) -> (i32, i32) {
    %c0_i32 = arith.constant 0 : i32
    return %arg0, %arg1 : i32, i32
  }
}

module attributes {stable_mosaic.version = 11 : i64} {
  func.func @_flash_kernel(%arg0: i32, %arg1: i32, %arg2: i32, %arg3: memref<1x8x8xbf16, #tpu.memory_space<vmem>>, %arg4: memref<1x8x8xbf16, #tpu.memory_space<vmem>>, %arg5: memref<1x8x8xbf16, #tpu.memory_space<vmem>>, %arg6: memref<1x8x8xbf16, #tpu.memory_space<vmem>>, %arg7: memref<8x1xf32, #tpu.memory_space<vmem>>, %arg8: memref<8x1xf32, #tpu.memory_space<vmem>>, %arg9: memref<8x8xf32, #tpu.memory_space<vmem>>) attributes {dimension_semantics = [#tpu.dimension_semantics<parallel>, #tpu.dimension_semantics<parallel>, #tpu.dimension_semantics<arbitrary>], iteration_bounds = array<i64: 8, 1, 1>, scalar_prefetch = 0 : i64, scratch_operands = 3 : i64, tpu.core_type = #tpu.core_type<tc>, window_params = [{transform_indices = @transform_0, window_bounds = array<i64: 1, 8, 8>}, {transform_indices = @transform_1, window_bounds = array<i64: 1, 8, 8>}, {transform_indices = @transform_2, window_bounds = array<i64: 1, 8, 8>}, {transform_indices = @transform_3, window_bounds = array<i64: 1, 8, 8>}]} {
    %c0_i32 = arith.constant 0 : i32
    %0 = arith.cmpi eq, %arg2, %c0_i32 : i32
    %1 = arith.extui %0 : i1 to i32
    %c0_i32_0 = arith.constant 0 : i32
    %2 = arith.cmpi ne, %1, %c0_i32_0 : i32
    scf.if %2 {
      %cst = arith.constant 0xFF800000 : f32
      %12 = vector.broadcast %cst : f32 to vector<8x1xf32>
      %c0 = arith.constant 0 : index
      %c0_5 = arith.constant 0 : index
      %13 = vector.load %arg7[%c0, %c0_5] : memref<8x1xf32, #tpu.memory_space<vmem>>, vector<8x1xf32>
      tpu.vector_store %arg7[%c0, %c0_5], %12 {strides = array<i32>} : memref<8x1xf32, #tpu.memory_space<vmem>>, vector<8x1xf32>,
      %cst_6 = arith.constant 0.000000e+00 : f32
      %14 = vector.broadcast %cst_6 : f32 to vector<8x1xf32>
      %c0_7 = arith.constant 0 : index
      %c0_8 = arith.constant 0 : index
      %15 = vector.load %arg8[%c0_7, %c0_8] : memref<8x1xf32, #tpu.memory_space<vmem>>, vector<8x1xf32>
      tpu.vector_store %arg8[%c0_7, %c0_8], %14 {strides = array<i32>} : memref<8x1xf32, #tpu.memory_space<vmem>>, vector<8x1xf32>,
      %cst_9 = arith.constant 0.000000e+00 : f32
      %16 = vector.broadcast %cst_9 : f32 to vector<8x8xf32>
      %c0_10 = arith.constant 0 : index
      %c0_11 = arith.constant 0 : index
      %17 = vector.load %arg9[%c0_10, %c0_11] : memref<8x8xf32, #tpu.memory_space<vmem>>, vector<8x8xf32>
      tpu.vector_store %arg9[%c0_10, %c0_11], %16 {strides = array<i32>} : memref<8x8xf32, #tpu.memory_space<vmem>>, vector<8x8xf32>,
    } else {
    }
    %c8_i32 = arith.constant 8 : i32
    %3 = arith.muli %arg2, %c8_i32 : i32
    %c8_i32_1 = arith.constant 8 : i32
    %4 = arith.muli %arg1, %c8_i32_1 : i32
    %c7_i32 = arith.constant 7 : i32
    %5 = arith.addi %4, %c7_i32 : i32
    %6 = arith.cmpi sle, %3, %5 : i32
    %7 = arith.extui %6 : i1 to i32
    %c0_i32_2 = arith.constant 0 : i32
    %8 = arith.cmpi ne, %7, %c0_i32_2 : i32
    scf.if %8 {
      %c0 = arith.constant 0 : index
      %c0_5 = arith.constant 0 : index
      %c0_6 = arith.constant 0 : index
      %12 = vector.load %arg3[%c0, %c0_5, %c0_6] : memref<1x8x8xbf16, #tpu.memory_space<vmem>>, vector<1x8x8xbf16>
      %13 = vector.shape_cast %12 : vector<1x8x8xbf16> to vector<8x8xbf16>
      %c0_7 = arith.constant 0 : index
      %c0_8 = arith.constant 0 : index
      %c0_9 = arith.constant 0 : index
      %14 = vector.load %arg4[%c0_7, %c0_8, %c0_9] : memref<1x8x8xbf16, #tpu.memory_space<vmem>>, vector<1x8x8xbf16>
      %15 = vector.shape_cast %14 : vector<1x8x8xbf16> to vector<8x8xbf16>
      %cst = arith.constant dense<0.000000e+00> : vector<8x8xf32>
      %16 = tpu.matmul %13, %15, %cst {dimension_numbers = #tpu.dot_dimension_numbers<[1], [1], [0], [0], [0, 0, 1, 0], [], []>} : vector<8x8xbf16>, vector<8x8xbf16>, vector<8x8xf32> -> vector<8x8xf32>
      %cst_10 = arith.constant 0.353553385 : f32
      %17 = vector.broadcast %cst_10 : f32 to vector<8x8xf32>
      %18 = arith.mulf %16, %17 : vector<8x8xf32>
      %c8_i32_11 = arith.constant 8 : i32
      %19 = arith.muli %arg1, %c8_i32_11 : i32
      %20 = tpu.iota {dimensions = array<i32: 0>} : vector<8x8xi32>
      %21 = vector.broadcast %19 : i32 to vector<8x8xi32>
      %22 = arith.addi %21, %20 : vector<8x8xi32>
      %c8_i32_12 = arith.constant 8 : i32
      %23 = arith.muli %arg2, %c8_i32_12 : i32
      %24 = tpu.iota {dimensions = array<i32: 1>} : vector<8x8xi32>
      %25 = vector.broadcast %23 : i32 to vector<8x8xi32>
      %26 = arith.addi %25, %24 : vector<8x8xi32>
      %27 = arith.cmpi sgt, %26, %22 : vector<8x8xi32>
      %cst_13 = arith.constant -1.000000e+30 : f32
      %28 = vector.broadcast %cst_13 : f32 to vector<8x8xf32>
      %29 = arith.select %27, %28, %18 : vector<8x8xi1>, vector<8x8xf32>
      %c0_14 = arith.constant 0 : index
      %c0_15 = arith.constant 0 : index
      %30 = vector.load %arg7[%c0_14, %c0_15] : memref<8x1xf32, #tpu.memory_space<vmem>>, vector<8x1xf32>
      %cst_16 = arith.constant dense<0xFF800000> : vector<8xf32>
      %31 = vector.multi_reduction <maximumf>, %29, %cst_16 [1] : vector<8x8xf32> to vector<8xf32>
      %32 = vector.shape_cast %31 : vector<8xf32> to vector<8x1xf32>
      %33 = arith.maximumf %30, %32 : vector<8x1xf32>
      %34 = arith.subf %30, %33 : vector<8x1xf32>
      %35 = math.exp %34 : vector<8x1xf32>
      %36 = vector.broadcast %33 : vector<8x1xf32> to vector<8x8xf32>
      %37 = arith.subf %29, %36 : vector<8x8xf32>
      %38 = math.exp %37 : vector<8x8xf32>
      %c0_17 = arith.constant 0 : index
      %c0_18 = arith.constant 0 : index
      %39 = vector.load %arg8[%c0_17, %c0_18] : memref<8x1xf32, #tpu.memory_space<vmem>>, vector<8x1xf32>
      %40 = arith.mulf %35, %39 : vector<8x1xf32>
      %cst_19 = arith.constant dense<0.000000e+00> : vector<8xf32>
      %41 = vector.multi_reduction <add>, %38, %cst_19 [1] : vector<8x8xf32> to vector<8xf32>
      %42 = vector.shape_cast %41 : vector<8xf32> to vector<8x1xf32>
      %43 = arith.addf %40, %42 : vector<8x1xf32>
      %c0_20 = arith.constant 0 : index
      %c0_21 = arith.constant 0 : index
      %44 = vector.load %arg8[%c0_20, %c0_21] : memref<8x1xf32, #tpu.memory_space<vmem>>, vector<8x1xf32>
      tpu.vector_store %arg8[%c0_20, %c0_21], %43 {strides = array<i32>} : memref<8x1xf32, #tpu.memory_space<vmem>>, vector<8x1xf32>,
      %c0_22 = arith.constant 0 : index
      %c0_23 = arith.constant 0 : index
      %45 = vector.load %arg9[%c0_22, %c0_23] : memref<8x8xf32, #tpu.memory_space<vmem>>, vector<8x8xf32>
      %46 = vector.broadcast %35 : vector<8x1xf32> to vector<8x8xf32>
      %47 = arith.mulf %46, %45 : vector<8x8xf32>
      %48 = arith.truncf %38 : vector<8x8xf32> to vector<8x8xbf16>
      %c0_24 = arith.constant 0 : index
      %c0_25 = arith.constant 0 : index
      %c0_26 = arith.constant 0 : index
      %49 = vector.load %arg5[%c0_24, %c0_25, %c0_26] : memref<1x8x8xbf16, #tpu.memory_space<vmem>>, vector<1x8x8xbf16>
      %50 = vector.shape_cast %49 : vector<1x8x8xbf16> to vector<8x8xbf16>
      %cst_27 = arith.constant dense<0.000000e+00> : vector<8x8xf32>
      %51 = tpu.matmul %48, %50, %cst_27 {dimension_numbers = #tpu.dot_dimension_numbers<[1], [0], [0], [1], [0, 0, 1, 1], [], []>} : vector<8x8xbf16>, vector<8x8xbf16>, vector<8x8xf32> -> vector<8x8xf32>
      %52 = arith.addf %47, %51 : vector<8x8xf32>
      %c0_28 = arith.constant 0 : index
      %c0_29 = arith.constant 0 : index
      %53 = vector.load %arg9[%c0_28, %c0_29] : memref<8x8xf32, #tpu.memory_space<vmem>>, vector<8x8xf32>
      tpu.vector_store %arg9[%c0_28, %c0_29], %52 {strides = array<i32>} : memref<8x8xf32, #tpu.memory_space<vmem>>, vector<8x8xf32>,
      %c0_30 = arith.constant 0 : index
      %c0_31 = arith.constant 0 : index
      %54 = vector.load %arg7[%c0_30, %c0_31] : memref<8x1xf32, #tpu.memory_space<vmem>>, vector<8x1xf32>
      tpu.vector_store %arg7[%c0_30, %c0_31], %33 {strides = array<i32>} : memref<8x1xf32, #tpu.memory_space<vmem>>, vector<8x1xf32>,
    } else {
    }
    %c0_i32_3 = arith.constant 0 : i32
    %9 = arith.cmpi eq, %arg2, %c0_i32_3 : i32
    %10 = arith.extui %9 : i1 to i32
    %c0_i32_4 = arith.constant 0 : i32
    %11 = arith.cmpi ne, %10, %c0_i32_4 : i32
    scf.if %11 {
      %c0 = arith.constant 0 : index
      %c0_5 = arith.constant 0 : index
      %12 = vector.load %arg9[%c0, %c0_5] : memref<8x8xf32, #tpu.memory_space<vmem>>, vector<8x8xf32>
      %c0_6 = arith.constant 0 : index
      %c0_7 = arith.constant 0 : index
      %13 = vector.load %arg8[%c0_6, %c0_7] : memref<8x1xf32, #tpu.memory_space<vmem>>, vector<8x1xf32>
      %14 = tpu.reciprocal %13 {approx = true} : vector<8x1xf32> -> vector<8x1xf32>
      %15 = vector.broadcast %14 : vector<8x1xf32> to vector<8x8xf32>
      %16 = arith.mulf %12, %15 : vector<8x8xf32>
      %17 = arith.truncf %16 : vector<8x8xf32> to vector<8x8xbf16>
      %c0_8 = arith.constant 0 : index
      %c0_9 = arith.constant 0 : index
      %c0_10 = arith.constant 0 : index
      %18 = vector.load %arg6[%c0_8, %c0_9, %c0_10] : memref<1x8x8xbf16, #tpu.memory_space<vmem>>, vector<1x8x8xbf16>
      %19 = vector.shape_cast %18 : vector<1x8x8xbf16> to vector<8x8xbf16>
      %20 = vector.shape_cast %17 : vector<8x8xbf16> to vector<1x8x8xbf16>
      tpu.vector_store %arg6[%c0_8, %c0_9, %c0_10], %20 {strides = array<i32>} : memref<1x8x8xbf16, #tpu.memory_space<vmem>>, vector<1x8x8xbf16>,
    } else {
    }
    return
  }
  func.func @transform_0(%arg0: i32, %arg1: i32, %arg2: i32) -> (i32, i32, i32) {
    %c0_i32 = arith.constant 0 : i32
    %c0_i32_0 = arith.constant 0 : i32
    return %arg0, %arg1, %c0_i32 : i32, i32, i32
  }
  func.func @transform_1(%arg0: i32, %arg1: i32, %arg2: i32) -> (i32, i32, i32) {
    %c0_i32 = arith.constant 0 : i32
    %c0_i32_0 = arith.constant 0 : i32
    return %arg0, %arg2, %c0_i32 : i32, i32, i32
  }
  func.func @transform_2(%arg0: i32, %arg1: i32, %arg2: i32) -> (i32, i32, i32) {
    %c0_i32 = arith.constant 0 : i32
    %c0_i32_0 = arith.constant 0 : i32
    return %arg0, %arg2, %c0_i32 : i32, i32, i32
  }
  func.func @transform_3(%arg0: i32, %arg1: i32, %arg2: i32) -> (i32, i32, i32) {
    %c0_i32 = arith.constant 0 : i32
    %c0_i32_0 = arith.constant 0 : i32
    return %arg0, %arg1, %c0_i32 : i32, i32, i32
  }
}

module attributes {stable_mosaic.version = 11 : i64} {
  func.func @_linear_kernel(%arg0: i32, %arg1: i32, %arg2: i32, %arg3: memref<16x32xbf16, #tpu.memory_space<vmem>>, %arg4: memref<32x32xbf16, #tpu.memory_space<vmem>>, %arg5: memref<1x32xf32, #tpu.memory_space<vmem>>, %arg6: memref<16x32xbf16, #tpu.memory_space<vmem>>, %arg7: memref<1x32xf32, #tpu.memory_space<vmem>>, %arg8: memref<1x32xf32, #tpu.memory_space<vmem>>, %arg9: memref<16x32xbf16, #tpu.memory_space<vmem>>, %arg10: memref<16x32xf32, #tpu.memory_space<vmem>>) attributes {dimension_semantics = [#tpu.dimension_semantics<parallel>, #tpu.dimension_semantics<parallel>, #tpu.dimension_semantics<arbitrary>], iteration_bounds = array<i64: 1, 1, 1>, scalar_prefetch = 0 : i64, scratch_operands = 1 : i64, tpu.core_type = #tpu.core_type<tc>, window_params = [{transform_indices = @transform_0, window_bounds = array<i64: 16, 32>}, {transform_indices = @transform_1, window_bounds = array<i64: 32, 32>}, {transform_indices = @transform_2, window_bounds = array<i64: 1, 32>}, {transform_indices = @transform_3, window_bounds = array<i64: 16, 32>}, {transform_indices = @transform_4, window_bounds = array<i64: 1, 32>}, {transform_indices = @transform_5, window_bounds = array<i64: 1, 32>}, {transform_indices = @transform_6, window_bounds = array<i64: 16, 32>}]} {
    %c0_i32 = arith.constant 0 : i32
    %0 = arith.cmpi eq, %arg2, %c0_i32 : i32
    %1 = arith.extui %0 : i1 to i32
    %c0_i32_0 = arith.constant 0 : i32
    %2 = arith.cmpi ne, %1, %c0_i32_0 : i32
    scf.if %2 {
      %cst_10 = arith.constant 0.000000e+00 : f32
      %12 = vector.broadcast %cst_10 : f32 to vector<16x32xf32>
      %c0_11 = arith.constant 0 : index
      %c0_12 = arith.constant 0 : index
      %13 = vector.load %arg10[%c0_11, %c0_12] : memref<16x32xf32, #tpu.memory_space<vmem>>, vector<16x32xf32>
      tpu.vector_store %arg10[%c0_11, %c0_12], %12 {strides = array<i32>} : memref<16x32xf32, #tpu.memory_space<vmem>>, vector<16x32xf32>,
    } else {
    }
    %c0 = arith.constant 0 : index
    %c0_1 = arith.constant 0 : index
    %3 = vector.load %arg3[%c0, %c0_1] : memref<16x32xbf16, #tpu.memory_space<vmem>>, vector<16x32xbf16>
    %c0_2 = arith.constant 0 : index
    %c0_3 = arith.constant 0 : index
    %4 = vector.load %arg10[%c0_2, %c0_3] : memref<16x32xf32, #tpu.memory_space<vmem>>, vector<16x32xf32>
    %c0_4 = arith.constant 0 : index
    %c0_5 = arith.constant 0 : index
    %5 = vector.load %arg4[%c0_4, %c0_5] : memref<32x32xbf16, #tpu.memory_space<vmem>>, vector<32x32xbf16>
    %cst = arith.constant dense<0.000000e+00> : vector<16x32xf32>
    %6 = tpu.matmul %3, %5, %cst {dimension_numbers = #tpu.dot_dimension_numbers<[1], [0], [0], [1], [0, 0, 1, 1], [], []>} : vector<16x32xbf16>, vector<32x32xbf16>, vector<16x32xf32> -> vector<16x32xf32>
    %7 = arith.addf %4, %6 : vector<16x32xf32>
    %c0_6 = arith.constant 0 : index
    %c0_7 = arith.constant 0 : index
    %8 = vector.load %arg10[%c0_6, %c0_7] : memref<16x32xf32, #tpu.memory_space<vmem>>, vector<16x32xf32>
    tpu.vector_store %arg10[%c0_6, %c0_7], %7 {strides = array<i32>} : memref<16x32xf32, #tpu.memory_space<vmem>>, vector<16x32xf32>,
    %c0_i32_8 = arith.constant 0 : i32
    %9 = arith.cmpi eq, %arg2, %c0_i32_8 : i32
    %10 = arith.extui %9 : i1 to i32
    %c0_i32_9 = arith.constant 0 : i32
    %11 = arith.cmpi ne, %10, %c0_i32_9 : i32
    scf.if %11 {
      %c0_10 = arith.constant 0 : index
      %c0_11 = arith.constant 0 : index
      %12 = vector.load %arg10[%c0_10, %c0_11] : memref<16x32xf32, #tpu.memory_space<vmem>>, vector<16x32xf32>
      %c0_12 = arith.constant 0 : index
      %c0_13 = arith.constant 0 : index
      %13 = vector.load %arg5[%c0_12, %c0_13] : memref<1x32xf32, #tpu.memory_space<vmem>>, vector<1x32xf32>
      %14 = vector.broadcast %13 : vector<1x32xf32> to vector<16x32xf32>
      %15 = arith.addf %12, %14 : vector<16x32xf32>
      %c0_14 = arith.constant 0 : index
      %c0_15 = arith.constant 0 : index
      %16 = vector.load %arg6[%c0_14, %c0_15] : memref<16x32xbf16, #tpu.memory_space<vmem>>, vector<16x32xbf16>
      %17 = arith.extf %16 : vector<16x32xbf16> to vector<16x32xf32>
      %18 = arith.addf %15, %17 : vector<16x32xf32>
      %cst_16 = arith.constant dense<0.000000e+00> : vector<16xf32>
      %19 = vector.multi_reduction <add>, %18, %cst_16 [1] : vector<16x32xf32> to vector<16xf32>
      %20 = vector.shape_cast %19 : vector<16xf32> to vector<16x1xf32>
      %cst_17 = arith.constant 3.200000e+01 : f32
      %21 = vector.broadcast %cst_17 : f32 to vector<16x1xf32>
      %22 = arith.divf %20, %21 : vector<16x1xf32>
      %23 = vector.broadcast %22 : vector<16x1xf32> to vector<16x32xf32>
      %24 = arith.subf %18, %23 : vector<16x32xf32>
      %25 = arith.mulf %24, %24 : vector<16x32xf32>
      %cst_18 = arith.constant dense<0.000000e+00> : vector<16xf32>
      %26 = vector.multi_reduction <add>, %25, %cst_18 [1] : vector<16x32xf32> to vector<16xf32>
      %27 = vector.shape_cast %26 : vector<16xf32> to vector<16x1xf32>
      %cst_19 = arith.constant 3.200000e+01 : f32
      %28 = vector.broadcast %cst_19 : f32 to vector<16x1xf32>
      %29 = arith.divf %27, %28 : vector<16x1xf32>
      %cst_20 = arith.constant 9.99999974E-6 : f32
      %30 = vector.broadcast %cst_20 : f32 to vector<16x1xf32>
      %31 = arith.addf %29, %30 : vector<16x1xf32>
      %32 = math.rsqrt %31 : vector<16x1xf32>
      %33 = vector.broadcast %32 : vector<16x1xf32> to vector<16x32xf32>
      %34 = arith.mulf %24, %33 : vector<16x32xf32>
      %c0_21 = arith.constant 0 : index
      %c0_22 = arith.constant 0 : index
      %35 = vector.load %arg7[%c0_21, %c0_22] : memref<1x32xf32, #tpu.memory_space<vmem>>, vector<1x32xf32>
      %36 = vector.broadcast %35 : vector<1x32xf32> to vector<16x32xf32>
      %37 = arith.mulf %34, %36 : vector<16x32xf32>
      %c0_23 = arith.constant 0 : index
      %c0_24 = arith.constant 0 : index
      %38 = vector.load %arg8[%c0_23, %c0_24] : memref<1x32xf32, #tpu.memory_space<vmem>>, vector<1x32xf32>
      %39 = vector.broadcast %38 : vector<1x32xf32> to vector<16x32xf32>
      %40 = arith.addf %37, %39 : vector<16x32xf32>
      %41 = arith.truncf %40 : vector<16x32xf32> to vector<16x32xbf16>
      %c0_25 = arith.constant 0 : index
      %c0_26 = arith.constant 0 : index
      %42 = vector.load %arg9[%c0_25, %c0_26] : memref<16x32xbf16, #tpu.memory_space<vmem>>, vector<16x32xbf16>
      tpu.vector_store %arg9[%c0_25, %c0_26], %41 {strides = array<i32>} : memref<16x32xbf16, #tpu.memory_space<vmem>>, vector<16x32xbf16>,
    } else {
    }
    return
  }
  func.func @transform_0(%arg0: i32, %arg1: i32, %arg2: i32) -> (i32, i32) {
    %c0_i32 = arith.constant 0 : i32
    return %arg0, %arg2 : i32, i32
  }
  func.func @transform_1(%arg0: i32, %arg1: i32, %arg2: i32) -> (i32, i32) {
    %c0_i32 = arith.constant 0 : i32
    return %arg2, %arg1 : i32, i32
  }
  func.func @transform_2(%arg0: i32, %arg1: i32, %arg2: i32) -> (i32, i32) {
    %c0_i32 = arith.constant 0 : i32
    %c0_i32_0 = arith.constant 0 : i32
    return %c0_i32, %arg1 : i32, i32
  }
  func.func @transform_3(%arg0: i32, %arg1: i32, %arg2: i32) -> (i32, i32) {
    %c0_i32 = arith.constant 0 : i32
    return %arg0, %arg1 : i32, i32
  }
  func.func @transform_4(%arg0: i32, %arg1: i32, %arg2: i32) -> (i32, i32) {
    %c0_i32 = arith.constant 0 : i32
    %c0_i32_0 = arith.constant 0 : i32
    return %c0_i32, %arg1 : i32, i32
  }
  func.func @transform_5(%arg0: i32, %arg1: i32, %arg2: i32) -> (i32, i32) {
    %c0_i32 = arith.constant 0 : i32
    %c0_i32_0 = arith.constant 0 : i32
    return %c0_i32, %arg1 : i32, i32
  }
  func.func @transform_6(%arg0: i32, %arg1: i32, %arg2: i32) -> (i32, i32) {
    %c0_i32 = arith.constant 0 : i32
    return %arg0, %arg1 : i32, i32
  }
}

module attributes {stable_mosaic.version = 11 : i64} {
  func.func @_linear_kernel(%arg0: i32, %arg1: i32, %arg2: i32, %arg3: memref<16x32xbf16, #tpu.memory_space<vmem>>, %arg4: memref<32x32xbf16, #tpu.memory_space<vmem>>, %arg5: memref<1x32xf32, #tpu.memory_space<vmem>>, %arg6: memref<16x32xbf16, #tpu.memory_space<vmem>>, %arg7: memref<16x32xf32, #tpu.memory_space<vmem>>) attributes {dimension_semantics = [#tpu.dimension_semantics<parallel>, #tpu.dimension_semantics<parallel>, #tpu.dimension_semantics<arbitrary>], iteration_bounds = array<i64: 1, 1, 1>, scalar_prefetch = 0 : i64, scratch_operands = 1 : i64, tpu.core_type = #tpu.core_type<tc>, window_params = [{transform_indices = @transform_0, window_bounds = array<i64: 16, 32>}, {transform_indices = @transform_1, window_bounds = array<i64: 32, 32>}, {transform_indices = @transform_2, window_bounds = array<i64: 1, 32>}, {transform_indices = @transform_3, window_bounds = array<i64: 16, 32>}]} {
    %c0_i32 = arith.constant 0 : i32
    %0 = arith.cmpi eq, %arg2, %c0_i32 : i32
    %1 = arith.extui %0 : i1 to i32
    %c0_i32_0 = arith.constant 0 : i32
    %2 = arith.cmpi ne, %1, %c0_i32_0 : i32
    scf.if %2 {
      %cst_10 = arith.constant 0.000000e+00 : f32
      %12 = vector.broadcast %cst_10 : f32 to vector<16x32xf32>
      %c0_11 = arith.constant 0 : index
      %c0_12 = arith.constant 0 : index
      %13 = vector.load %arg7[%c0_11, %c0_12] : memref<16x32xf32, #tpu.memory_space<vmem>>, vector<16x32xf32>
      tpu.vector_store %arg7[%c0_11, %c0_12], %12 {strides = array<i32>} : memref<16x32xf32, #tpu.memory_space<vmem>>, vector<16x32xf32>,
    } else {
    }
    %c0 = arith.constant 0 : index
    %c0_1 = arith.constant 0 : index
    %3 = vector.load %arg3[%c0, %c0_1] : memref<16x32xbf16, #tpu.memory_space<vmem>>, vector<16x32xbf16>
    %c0_2 = arith.constant 0 : index
    %c0_3 = arith.constant 0 : index
    %4 = vector.load %arg7[%c0_2, %c0_3] : memref<16x32xf32, #tpu.memory_space<vmem>>, vector<16x32xf32>
    %c0_4 = arith.constant 0 : index
    %c0_5 = arith.constant 0 : index
    %5 = vector.load %arg4[%c0_4, %c0_5] : memref<32x32xbf16, #tpu.memory_space<vmem>>, vector<32x32xbf16>
    %cst = arith.constant dense<0.000000e+00> : vector<16x32xf32>
    %6 = tpu.matmul %3, %5, %cst {dimension_numbers = #tpu.dot_dimension_numbers<[1], [0], [0], [1], [0, 0, 1, 1], [], []>} : vector<16x32xbf16>, vector<32x32xbf16>, vector<16x32xf32> -> vector<16x32xf32>
    %7 = arith.addf %4, %6 : vector<16x32xf32>
    %c0_6 = arith.constant 0 : index
    %c0_7 = arith.constant 0 : index
    %8 = vector.load %arg7[%c0_6, %c0_7] : memref<16x32xf32, #tpu.memory_space<vmem>>, vector<16x32xf32>
    tpu.vector_store %arg7[%c0_6, %c0_7], %7 {strides = array<i32>} : memref<16x32xf32, #tpu.memory_space<vmem>>, vector<16x32xf32>,
    %c0_i32_8 = arith.constant 0 : i32
    %9 = arith.cmpi eq, %arg2, %c0_i32_8 : i32
    %10 = arith.extui %9 : i1 to i32
    %c0_i32_9 = arith.constant 0 : i32
    %11 = arith.cmpi ne, %10, %c0_i32_9 : i32
    scf.if %11 {
      %c0_10 = arith.constant 0 : index
      %c0_11 = arith.constant 0 : index
      %12 = vector.load %arg7[%c0_10, %c0_11] : memref<16x32xf32, #tpu.memory_space<vmem>>, vector<16x32xf32>
      %c0_12 = arith.constant 0 : index
      %c0_13 = arith.constant 0 : index
      %13 = vector.load %arg5[%c0_12, %c0_13] : memref<1x32xf32, #tpu.memory_space<vmem>>, vector<1x32xf32>
      %14 = vector.broadcast %13 : vector<1x32xf32> to vector<16x32xf32>
      %15 = arith.addf %12, %14 : vector<16x32xf32>
      %16 = arith.truncf %15 : vector<16x32xf32> to vector<16x32xbf16>
      %c0_14 = arith.constant 0 : index
      %c0_15 = arith.constant 0 : index
      %17 = vector.load %arg6[%c0_14, %c0_15] : memref<16x32xbf16, #tpu.memory_space<vmem>>, vector<16x32xbf16>
      tpu.vector_store %arg6[%c0_14, %c0_15], %16 {strides = array<i32>} : memref<16x32xbf16, #tpu.memory_space<vmem>>, vector<16x32xbf16>,
    } else {
    }
    return
  }
  func.func @transform_0(%arg0: i32, %arg1: i32, %arg2: i32) -> (i32, i32) {
    %c0_i32 = arith.constant 0 : i32
    return %arg0, %arg2 : i32, i32
  }
  func.func @transform_1(%arg0: i32, %arg1: i32, %arg2: i32) -> (i32, i32) {
    %c0_i32 = arith.constant 0 : i32
    return %arg2, %arg1 : i32, i32
  }
  func.func @transform_2(%arg0: i32, %arg1: i32, %arg2: i32) -> (i32, i32) {
    %c0_i32 = arith.constant 0 : i32
    %c0_i32_0 = arith.constant 0 : i32
    return %c0_i32, %arg1 : i32, i32
  }
  func.func @transform_3(%arg0: i32, %arg1: i32, %arg2: i32) -> (i32, i32) {
    %c0_i32 = arith.constant 0 : i32
    return %arg0, %arg1 : i32, i32
  }
}

module attributes {stable_mosaic.version = 11 : i64} {
  func.func @_linear_kernel(%arg0: i32, %arg1: i32, %arg2: i32, %arg3: memref<16x32xbf16, #tpu.memory_space<vmem>>, %arg4: memref<32x64xbf16, #tpu.memory_space<vmem>>, %arg5: memref<1x64xf32, #tpu.memory_space<vmem>>, %arg6: memref<16x64xbf16, #tpu.memory_space<vmem>>, %arg7: memref<16x64xf32, #tpu.memory_space<vmem>>) attributes {dimension_semantics = [#tpu.dimension_semantics<parallel>, #tpu.dimension_semantics<parallel>, #tpu.dimension_semantics<arbitrary>], iteration_bounds = array<i64: 1, 1, 1>, scalar_prefetch = 0 : i64, scratch_operands = 1 : i64, tpu.core_type = #tpu.core_type<tc>, window_params = [{transform_indices = @transform_0, window_bounds = array<i64: 16, 32>}, {transform_indices = @transform_1, window_bounds = array<i64: 32, 64>}, {transform_indices = @transform_2, window_bounds = array<i64: 1, 64>}, {transform_indices = @transform_3, window_bounds = array<i64: 16, 64>}]} {
    %c0_i32 = arith.constant 0 : i32
    %0 = arith.cmpi eq, %arg2, %c0_i32 : i32
    %1 = arith.extui %0 : i1 to i32
    %c0_i32_0 = arith.constant 0 : i32
    %2 = arith.cmpi ne, %1, %c0_i32_0 : i32
    scf.if %2 {
      %cst_10 = arith.constant 0.000000e+00 : f32
      %12 = vector.broadcast %cst_10 : f32 to vector<16x64xf32>
      %c0_11 = arith.constant 0 : index
      %c0_12 = arith.constant 0 : index
      %13 = vector.load %arg7[%c0_11, %c0_12] : memref<16x64xf32, #tpu.memory_space<vmem>>, vector<16x64xf32>
      tpu.vector_store %arg7[%c0_11, %c0_12], %12 {strides = array<i32>} : memref<16x64xf32, #tpu.memory_space<vmem>>, vector<16x64xf32>,
    } else {
    }
    %c0 = arith.constant 0 : index
    %c0_1 = arith.constant 0 : index
    %3 = vector.load %arg3[%c0, %c0_1] : memref<16x32xbf16, #tpu.memory_space<vmem>>, vector<16x32xbf16>
    %c0_2 = arith.constant 0 : index
    %c0_3 = arith.constant 0 : index
    %4 = vector.load %arg7[%c0_2, %c0_3] : memref<16x64xf32, #tpu.memory_space<vmem>>, vector<16x64xf32>
    %c0_4 = arith.constant 0 : index
    %c0_5 = arith.constant 0 : index
    %5 = vector.load %arg4[%c0_4, %c0_5] : memref<32x64xbf16, #tpu.memory_space<vmem>>, vector<32x64xbf16>
    %cst = arith.constant dense<0.000000e+00> : vector<16x64xf32>
    %6 = tpu.matmul %3, %5, %cst {dimension_numbers = #tpu.dot_dimension_numbers<[1], [0], [0], [1], [0, 0, 1, 1], [], []>} : vector<16x32xbf16>, vector<32x64xbf16>, vector<16x64xf32> -> vector<16x64xf32>
    %7 = arith.addf %4, %6 : vector<16x64xf32>
    %c0_6 = arith.constant 0 : index
    %c0_7 = arith.constant 0 : index
    %8 = vector.load %arg7[%c0_6, %c0_7] : memref<16x64xf32, #tpu.memory_space<vmem>>, vector<16x64xf32>
    tpu.vector_store %arg7[%c0_6, %c0_7], %7 {strides = array<i32>} : memref<16x64xf32, #tpu.memory_space<vmem>>, vector<16x64xf32>,
    %c0_i32_8 = arith.constant 0 : i32
    %9 = arith.cmpi eq, %arg2, %c0_i32_8 : i32
    %10 = arith.extui %9 : i1 to i32
    %c0_i32_9 = arith.constant 0 : i32
    %11 = arith.cmpi ne, %10, %c0_i32_9 : i32
    scf.if %11 {
      %c0_10 = arith.constant 0 : index
      %c0_11 = arith.constant 0 : index
      %12 = vector.load %arg7[%c0_10, %c0_11] : memref<16x64xf32, #tpu.memory_space<vmem>>, vector<16x64xf32>
      %c0_12 = arith.constant 0 : index
      %c0_13 = arith.constant 0 : index
      %13 = vector.load %arg5[%c0_12, %c0_13] : memref<1x64xf32, #tpu.memory_space<vmem>>, vector<1x64xf32>
      %14 = vector.broadcast %13 : vector<1x64xf32> to vector<16x64xf32>
      %15 = arith.addf %12, %14 : vector<16x64xf32>
      %16 = arith.truncf %15 : vector<16x64xf32> to vector<16x64xbf16>
      %c0_14 = arith.constant 0 : index
      %c0_15 = arith.constant 0 : index
      %17 = vector.load %arg6[%c0_14, %c0_15] : memref<16x64xbf16, #tpu.memory_space<vmem>>, vector<16x64xbf16>
      tpu.vector_store %arg6[%c0_14, %c0_15], %16 {strides = array<i32>} : memref<16x64xbf16, #tpu.memory_space<vmem>>, vector<16x64xbf16>,
    } else {
    }
    return
  }
  func.func @transform_0(%arg0: i32, %arg1: i32, %arg2: i32) -> (i32, i32) {
    %c0_i32 = arith.constant 0 : i32
    return %arg0, %arg2 : i32, i32
  }
  func.func @transform_1(%arg0: i32, %arg1: i32, %arg2: i32) -> (i32, i32) {
    %c0_i32 = arith.constant 0 : i32
    return %arg2, %arg1 : i32, i32
  }
  func.func @transform_2(%arg0: i32, %arg1: i32, %arg2: i32) -> (i32, i32) {
    %c0_i32 = arith.constant 0 : i32
    %c0_i32_0 = arith.constant 0 : i32
    return %c0_i32, %arg1 : i32, i32
  }
  func.func @transform_3(%arg0: i32, %arg1: i32, %arg2: i32) -> (i32, i32) {
    %c0_i32 = arith.constant 0 : i32
    return %arg0, %arg1 : i32, i32
  }
}

module attributes {stable_mosaic.version = 11 : i64} {
  func.func @_ffn_kernel(%arg0: i32, %arg1: memref<16x32xbf16, #tpu.memory_space<vmem>>, %arg2: memref<32x128xbf16, #tpu.memory_space<vmem>>, %arg3: memref<1x128xf32, #tpu.memory_space<vmem>>, %arg4: memref<128x32xbf16, #tpu.memory_space<vmem>>, %arg5: memref<1x32xf32, #tpu.memory_space<vmem>>, %arg6: memref<1x32xf32, #tpu.memory_space<vmem>>, %arg7: memref<1x32xf32, #tpu.memory_space<vmem>>, %arg8: memref<16x32xbf16, #tpu.memory_space<vmem>>) attributes {dimension_semantics = [#tpu.dimension_semantics<parallel>], iteration_bounds = array<i64: 1>, scalar_prefetch = 0 : i64, scratch_operands = 0 : i64, tpu.core_type = #tpu.core_type<tc>, window_params = [{transform_indices = @transform_0, window_bounds = array<i64: 16, 32>}, {pipeline_mode = #tpu.pipeline_mode<synchronous>, transform_indices = @transform_1, window_bounds = array<i64: 32, 128>}, {pipeline_mode = #tpu.pipeline_mode<synchronous>, transform_indices = @transform_2, window_bounds = array<i64: 1, 128>}, {pipeline_mode = #tpu.pipeline_mode<synchronous>, transform_indices = @transform_3, window_bounds = array<i64: 128, 32>}, {pipeline_mode = #tpu.pipeline_mode<synchronous>, transform_indices = @transform_4, window_bounds = array<i64: 1, 32>}, {pipeline_mode = #tpu.pipeline_mode<synchronous>, transform_indices = @transform_5, window_bounds = array<i64: 1, 32>}, {pipeline_mode = #tpu.pipeline_mode<synchronous>, transform_indices = @transform_6, window_bounds = array<i64: 1, 32>}, {transform_indices = @transform_7, window_bounds = array<i64: 16, 32>}]} {
    %c0 = arith.constant 0 : index
    %c0_0 = arith.constant 0 : index
    %0 = vector.load %arg1[%c0, %c0_0] : memref<16x32xbf16, #tpu.memory_space<vmem>>, vector<16x32xbf16>
    %1 = arith.extf %0 : vector<16x32xbf16> to vector<16x32xf32>
    %c0_1 = arith.constant 0 : index
    %c0_2 = arith.constant 0 : index
    %2 = vector.load %arg1[%c0_1, %c0_2] : memref<16x32xbf16, #tpu.memory_space<vmem>>, vector<16x32xbf16>
    %c0_3 = arith.constant 0 : index
    %c0_4 = arith.constant 0 : index
    %3 = vector.load %arg2[%c0_3, %c0_4] : memref<32x128xbf16, #tpu.memory_space<vmem>>, vector<32x128xbf16>
    %cst = arith.constant dense<0.000000e+00> : vector<16x128xf32>
    %4 = tpu.matmul %2, %3, %cst {dimension_numbers = #tpu.dot_dimension_numbers<[1], [0], [0], [1], [0, 0, 1, 1], [], []>} : vector<16x32xbf16>, vector<32x128xbf16>, vector<16x128xf32> -> vector<16x128xf32>
    %c0_5 = arith.constant 0 : index
    %c0_6 = arith.constant 0 : index
    %5 = vector.load %arg3[%c0_5, %c0_6] : memref<1x128xf32, #tpu.memory_space<vmem>>, vector<1x128xf32>
    %6 = vector.broadcast %5 : vector<1x128xf32> to vector<16x128xf32>
    %7 = arith.addf %4, %6 : vector<16x128xf32>
    %cst_7 = arith.constant 0.000000e+00 : f32
    %8 = vector.broadcast %cst_7 : f32 to vector<16x128xf32>
    %9 = arith.maximumf %7, %8 : vector<16x128xf32>
    %10 = arith.truncf %9 : vector<16x128xf32> to vector<16x128xbf16>
    %c0_8 = arith.constant 0 : index
    %c0_9 = arith.constant 0 : index
    %11 = vector.load %arg4[%c0_8, %c0_9] : memref<128x32xbf16, #tpu.memory_space<vmem>>, vector<128x32xbf16>
    %cst_10 = arith.constant dense<0.000000e+00> : vector<16x32xf32>
    %12 = tpu.matmul %10, %11, %cst_10 {dimension_numbers = #tpu.dot_dimension_numbers<[1], [0], [0], [1], [0, 0, 1, 1], [], []>} : vector<16x128xbf16>, vector<128x32xbf16>, vector<16x32xf32> -> vector<16x32xf32>
    %c0_11 = arith.constant 0 : index
    %c0_12 = arith.constant 0 : index
    %13 = vector.load %arg5[%c0_11, %c0_12] : memref<1x32xf32, #tpu.memory_space<vmem>>, vector<1x32xf32>
    %14 = vector.broadcast %13 : vector<1x32xf32> to vector<16x32xf32>
    %15 = arith.addf %12, %14 : vector<16x32xf32>
    %16 = arith.addf %15, %1 : vector<16x32xf32>
    %cst_13 = arith.constant dense<0.000000e+00> : vector<16xf32>
    %17 = vector.multi_reduction <add>, %16, %cst_13 [1] : vector<16x32xf32> to vector<16xf32>
    %18 = vector.shape_cast %17 : vector<16xf32> to vector<16x1xf32>
    %cst_14 = arith.constant 3.200000e+01 : f32
    %19 = vector.broadcast %cst_14 : f32 to vector<16x1xf32>
    %20 = arith.divf %18, %19 : vector<16x1xf32>
    %21 = vector.broadcast %20 : vector<16x1xf32> to vector<16x32xf32>
    %22 = arith.subf %16, %21 : vector<16x32xf32>
    %23 = arith.mulf %22, %22 : vector<16x32xf32>
    %cst_15 = arith.constant dense<0.000000e+00> : vector<16xf32>
    %24 = vector.multi_reduction <add>, %23, %cst_15 [1] : vector<16x32xf32> to vector<16xf32>
    %25 = vector.shape_cast %24 : vector<16xf32> to vector<16x1xf32>
    %cst_16 = arith.constant 3.200000e+01 : f32
    %26 = vector.broadcast %cst_16 : f32 to vector<16x1xf32>
    %27 = arith.divf %25, %26 : vector<16x1xf32>
    %cst_17 = arith.constant 9.99999974E-6 : f32
    %28 = vector.broadcast %cst_17 : f32 to vector<16x1xf32>
    %29 = arith.addf %27, %28 : vector<16x1xf32>
    %30 = math.rsqrt %29 : vector<16x1xf32>
    %31 = vector.broadcast %30 : vector<16x1xf32> to vector<16x32xf32>
    %32 = arith.mulf %22, %31 : vector<16x32xf32>
    %c0_18 = arith.constant 0 : index
    %c0_19 = arith.constant 0 : index
    %33 = vector.load %arg6[%c0_18, %c0_19] : memref<1x32xf32, #tpu.memory_space<vmem>>, vector<1x32xf32>
    %34 = vector.broadcast %33 : vector<1x32xf32> to vector<16x32xf32>
    %35 = arith.mulf %32, %34 : vector<16x32xf32>
    %c0_20 = arith.constant 0 : index
    %c0_21 = arith.constant 0 : index
    %36 = vector.load %arg7[%c0_20, %c0_21] : memref<1x32xf32, #tpu.memory_space<vmem>>, vector<1x32xf32>
    %37 = vector.broadcast %36 : vector<1x32xf32> to vector<16x32xf32>
    %38 = arith.addf %35, %37 : vector<16x32xf32>
    %39 = arith.truncf %38 : vector<16x32xf32> to vector<16x32xbf16>
    %c0_22 = arith.constant 0 : index
    %c0_23 = arith.constant 0 : index
    %40 = vector.load %arg8[%c0_22, %c0_23] : memref<16x32xbf16, #tpu.memory_space<vmem>>, vector<16x32xbf16>
    tpu.vector_store %arg8[%c0_22, %c0_23], %39 {strides = array<i32>} : memref<16x32xbf16, #tpu.memory_space<vmem>>, vector<16x32xbf16>,
    return
  }
  func.func @transform_0(%arg0: i32) -> (i32, i32) {
    %c0_i32 = arith.constant 0 : i32
    %c0_i32_0 = arith.constant 0 : i32
    return %arg0, %c0_i32 : i32, i32
  }
  func.func @transform_1(%arg0: i32) -> (i32, i32) {
    %c0_i32 = arith.constant 0 : i32
    %c0_i32_0 = arith.constant 0 : i32
    %c0_i32_1 = arith.constant 0 : i32
    return %c0_i32, %c0_i32_0 : i32, i32
  }
  func.func @transform_2(%arg0: i32) -> (i32, i32) {
    %c0_i32 = arith.constant 0 : i32
    %c0_i32_0 = arith.constant 0 : i32
    %c0_i32_1 = arith.constant 0 : i32
    return %c0_i32, %c0_i32_0 : i32, i32
  }
  func.func @transform_3(%arg0: i32) -> (i32, i32) {
    %c0_i32 = arith.constant 0 : i32
    %c0_i32_0 = arith.constant 0 : i32
    %c0_i32_1 = arith.constant 0 : i32
    return %c0_i32, %c0_i32_0 : i32, i32
  }
  func.func @transform_4(%arg0: i32) -> (i32, i32) {
    %c0_i32 = arith.constant 0 : i32
    %c0_i32_0 = arith.constant 0 : i32
    %c0_i32_1 = arith.constant 0 : i32
    return %c0_i32, %c0_i32_0 : i32, i32
  }
  func.func @transform_5(%arg0: i32) -> (i32, i32) {
    %c0_i32 = arith.constant 0 : i32
    %c0_i32_0 = arith.constant 0 : i32
    %c0_i32_1 = arith.constant 0 : i32
    return %c0_i32, %c0_i32_0 : i32, i32
  }
  func.func @transform_6(%arg0: i32) -> (i32, i32) {
    %c0_i32 = arith.constant 0 : i32
    %c0_i32_0 = arith.constant 0 : i32
    %c0_i32_1 = arith.constant 0 : i32
    return %c0_i32, %c0_i32_0 : i32, i32
  }
  func.func @transform_7(%arg0: i32) -> (i32, i32) {
    %c0_i32 = arith.constant 0 : i32
    %c0_i32_0 = arith.constant 0 : i32
    return %arg0, %c0_i32 : i32, i32
  }
}

module attributes {stable_mosaic.version = 11 : i64} {
  func.func @_linear_kernel(%arg0: i32, %arg1: i32, %arg2: i32, %arg3: memref<16x32xbf16, #tpu.memory_space<vmem>>, %arg4: memref<32x256xbf16, #tpu.memory_space<vmem>>, %arg5: memref<1x256xf32, #tpu.memory_space<vmem>>, %arg6: memref<1x32xf32, #tpu.memory_space<vmem>>, %arg7: memref<1x32xf32, #tpu.memory_space<vmem>>, %arg8: memref<16x256xf32, #tpu.memory_space<vmem>>, %arg9: memref<16x256xf32, #tpu.memory_space<vmem>>) attributes {dimension_semantics = [#tpu.dimension_semantics<parallel>, #tpu.dimension_semantics<parallel>, #tpu.dimension_semantics<arbitrary>], iteration_bounds = array<i64: 1, 1, 1>, scalar_prefetch = 0 : i64, scratch_operands = 1 : i64, tpu.core_type = #tpu.core_type<tc>, window_params = [{transform_indices = @transform_0, window_bounds = array<i64: 16, 32>}, {transform_indices = @transform_1, window_bounds = array<i64: 32, 256>}, {transform_indices = @transform_2, window_bounds = array<i64: 1, 256>}, {transform_indices = @transform_3, window_bounds = array<i64: 1, 32>}, {transform_indices = @transform_4, window_bounds = array<i64: 1, 32>}, {transform_indices = @transform_5, window_bounds = array<i64: 16, 256>}]} {
    %c0_i32 = arith.constant 0 : i32
    %0 = arith.cmpi eq, %arg2, %c0_i32 : i32
    %1 = arith.extui %0 : i1 to i32
    %c0_i32_0 = arith.constant 0 : i32
    %2 = arith.cmpi ne, %1, %c0_i32_0 : i32
    scf.if %2 {
      %cst_19 = arith.constant 0.000000e+00 : f32
      %36 = vector.broadcast %cst_19 : f32 to vector<16x256xf32>
      %c0_20 = arith.constant 0 : index
      %c0_21 = arith.constant 0 : index
      %37 = vector.load %arg9[%c0_20, %c0_21] : memref<16x256xf32, #tpu.memory_space<vmem>>, vector<16x256xf32>
      tpu.vector_store %arg9[%c0_20, %c0_21], %36 {strides = array<i32>} : memref<16x256xf32, #tpu.memory_space<vmem>>, vector<16x256xf32>,
    } else {
    }
    %c0 = arith.constant 0 : index
    %c0_1 = arith.constant 0 : index
    %3 = vector.load %arg3[%c0, %c0_1] : memref<16x32xbf16, #tpu.memory_space<vmem>>, vector<16x32xbf16>
    %4 = arith.extf %3 : vector<16x32xbf16> to vector<16x32xf32>
    %cst = arith.constant dense<0.000000e+00> : vector<16xf32>
    %5 = vector.multi_reduction <add>, %4, %cst [1] : vector<16x32xf32> to vector<16xf32>
    %6 = vector.shape_cast %5 : vector<16xf32> to vector<16x1xf32>
    %cst_2 = arith.constant 3.200000e+01 : f32
    %7 = vector.broadcast %cst_2 : f32 to vector<16x1xf32>
    %8 = arith.divf %6, %7 : vector<16x1xf32>
    %9 = vector.broadcast %8 : vector<16x1xf32> to vector<16x32xf32>
    %10 = arith.subf %4, %9 : vector<16x32xf32>
    %11 = arith.mulf %10, %10 : vector<16x32xf32>
    %cst_3 = arith.constant dense<0.000000e+00> : vector<16xf32>
    %12 = vector.multi_reduction <add>, %11, %cst_3 [1] : vector<16x32xf32> to vector<16xf32>
    %13 = vector.shape_cast %12 : vector<16xf32> to vector<16x1xf32>
    %cst_4 = arith.constant 3.200000e+01 : f32
    %14 = vector.broadcast %cst_4 : f32 to vector<16x1xf32>
    %15 = arith.divf %13, %14 : vector<16x1xf32>
    %cst_5 = arith.constant 9.99999997E-7 : f32
    %16 = vector.broadcast %cst_5 : f32 to vector<16x1xf32>
    %17 = arith.addf %15, %16 : vector<16x1xf32>
    %18 = math.rsqrt %17 : vector<16x1xf32>
    %19 = vector.broadcast %18 : vector<16x1xf32> to vector<16x32xf32>
    %20 = arith.mulf %10, %19 : vector<16x32xf32>
    %c0_6 = arith.constant 0 : index
    %c0_7 = arith.constant 0 : index
    %21 = vector.load %arg6[%c0_6, %c0_7] : memref<1x32xf32, #tpu.memory_space<vmem>>, vector<1x32xf32>
    %22 = vector.broadcast %21 : vector<1x32xf32> to vector<16x32xf32>
    %23 = arith.mulf %20, %22 : vector<16x32xf32>
    %c0_8 = arith.constant 0 : index
    %c0_9 = arith.constant 0 : index
    %24 = vector.load %arg7[%c0_8, %c0_9] : memref<1x32xf32, #tpu.memory_space<vmem>>, vector<1x32xf32>
    %25 = vector.broadcast %24 : vector<1x32xf32> to vector<16x32xf32>
    %26 = arith.addf %23, %25 : vector<16x32xf32>
    %27 = arith.truncf %26 : vector<16x32xf32> to vector<16x32xbf16>
    %c0_10 = arith.constant 0 : index
    %c0_11 = arith.constant 0 : index
    %28 = vector.load %arg9[%c0_10, %c0_11] : memref<16x256xf32, #tpu.memory_space<vmem>>, vector<16x256xf32>
    %c0_12 = arith.constant 0 : index
    %c0_13 = arith.constant 0 : index
    %29 = vector.load %arg4[%c0_12, %c0_13] : memref<32x256xbf16, #tpu.memory_space<vmem>>, vector<32x256xbf16>
    %cst_14 = arith.constant dense<0.000000e+00> : vector<16x256xf32>
    %30 = tpu.matmul %27, %29, %cst_14 {dimension_numbers = #tpu.dot_dimension_numbers<[1], [0], [0], [1], [0, 0, 1, 1], [], []>} : vector<16x32xbf16>, vector<32x256xbf16>, vector<16x256xf32> -> vector<16x256xf32>
    %31 = arith.addf %28, %30 : vector<16x256xf32>
    %c0_15 = arith.constant 0 : index
    %c0_16 = arith.constant 0 : index
    %32 = vector.load %arg9[%c0_15, %c0_16] : memref<16x256xf32, #tpu.memory_space<vmem>>, vector<16x256xf32>
    tpu.vector_store %arg9[%c0_15, %c0_16], %31 {strides = array<i32>} : memref<16x256xf32, #tpu.memory_space<vmem>>, vector<16x256xf32>,
    %c0_i32_17 = arith.constant 0 : i32
    %33 = arith.cmpi eq, %arg2, %c0_i32_17 : i32
    %34 = arith.extui %33 : i1 to i32
    %c0_i32_18 = arith.constant 0 : i32
    %35 = arith.cmpi ne, %34, %c0_i32_18 : i32
    scf.if %35 {
      %c0_19 = arith.constant 0 : index
      %c0_20 = arith.constant 0 : index
      %36 = vector.load %arg9[%c0_19, %c0_20] : memref<16x256xf32, #tpu.memory_space<vmem>>, vector<16x256xf32>
      %c0_21 = arith.constant 0 : index
      %c0_22 = arith.constant 0 : index
      %37 = vector.load %arg5[%c0_21, %c0_22] : memref<1x256xf32, #tpu.memory_space<vmem>>, vector<1x256xf32>
      %38 = vector.broadcast %37 : vector<1x256xf32> to vector<16x256xf32>
      %39 = arith.addf %36, %38 : vector<16x256xf32>
      %c0_23 = arith.constant 0 : index
      %c0_24 = arith.constant 0 : index
      %40 = vector.load %arg8[%c0_23, %c0_24] : memref<16x256xf32, #tpu.memory_space<vmem>>, vector<16x256xf32>
      tpu.vector_store %arg8[%c0_23, %c0_24], %39 {strides = array<i32>} : memref<16x256xf32, #tpu.memory_space<vmem>>, vector<16x256xf32>,
    } else {
    }
    return
  }
  func.func @transform_0(%arg0: i32, %arg1: i32, %arg2: i32) -> (i32, i32) {
    %c0_i32 = arith.constant 0 : i32
    return %arg0, %arg2 : i32, i32
  }
  func.func @transform_1(%arg0: i32, %arg1: i32, %arg2: i32) -> (i32, i32) {
    %c0_i32 = arith.constant 0 : i32
    return %arg2, %arg1 : i32, i32
  }
  func.func @transform_2(%arg0: i32, %arg1: i32, %arg2: i32) -> (i32, i32) {
    %c0_i32 = arith.constant 0 : i32
    %c0_i32_0 = arith.constant 0 : i32
    return %c0_i32, %arg1 : i32, i32
  }
  func.func @transform_3(%arg0: i32, %arg1: i32, %arg2: i32) -> (i32, i32) {
    %c0_i32 = arith.constant 0 : i32
    %c0_i32_0 = arith.constant 0 : i32
    return %c0_i32, %arg2 : i32, i32
  }
  func.func @transform_4(%arg0: i32, %arg1: i32, %arg2: i32) -> (i32, i32) {
    %c0_i32 = arith.constant 0 : i32
    %c0_i32_0 = arith.constant 0 : i32
    return %c0_i32, %arg2 : i32, i32
  }
  func.func @transform_5(%arg0: i32, %arg1: i32, %arg2: i32) -> (i32, i32) {
    %c0_i32 = arith.constant 0 : i32
    return %arg0, %arg1 : i32, i32
  }
}

</mosaic_0001>

<llo_original>
// kernel: _lambda_.22
$region0: #{_lambda_.22}
  #allocation0 [shape = 'u32[]', space=smem, size = 0x4, offset = 0x4, fixed_abs, tag = 'smem constant byte address 0x4 - core index']
  #allocation1 [shape = 'u32[72,128]{1,0:T(1,128)}', space=vmem, size = 0x9000, scoped, tag = 'internal scratch']
  #allocation2 [shape = 'f32[16,32]{1,0:T(8,128)}', space=vmem, size = 0x2000, scoped, tag = 'scratch operand']
  %s0 = inlined_call_operand.vmem [shape: f32[16,64], index: 0, kind: input, shape index: {}]
  %s1 = inlined_call_operand.vmem [shape: bf16[64,32], index: 1, kind: input, shape index: {}]
  %s2 = inlined_call_operand.vmem [shape: f32[1,32], index: 2, kind: input, shape index: {}]
  %s3 = inlined_call_operand.vmem [shape: bf16[16,32], index: 3, kind: output, shape index: {}]
  %s4 = sld [smem:[#allocation0]]
  $region30: #{_lambda_.22} parent=0
    _
  %s6 = ssub.s32 1, %s4
  %s7 = scalar_select 0, %s6, %s4
  // Predicated region
  $region2: #{_lambda_.22} parent=0 // pred_check
    _
  $region3: #{_lambda_.22} parent=0 // pred_check_branch
    %9 = sbr.rel (0) target = $region5
  $region4: #{_lambda_.22} parent=0 // pred_region
    _
  $region5: #{_lambda_.22} parent=0 // pred_fallthru
    _
  // Predicated region
  $region6: #{_lambda_.22} parent=0 // pred_check
    _
  $region7: #{_lambda_.22} parent=0 // pred_check_branch
    %11 = sbr.rel (0) target = $region9
  $region8: #{_lambda_.22} parent=0 // pred_region
    _
  $region9: #{_lambda_.22} parent=0 // pred_fallthru
    _
  // Predicated region
  $region10: #{_lambda_.22} parent=0 // pred_check
    _
  $region11: #{_lambda_.22} parent=0 // pred_check_branch
    %13 = sbr.rel (0) target = $region13
  $region12: #{_lambda_.22} parent=0 // pred_region
    _
  $region13: #{_lambda_.22} parent=0 // pred_fallthru
    _
  %p15 = scmp.eq.s32.totalorder 0, 0
  // Predicated region
  $region14: #{_lambda_.22} parent=0 // pred_check
    %p16 = pneg %p15
  $region15: #{_lambda_.22} parent=0 // pred_check_branch
    %18 = sbr.rel (%p16) target = $region17
  $region16: #{_lambda_.22} parent=0 // pred_region
    %vm19 = vcmask 261120
    %20 = vst.msk [vmem:[#allocation2] sm:$0xff] %vm19, 0.0
    %21 = vst.msk [vmem:[#allocation2 + $0x8] sm:$0xff] %vm19, 0.0
  $region17: #{_lambda_.22} parent=0 // pred_fallthru
    _
  %v22 = vld [vmem:[%s0] sm:$0xff]
  %v23 = vld [vmem:[%s0 + $0x8] sm:$0xff]
  %v24 = vpack.c.bf16 %v23, %v22
  %v25 = vld [vmem:[#allocation2] sm:$0xff]
  %v26 = vld [vmem:[#allocation2 + $0x8] sm:$0xff]
  %v27 = vld [vmem:[%s1] sm:$0xf]
  %v28 = vld [vmem:[%s1 + $0x4] sm:$0xf]
  %v29 = vld [vmem:[%s1 + $0x8] sm:$0xf]
  %v30 = vld [vmem:[%s1 + $0xc] sm:$0xf]
  %v31 = vld [vmem:[%s1 + $0x10] sm:$0xf]
  %v32 = vld [vmem:[%s1 + $0x14] sm:$0xf]
  %v33 = vld [vmem:[%s1 + $0x18] sm:$0xf]
  %v34 = vld [vmem:[%s1 + $0x1c] sm:$0xf]
  %v43 = vunpack.c.l.b16 %v27
  %v44 = vunpack.c.l.b16 %v28
  %v45 = vunpack.c.l.b16 %v29
  %v46 = vunpack.c.l.b16 %v30
  %v47 = vunpack.c.l.b16 %v31
  %v48 = vunpack.c.l.b16 %v32
  %v49 = vunpack.c.l.b16 %v33
  %v50 = vunpack.c.l.b16 %v34
  %v51 = vpack.c.b16 %v44, %v43
  %v52 = vpack.c.b16 %v46, %v45
  %v53 = vpack.c.b16 %v48, %v47
  %v54 = vpack.c.b16 %v50, %v49
  %vm59 = vcmask 523264
  %v61 = vsel %vm59, %v24, 0
  %63 = vmatpush.bf16.msra.mxu0 0
  %64 = vmatpush.bf16.msra.mxu0 0
  %65 = vmatpush.bf16.msra.mxu0 0
  %66 = vmatpush.bf16.msra.mxu0 0
  %67 = vmatpush.bf16.msra.mxu0 %v54
  %68 = vmatpush.bf16.msra.mxu0 %v53
  %69 = vmatpush.bf16.msra.mxu0 %v52
  %70 = vmatpush.bf16.msra.mxu0 %v51
  %71 = vmatmul.bf16.gmra.mxu0 %v61
  %v72 = vpop.f32.mrf.mxu0
  %v73 = vadd.f32 0.0, %v72
  %v74 = vpop.f32.mrf.mxu0
  %v75 = vadd.f32 0.0, %v74
  %76 = vdwg.mxu0
  %v77 = vadd.f32 %v25, %v73
  %v78 = vadd.f32 %v26, %v75
  %vm79 = vcmask 261120
  %80 = vst.msk [vmem:[#allocation2] sm:$0xff] %vm79, %v77
  %81 = vst.msk [vmem:[#allocation2 + $0x8] sm:$0xff] %vm79, %v78
  // Predicated region
  $region18: #{_lambda_.22} parent=0 // pred_check
    %p82 = pneg %p15
  $region19: #{_lambda_.22} parent=0 // pred_check_branch
    %84 = sbr.rel (%p82) target = $region21
  $region20: #{_lambda_.22} parent=0 // pred_region
    %v85 = vld [vmem:[#allocation2] sm:$0xff]
    %v86 = vld [vmem:[#allocation2 + $0x8] sm:$0xff]
    %v87 = vld [vmem:[%s2] sm:$0x1]
    %v89 = vperm.slane %v87, 0
    %v91 = vadd.f32 %v85, %v89
    %v92 = vadd.f32 %v86, %v89
    %v93 = vpack.c.bf16 %v91, %v91
    %v94 = vpack.c.bf16 %v92, %v92
    %vm95 = vcmask 257024
    %96 = vst.msk [vmem:[%s3] sm:$0xf] %vm95, %v93
    %97 = vst.msk [vmem:[%s3 + $0x4] sm:$0xf] %vm95, %v94
  $region21: #{_lambda_.22} parent=0 // pred_fallthru
    _
  // Predicated region
  $region22: #{_lambda_.22} parent=0 // pred_check
    _
  $region23: #{_lambda_.22} parent=0 // pred_check_branch
    %99 = sbr.rel (0) target = $region25
  $region24: #{_lambda_.22} parent=0 // pred_region
    _
  $region25: #{_lambda_.22} parent=0 // pred_fallthru
    _
  // Predicated region
  $region26: #{_lambda_.22} parent=0 // pred_check
    _
  $region27: #{_lambda_.22} parent=0 // pred_check_branch
    %101 = sbr.rel (0) target = $region29
  $region28: #{_lambda_.22} parent=0 // pred_region
    _
  $region29: #{_lambda_.22} parent=0 // pred_fallthru
    _

// kernel: _lambda_.24
$region0: #{_lambda_.24}
  #allocation0 [shape = 'u32[]', space=smem, size = 0x4, offset = 0x4, fixed_abs, tag = 'smem constant byte address 0x4 - core index']
  #allocation1 [shape = 'u32[72,128]{1,0:T(1,128)}', space=vmem, size = 0x9000, scoped, tag = 'internal scratch']
  #allocation2 [shape = 'f32[16,64]{1,0:T(8,128)}', space=vmem, size = 0x2000, scoped, tag = 'scratch operand']
  %s0 = inlined_call_operand.vmem [shape: bf16[16,32], index: 0, kind: input, shape index: {}]
  %s1 = inlined_call_operand.vmem [shape: bf16[32,64], index: 1, kind: input, shape index: {}]
  %s2 = inlined_call_operand.vmem [shape: f32[1,64], index: 2, kind: input, shape index: {}]
  %s3 = inlined_call_operand.vmem [shape: f32[1,32], index: 3, kind: input, shape index: {}]
  %s4 = inlined_call_operand.vmem [shape: f32[1,32], index: 4, kind: input, shape index: {}]
  %s5 = inlined_call_operand.vmem [shape: bf16[16,64], index: 5, kind: output, shape index: {}]
  %s6 = sld [smem:[#allocation0]]
  $region38: #{_lambda_.24} parent=0
    _
  %s8 = ssub.s32 1, %s6
  %s9 = scalar_select 0, %s8, %s6
  // Predicated region
  $region2: #{_lambda_.24} parent=0 // pred_check
    _
  $region3: #{_lambda_.24} parent=0 // pred_check_branch
    %11 = sbr.rel (0) target = $region5
  $region4: #{_lambda_.24} parent=0 // pred_region
    _
  $region5: #{_lambda_.24} parent=0 // pred_fallthru
    _
  // Predicated region
  $region6: #{_lambda_.24} parent=0 // pred_check
    _
  $region7: #{_lambda_.24} parent=0 // pred_check_branch
    %13 = sbr.rel (0) target = $region9
  $region8: #{_lambda_.24} parent=0 // pred_region
    _
  $region9: #{_lambda_.24} parent=0 // pred_fallthru
    _
  // Predicated region
  $region10: #{_lambda_.24} parent=0 // pred_check
    _
  $region11: #{_lambda_.24} parent=0 // pred_check_branch
    %15 = sbr.rel (0) target = $region13
  $region12: #{_lambda_.24} parent=0 // pred_region
    _
  $region13: #{_lambda_.24} parent=0 // pred_fallthru
    _
  // Predicated region
  $region14: #{_lambda_.24} parent=0 // pred_check
    _
  $region15: #{_lambda_.24} parent=0 // pred_check_branch
    %17 = sbr.rel (0) target = $region17
  $region16: #{_lambda_.24} parent=0 // pred_region
    _
  $region17: #{_lambda_.24} parent=0 // pred_fallthru
    _
  // Predicated region
  $region18: #{_lambda_.24} parent=0 // pred_check
    _
  $region19: #{_lambda_.24} parent=0 // pred_check_branch
    %19 = sbr.rel (0) target = $region21
  $region20: #{_lambda_.24} parent=0 // pred_region
    _
  $region21: #{_lambda_.24} parent=0 // pred_fallthru
    _
  %p21 = scmp.eq.s32.totalorder 0, 0
  // Predicated region
  $region22: #{_lambda_.24} parent=0 // pred_check
    %p22 = pneg %p21
  $region23: #{_lambda_.24} parent=0 // pred_check_branch
    %24 = sbr.rel (%p22) target = $region25
  $region24: #{_lambda_.24} parent=0 // pred_region
    %vm25 = vcmask 523264
    %26 = vst.msk [vmem:[#allocation2] sm:$0xff] %vm25, 0.0
    %27 = vst.msk [vmem:[#allocation2 + $0x8] sm:$0xff] %vm25, 0.0
  $region25: #{_lambda_.24} parent=0 // pred_fallthru
    _
  %v28 = vld [vmem:[%s0] sm:$0xf]
  %v29 = vld [vmem:[%s0 + $0x4] sm:$0xf]
  %v30 = vunpack.c.l.bf16 %v28
  %v31 = vunpack.c.l.bf16 %v29
  %vm32 = vcmask 261120
  %v33 = vsel %vm32, %v30, 0.0
  %34 = vadd.xlane.f32.xlu0 %v33
  %v35 = vpop.xlane.xlu0 %34
  %v36 = vsel %vm32, %v31, 0.0
  %37 = vadd.xlane.f32.xlu0 %v36
  %v38 = vpop.xlane.xlu0 %37
  %v39 = vrcp.pop 32.0
  %v40 = vmul.f32 32.0, %v39
  %v41 = vsub.f32 1.0, %v40
  %v42 = vmul.f32 %v39, %v41
  %v43 = vadd.f32 %v39, %v42
  %vm44 = vweird.f32 %v39
  %v45 = vsel %vm44, %v39, %v43
  %v46 = vmul.f32 %v35, %v45
  %v47 = vmul.f32 %v38, %v45
  %v48 = vsub.f32 %v30, %v46
  %v49 = vsub.f32 %v31, %v47
  %v50 = vmul.f32 %v48, %v48
  %v51 = vmul.f32 %v49, %v49
  %v52 = vsel %vm32, %v50, 0.0
  %53 = vadd.xlane.f32.xlu0 %v52
  %v54 = vpop.xlane.xlu0 %53
  %v55 = vsel %vm32, %v51, 0.0
  %56 = vadd.xlane.f32.xlu0 %v55
  %v57 = vpop.xlane.xlu0 %56
  %v58 = vmul.f32 %v54, %v45
  %v59 = vmul.f32 %v57, %v45
  %v60 = vadd.f32 %v58, 1e-06
  %v61 = vadd.f32 %v59, 1e-06
  %v62 = vrsqrt.pop %v60
  %v63 = vmul.f32 %v62, %v60
  %v64 = vmul.f32 %v63, %v62
  %v65 = vmul.f32 0.5, %v64
  %v66 = vsub.f32 1.5, %v65
  %v67 = vmul.f32 %v62, %v66
  %vm68 = vweird.f32 %v60
  %vm69 = vweird.f32 %v62
  %vm70 = vmor %vm68, %vm69
  %v71 = vsel %vm70, %v62, %v67
  %v72 = vrsqrt.pop %v61
  %v73 = vmul.f32 %v72, %v61
  %v74 = vmul.f32 %v73, %v72
  %v75 = vmul.f32 0.5, %v74
  %v76 = vsub.f32 1.5, %v75
  %v77 = vmul.f32 %v72, %v76
  %vm78 = vweird.f32 %v61
  %vm79 = vweird.f32 %v72
  %vm80 = vmor %vm78, %vm79
  %v81 = vsel %vm80, %v72, %v77
  %v82 = vmul.f32 %v48, %v71
  %v83 = vmul.f32 %v49, %v81
  %v84 = vld [vmem:[%s3] sm:$0x1]
  %v86 = vperm.slane %v84, 0
  %v88 = vmul.f32 %v82, %v86
  %v89 = vmul.f32 %v83, %v86
  %v90 = vld [vmem:[%s4] sm:$0x1]
  %v92 = vperm.slane %v90, 0
  %v94 = vadd.f32 %v88, %v92
  %v95 = vadd.f32 %v89, %v92
  %v96 = vpack.c.bf16 %v95, %v94
  %v97 = vld [vmem:[#allocation2] sm:$0xff]
  %v98 = vld [vmem:[#allocation2 + $0x8] sm:$0xff]
  %v99 = vld [vmem:[%s1] sm:$0xf]
  %v100 = vld [vmem:[%s1 + $0x4] sm:$0xf]
  %v101 = vld [vmem:[%s1 + $0x8] sm:$0xf]
  %v102 = vld [vmem:[%s1 + $0xc] sm:$0xf]
  %v107 = vunpack.c.l.b16 %v99
  %v108 = vunpack.c.l.b16 %v100
  %v109 = vunpack.c.l.b16 %v101
  %v110 = vunpack.c.l.b16 %v102
  %v111 = vpack.c.b16 %v108, %v107
  %v112 = vpack.c.b16 %v110, %v109
  %v116 = vsel %vm32, %v96, 0
  %118 = vmatpush.bf16.msra.mxu0 0
  %119 = vmatpush.bf16.msra.mxu0 0
  %120 = vmatpush.bf16.msra.mxu0 0
  %121 = vmatpush.bf16.msra.mxu0 0
  %122 = vmatpush.bf16.msra.mxu0 0
  %123 = vmatpush.bf16.msra.mxu0 0
  %124 = vmatpush.bf16.msra.mxu0 %v112
  %125 = vmatpush.bf16.msra.mxu0 %v111
  %126 = vmatmul.bf16.gmra.mxu0 %v116
  %v127 = vpop.f32.mrf.mxu0
  %v128 = vadd.f32 0.0, %v127
  %v129 = vpop.f32.mrf.mxu0
  %v130 = vadd.f32 0.0, %v129
  %131 = vdwg.mxu0
  %v132 = vadd.f32 %v97, %v128
  %v133 = vadd.f32 %v98, %v130
  %vm134 = vcmask 523264
  %135 = vst.msk [vmem:[#allocation2] sm:$0xff] %vm134, %v132
  %136 = vst.msk [vmem:[#allocation2 + $0x8] sm:$0xff] %vm134, %v133
  // Predicated region
  $region26: #{_lambda_.24} parent=0 // pred_check
    %p137 = pneg %p21
  $region27: #{_lambda_.24} parent=0 // pred_check_branch
    %139 = sbr.rel (%p137) target = $region29
  $region28: #{_lambda_.24} parent=0 // pred_region
    %v140 = vld [vmem:[#allocation2] sm:$0xff]
    %v141 = vld [vmem:[#allocation2 + $0x8] sm:$0xff]
    %v142 = vld [vmem:[%s2] sm:$0x1]
    %v144 = vperm.slane %v142, 0
    %v146 = vadd.f32 %v140, %v144
    %v147 = vadd.f32 %v141, %v144
    %v148 = vpack.c.bf16 %v146, %v146
    %v149 = vpack.c.bf16 %v147, %v147
    %vm150 = vcmask 519168
    %151 = vst.msk [vmem:[%s5] sm:$0xf] %vm150, %v148
    %152 = vst.msk [vmem:[%s5 + $0x4] sm:$0xf] %vm150, %v149
  $region29: #{_lambda_.24} parent=0 // pred_fallthru
    _
  // Predicated region
  $region30: #{_lambda_.24} parent=0 // pred_check
    _
  $region31: #{_lambda_.24} parent=0 // pred_check_branch
    %154 = sbr.rel (0) target = $region33
  $region32: #{_lambda_.24} parent=0 // pred_region
    _
  $region33: #{_lambda_.24} parent=0 // pred_fallthru
    _
  // Predicated region
  $region34: #{_lambda_.24} parent=0 // pred_check
    _
  $region35: #{_lambda_.24} parent=0 // pred_check_branch
    %156 = sbr.rel (0) target = $region37
  $region36: #{_lambda_.24} parent=0 // pred_region
    _
  $region37: #{_lambda_.24} parent=0 // pred_fallthru
    _

// kernel: _lambda_.23
$region0: #{_lambda_.23}
  #allocation0 [shape = 'u32[]', space=smem, size = 0x4, offset = 0x4, fixed_abs, tag = 'smem constant byte address 0x4 - core index']
  #allocation1 [shape = 'u32[72,128]{1,0:T(1,128)}', space=vmem, size = 0x9000, scoped, tag = 'internal scratch']
  #allocation2 [shape = 'f32[16,32]{1,0:T(8,128)}', space=vmem, size = 0x2000, scoped, tag = 'scratch operand']
  %s0 = inlined_call_operand.vmem [shape: f32[16,32], index: 0, kind: input, shape index: {}]
  %s1 = inlined_call_operand.vmem [shape: bf16[32,32], index: 1, kind: input, shape index: {}]
  %s2 = inlined_call_operand.vmem [shape: f32[1,32], index: 2, kind: input, shape index: {}]
  %s3 = inlined_call_operand.vmem [shape: f32[1,32], index: 3, kind: input, shape index: {}]
  %s4 = inlined_call_operand.vmem [shape: f32[1,32], index: 4, kind: input, shape index: {}]
  %s5 = inlined_call_operand.vmem [shape: bf16[16,32], index: 5, kind: output, shape index: {}]
  %s6 = sld [smem:[#allocation0]]
  $region38: #{_lambda_.23} parent=0
    _
  %s8 = ssub.s32 1, %s6
  %s9 = scalar_select 0, %s8, %s6
  // Predicated region
  $region2: #{_lambda_.23} parent=0 // pred_check
    _
  $region3: #{_lambda_.23} parent=0 // pred_check_branch
    %11 = sbr.rel (0) target = $region5
  $region4: #{_lambda_.23} parent=0 // pred_region
    _
  $region5: #{_lambda_.23} parent=0 // pred_fallthru
    _
  // Predicated region
  $region6: #{_lambda_.23} parent=0 // pred_check
    _
  $region7: #{_lambda_.23} parent=0 // pred_check_branch
    %13 = sbr.rel (0) target = $region9
  $region8: #{_lambda_.23} parent=0 // pred_region
    _
  $region9: #{_lambda_.23} parent=0 // pred_fallthru
    _
  // Predicated region
  $region10: #{_lambda_.23} parent=0 // pred_check
    _
  $region11: #{_lambda_.23} parent=0 // pred_check_branch
    %15 = sbr.rel (0) target = $region13
  $region12: #{_lambda_.23} parent=0 // pred_region
    _
  $region13: #{_lambda_.23} parent=0 // pred_fallthru
    _
  // Predicated region
  $region14: #{_lambda_.23} parent=0 // pred_check
    _
  $region15: #{_lambda_.23} parent=0 // pred_check_branch
    %17 = sbr.rel (0) target = $region17
  $region16: #{_lambda_.23} parent=0 // pred_region
    _
  $region17: #{_lambda_.23} parent=0 // pred_fallthru
    _
  // Predicated region
  $region18: #{_lambda_.23} parent=0 // pred_check
    _
  $region19: #{_lambda_.23} parent=0 // pred_check_branch
    %19 = sbr.rel (0) target = $region21
  $region20: #{_lambda_.23} parent=0 // pred_region
    _
  $region21: #{_lambda_.23} parent=0 // pred_fallthru
    _
  %p21 = scmp.eq.s32.totalorder 0, 0
  // Predicated region
  $region22: #{_lambda_.23} parent=0 // pred_check
    %p22 = pneg %p21
  $region23: #{_lambda_.23} parent=0 // pred_check_branch
    %24 = sbr.rel (%p22) target = $region25
  $region24: #{_lambda_.23} parent=0 // pred_region
    %vm25 = vcmask 261120
    %26 = vst.msk [vmem:[#allocation2] sm:$0xff] %vm25, 0.0
    %27 = vst.msk [vmem:[#allocation2 + $0x8] sm:$0xff] %vm25, 0.0
  $region25: #{_lambda_.23} parent=0 // pred_fallthru
    _
  %v28 = vld [vmem:[%s0] sm:$0xff]
  %v29 = vld [vmem:[%s0 + $0x8] sm:$0xff]
  %vm30 = vcmask 261120
  %v31 = vsel %vm30, %v28, 0.0
  %32 = vadd.xlane.f32.xlu0 %v31
  %v33 = vpop.xlane.xlu0 %32
  %v34 = vsel %vm30, %v29, 0.0
  %35 = vadd.xlane.f32.xlu0 %v34
  %v36 = vpop.xlane.xlu0 %35
  %v37 = vrcp.pop 32.0
  %v38 = vmul.f32 32.0, %v37
  %v39 = vsub.f32 1.0, %v38
  %v40 = vmul.f32 %v37, %v39
  %v41 = vadd.f32 %v37, %v40
  %vm42 = vweird.f32 %v37
  %v43 = vsel %vm42, %v37, %v41
  %v44 = vmul.f32 %v33, %v43
  %v45 = vmul.f32 %v36, %v43
  %v46 = vsub.f32 %v28, %v44
  %v47 = vsub.f32 %v29, %v45
  %v48 = vmul.f32 %v46, %v46
  %v49 = vmul.f32 %v47, %v47
  %v50 = vsel %vm30, %v48, 0.0
  %51 = vadd.xlane.f32.xlu0 %v50
  %v52 = vpop.xlane.xlu0 %51
  %v53 = vsel %vm30, %v49, 0.0
  %54 = vadd.xlane.f32.xlu0 %v53
  %v55 = vpop.xlane.xlu0 %54
  %v56 = vmul.f32 %v52, %v43
  %v57 = vmul.f32 %v55, %v43
  %v58 = vadd.f32 %v56, 1e-06
  %v59 = vadd.f32 %v57, 1e-06
  %v60 = vrsqrt.pop %v58
  %v61 = vmul.f32 %v60, %v58
  %v62 = vmul.f32 %v61, %v60
  %v63 = vmul.f32 0.5, %v62
  %v64 = vsub.f32 1.5, %v63
  %v65 = vmul.f32 %v60, %v64
  %vm66 = vweird.f32 %v58
  %vm67 = vweird.f32 %v60
  %vm68 = vmor %vm66, %vm67
  %v69 = vsel %vm68, %v60, %v65
  %v70 = vrsqrt.pop %v59
  %v71 = vmul.f32 %v70, %v59
  %v72 = vmul.f32 %v71, %v70
  %v73 = vmul.f32 0.5, %v72
  %v74 = vsub.f32 1.5, %v73
  %v75 = vmul.f32 %v70, %v74
  %vm76 = vweird.f32 %v59
  %vm77 = vweird.f32 %v70
  %vm78 = vmor %vm76, %vm77
  %v79 = vsel %vm78, %v70, %v75
  %v80 = vmul.f32 %v46, %v69
  %v81 = vmul.f32 %v47, %v79
  %v82 = vld [vmem:[%s3] sm:$0x1]
  %v84 = vperm.slane %v82, 0
  %v86 = vmul.f32 %v80, %v84
  %v87 = vmul.f32 %v81, %v84
  %v88 = vld [vmem:[%s4] sm:$0x1]
  %v90 = vperm.slane %v88, 0
  %v92 = vadd.f32 %v86, %v90
  %v93 = vadd.f32 %v87, %v90
  %v94 = vpack.c.bf16 %v93, %v92
  %v95 = vld [vmem:[#allocation2] sm:$0xff]
  %v96 = vld [vmem:[#allocation2 + $0x8] sm:$0xff]
  %v97 = vld [vmem:[%s1] sm:$0xf]
  %v98 = vld [vmem:[%s1 + $0x4] sm:$0xf]
  %v99 = vld [vmem:[%s1 + $0x8] sm:$0xf]
  %v100 = vld [vmem:[%s1 + $0xc] sm:$0xf]
  %v105 = vunpack.c.l.b16 %v97
  %v106 = vunpack.c.l.b16 %v98
  %v107 = vunpack.c.l.b16 %v99
  %v108 = vunpack.c.l.b16 %v100
  %v109 = vpack.c.b16 %v106, %v105
  %v110 = vpack.c.b16 %v108, %v107
  %v114 = vsel %vm30, %v94, 0
  %116 = vmatpush.bf16.msra.mxu0 0
  %117 = vmatpush.bf16.msra.mxu0 0
  %118 = vmatpush.bf16.msra.mxu0 0
  %119 = vmatpush.bf16.msra.mxu0 0
  %120 = vmatpush.bf16.msra.mxu0 0
  %121 = vmatpush.bf16.msra.mxu0 0
  %122 = vmatpush.bf16.msra.mxu0 %v110
  %123 = vmatpush.bf16.msra.mxu0 %v109
  %124 = vmatmul.bf16.gmra.mxu0 %v114
  %v125 = vpop.f32.mrf.mxu0
  %v126 = vadd.f32 0.0, %v125
  %v127 = vpop.f32.mrf.mxu0
  %v128 = vadd.f32 0.0, %v127
  %129 = vdwg.mxu0
  %v130 = vadd.f32 %v95, %v126
  %v131 = vadd.f32 %v96, %v128
  %132 = vst.msk [vmem:[#allocation2] sm:$0xff] %vm30, %v130
  %133 = vst.msk [vmem:[#allocation2 + $0x8] sm:$0xff] %vm30, %v131
  // Predicated region
  $region26: #{_lambda_.23} parent=0 // pred_check
    %p134 = pneg %p21
  $region27: #{_lambda_.23} parent=0 // pred_check_branch
    %136 = sbr.rel (%p134) target = $region29
  $region28: #{_lambda_.23} parent=0 // pred_region
    %v137 = vld [vmem:[#allocation2] sm:$0xff]
    %v138 = vld [vmem:[#allocation2 + $0x8] sm:$0xff]
    %v139 = vld [vmem:[%s2] sm:$0x1]
    %v141 = vperm.slane %v139, 0
    %v143 = vadd.f32 %v137, %v141
    %v144 = vadd.f32 %v138, %v141
    %v145 = vpack.c.bf16 %v143, %v143
    %v146 = vpack.c.bf16 %v144, %v144
    %vm147 = vcmask 257024
    %148 = vst.msk [vmem:[%s5] sm:$0xf] %vm147, %v145
    %149 = vst.msk [vmem:[%s5 + $0x4] sm:$0xf] %vm147, %v146
  $region29: #{_lambda_.23} parent=0 // pred_fallthru
    _
  // Predicated region
  $region30: #{_lambda_.23} parent=0 // pred_check
    _
  $region31: #{_lambda_.23} parent=0 // pred_check_branch
    %151 = sbr.rel (0) target = $region33
  $region32: #{_lambda_.23} parent=0 // pred_region
    _
  $region33: #{_lambda_.23} parent=0 // pred_fallthru
    _
  // Predicated region
  $region34: #{_lambda_.23} parent=0 // pred_check
    _
  $region35: #{_lambda_.23} parent=0 // pred_check_branch
    %153 = sbr.rel (0) target = $region37
  $region36: #{_lambda_.23} parent=0 // pred_region
    _
  $region37: #{_lambda_.23} parent=0 // pred_fallthru
    _

// kernel: _lambda_.25
$region0: #{_lambda_.25}
  #allocation0 [shape = 'u32[]', space=smem, size = 0x4, offset = 0x4, fixed_abs, tag = 'smem constant byte address 0x4 - core index']
  #allocation1 [shape = 'u32[72,128]{1,0:T(1,128)}', space=vmem, size = 0x9000, scoped, tag = 'internal scratch']
  #allocation2 [shape = 'f32[8,1]{1,0:T(8,128)}', space=vmem, size = 0x1000, scoped, tag = 'scratch operand']
  #allocation3 [shape = 'f32[8,1]{1,0:T(8,128)}', space=vmem, size = 0x1000, scoped, tag = 'scratch operand']
  #allocation4 [shape = 'f32[8,8]{1,0:T(8,128)}', space=vmem, size = 0x1000, scoped, tag = 'scratch operand']
  %s0 = inlined_call_operand.vmem [shape: bf16[8,8,8], index: 0, kind: input, shape index: {}]
  %s1 = inlined_call_operand.vmem [shape: bf16[8,8,8], index: 1, kind: input, shape index: {}]
  %s2 = inlined_call_operand.vmem [shape: bf16[8,8,8], index: 2, kind: input, shape index: {}]
  %s3 = inlined_call_operand.vmem [shape: bf16[8,8,8], index: 3, kind: output, shape index: {}]
  %s4 = sld [smem:[#allocation0]]
  $region53: #{_lambda_.25} parent=0
    _
  %s6 = ssub.s32 1, %s4
  %s7 = scalar_select 0, %s6, %s4
  loop: start=0, step=1, limit=10
  $region2: #{_lambda_.25} parent=0 // loop_pre_header
    _
  $region3: #{_lambda_.25} parent=0 // loop_header
    %s9 = sphi 0, %s13
    %p10 = scmp.ge.s32.totalorder %s9, 10
    %s16 = sphi 0, %s35
    %s17 = sphi 0, %s31
    %s18 = sphi 0, %s27
    %s19 = sphi 0, %s16
    %s20 = sphi 0, %s17
    %s21 = sphi 0, %s18
    %s22 = sphi 0, %s19
    %s23 = sphi 0, %s20
    %s24 = sphi 0, %s21
    %s40 = sphi 0, %s42
    %s43 = sphi 0, %s40
    %s44 = sphi 0, %s43
    %s60 = sphi 0, %s44
    %s68 = sphi 0, %s70
    %s71 = sphi 0, %s68
    %s72 = sphi 0, %s71
    %s88 = sphi 0, %s72
    %s96 = sphi 0, %s98
    %s99 = sphi 0, %s96
    %s100 = sphi 0, %s99
    %s116 = sphi 0, %s100
    %s124 = sphi 0, %s126
    %s127 = sphi 0, %s124
    %s128 = sphi 0, %s127
    %s144 = sphi 0, %s128
  $region4: #{_lambda_.25} parent=0 // loop_header_branch
    %12 = sbr.rel (%p10) target = $region8
  $region5: #{_lambda_.25} parent=0 // loop_body
    %s14 = ssub.s32 %s9, 1
    %s15 = ssub.s32 %s9, 2
    %s25 = sadd.s32 1, %s18
    %p26 = scmp.ge.s32.totalorder %s25, 1
    %s27 = scalar_select %p26, 0, %s25
    %s28 = sadd.s32 1, %s17
    %s29 = scalar_select %p26, %s28, %s17
    %p30 = scmp.ge.s32.totalorder %s29, 1
    %s31 = scalar_select %p30, 0, %s29
    %s32 = sadd.s32 1, %s16
    %s33 = scalar_select %p30, %s32, %s16
    %p34 = scmp.ge.s32.totalorder %s33, 8
    %s35 = scalar_select %p34, 0, %s33
    %s36 = ssub.s32 %s16, %s35
    %s37 = ssub.s32 %s17, %s31
    %s38 = sor.u32 %s36, %s37
    %p39 = scmp.eq.s32.totalorder %s38, 0
    %s41 = sadd.s32 %s40, 1
    %s42 = scalar_select %p39, %s40, %s41
    %p45 = pneg %p39
    %p46 = scmp.eq.s32.totalorder %s9, 7
    %p47 = por %p45, %p46
    %p48 = scmp.ne.s32.totalorder %s40, %s43
    %p49 = scmp.eq.s32.totalorder %s9, 0
    %p50 = por %p48, %p49
    %p51 = scmp.ne.s32.totalorder %s40, %s43
    %p52 = scmp.eq.s32.totalorder %s14, 7
    %p53 = por %p51, %p52
    %p54 = scmp.ne.s32.totalorder %s43, %s44
    %p55 = scmp.eq.s32.totalorder %s14, 0
    %p56 = por %p54, %p55
    %p57 = scmp.ne.s32.totalorder %s43, %s44
    %p58 = scmp.eq.s32.totalorder %s15, 7
    %p59 = por %p57, %p58
    %p61 = scmp.ne.s32.totalorder %s44, %s60
    %p62 = scmp.eq.s32.totalorder %s15, 0
    %p63 = por %p61, %p62
    %s64 = ssub.s32 %s16, %s35
    %s65 = ssub.s32 %s18, %s27
    %s66 = sor.u32 %s64, %s65
    %p67 = scmp.eq.s32.totalorder %s66, 0
    %s69 = sadd.s32 %s68, 1
    %s70 = scalar_select %p67, %s68, %s69
    %p73 = pneg %p67
    %p74 = scmp.eq.s32.totalorder %s9, 7
    %p75 = por %p73, %p74
    %p76 = scmp.ne.s32.totalorder %s68, %s71
    %p77 = scmp.eq.s32.totalorder %s9, 0
    %p78 = por %p76, %p77
    %p79 = scmp.ne.s32.totalorder %s68, %s71
    %p80 = scmp.eq.s32.totalorder %s14, 7
    %p81 = por %p79, %p80
    %p82 = scmp.ne.s32.totalorder %s71, %s72
    %p83 = scmp.eq.s32.totalorder %s14, 0
    %p84 = por %p82, %p83
    %p85 = scmp.ne.s32.totalorder %s71, %s72
    %p86 = scmp.eq.s32.totalorder %s15, 7
    %p87 = por %p85, %p86
    %p89 = scmp.ne.s32.totalorder %s72, %s88
    %p90 = scmp.eq.s32.totalorder %s15, 0
    %p91 = por %p89, %p90
    %s92 = ssub.s32 %s16, %s35
    %s93 = ssub.s32 %s18, %s27
    %s94 = sor.u32 %s92, %s93
    %p95 = scmp.eq.s32.totalorder %s94, 0
    %s97 = sadd.s32 %s96, 1
    %s98 = scalar_select %p95, %s96, %s97
    %p101 = pneg %p95
    %p102 = scmp.eq.s32.totalorder %s9, 7
    %p103 = por %p101, %p102
    %p104 = scmp.ne.s32.totalorder %s96, %s99
    %p105 = scmp.eq.s32.totalorder %s9, 0
    %p106 = por %p104, %p105
    %p107 = scmp.ne.s32.totalorder %s96, %s99
    %p108 = scmp.eq.s32.totalorder %s14, 7
    %p109 = por %p107, %p108
    %p110 = scmp.ne.s32.totalorder %s99, %s100
    %p111 = scmp.eq.s32.totalorder %s14, 0
    %p112 = por %p110, %p111
    %p113 = scmp.ne.s32.totalorder %s99, %s100
    %p114 = scmp.eq.s32.totalorder %s15, 7
    %p115 = por %p113, %p114
    %p117 = scmp.ne.s32.totalorder %s100, %s116
    %p118 = scmp.eq.s32.totalorder %s15, 0
    %p119 = por %p117, %p118
    %s120 = ssub.s32 %s16, %s35
    %s121 = ssub.s32 %s17, %s31
    %s122 = sor.u32 %s120, %s121
    %p123 = scmp.eq.s32.totalorder %s122, 0
    %s125 = sadd.s32 %s124, 1
    %s126 = scalar_select %p123, %s124, %s125
    %p129 = pneg %p123
    %p130 = scmp.eq.s32.totalorder %s9, 7
    %p131 = por %p129, %p130
    %p132 = scmp.ne.s32.totalorder %s124, %s127
    %p133 = scmp.eq.s32.totalorder %s9, 0
    %p134 = por %p132, %p133
    %p135 = scmp.ne.s32.totalorder %s124, %s127
    %p136 = scmp.eq.s32.totalorder %s14, 7
    %p137 = por %p135, %p136
    %p138 = scmp.ne.s32.totalorder %s127, %s128
    %p139 = scmp.eq.s32.totalorder %s14, 0
    %p140 = por %p138, %p139
    %p141 = scmp.ne.s32.totalorder %s127, %s128
    %p142 = scmp.eq.s32.totalorder %s15, 7
    %p143 = por %p141, %p142
    %p145 = scmp.ne.s32.totalorder %s128, %s144
    %p146 = scmp.eq.s32.totalorder %s15, 0
    %p147 = por %p145, %p146
    %p148 = scmp.le.s32.totalorder 1, %s9
    %p149 = scmp.lt.s32.totalorder %s9, 9
    %p150 = pnand %p148, %p149
    %p151 = pneg %p150
    // Predicated region
    $region9: #{_lambda_.25} parent=5 // pred_check
      _
    $region10: #{_lambda_.25} parent=5 // pred_check_branch
      %153 = sbr.rel (%p150) target = $region12
    $region11: #{_lambda_.25} parent=5 // pred_region
      %s154 = ssub.s32 %s9, 1
    $region12: #{_lambda_.25} parent=5 // pred_fallthru
      _
    %p155 = scmp.lt.s32.totalorder %s9, 8
    // Predicated region
    $region13: #{_lambda_.25} parent=5 // pred_check
      %p156 = pneg %p155
    $region14: #{_lambda_.25} parent=5 // pred_check_branch
      %158 = sbr.rel (%p156) target = $region16
    $region15: #{_lambda_.25} parent=5 // pred_region
      // Predicated region
      $region17: #{_lambda_.25} parent=15 // pred_check
        %p159 = pneg %p50
      $region18: #{_lambda_.25} parent=15 // pred_check_branch
        %161 = sbr.rel (%p159) target = $region20
      $region19: #{_lambda_.25} parent=15 // pred_region
        %p162 = scmp.lt.s32.totalorder %s16, 7
        %s163 = scalar_select %p162, %s16, 7
        %p164 = scmp.lt.s32.totalorder %s17, 0
        %s165 = scalar_select %p164, %s17, 0
        %s166 = sadd.s32 %s165, %s163
        %s167 = smul.addr %s166, 4
        %s168 = scalar_lea.vmem %s0, %s167
      $region20: #{_lambda_.25} parent=15 // pred_fallthru
        _
      // Predicated region
      $region21: #{_lambda_.25} parent=15 // pred_check
        %p169 = pneg %p78
      $region22: #{_lambda_.25} parent=15 // pred_check_branch
        %171 = sbr.rel (%p169) target = $region24
      $region23: #{_lambda_.25} parent=15 // pred_region
        %p172 = scmp.lt.s32.totalorder %s16, 7
        %s173 = scalar_select %p172, %s16, 7
        %p174 = scmp.lt.s32.totalorder %s18, 0
        %s175 = scalar_select %p174, %s18, 0
        %s176 = sadd.s32 %s175, %s173
        %s177 = smul.addr %s176, 4
        %s178 = scalar_lea.vmem %s1, %s177
      $region24: #{_lambda_.25} parent=15 // pred_fallthru
        _
      // Predicated region
      $region25: #{_lambda_.25} parent=15 // pred_check
        %p179 = pneg %p106
      $region26: #{_lambda_.25} parent=15 // pred_check_branch
        %181 = sbr.rel (%p179) target = $region28
      $region27: #{_lambda_.25} parent=15 // pred_region
        %p182 = scmp.lt.s32.totalorder %s16, 7
        %s183 = scalar_select %p182, %s16, 7
        %p184 = scmp.lt.s32.totalorder %s18, 0
        %s185 = scalar_select %p184, %s18, 0
        %s186 = sadd.s32 %s185, %s183
        %s187 = smul.addr %s186, 4
        %s188 = scalar_lea.vmem %s2, %s187
      $region28: #{_lambda_.25} parent=15 // pred_fallthru
        _
    $region16: #{_lambda_.25} parent=5 // pred_fallthru
      _
    %p189 = scmp.le.s32.totalorder 1, %s9
    %p190 = scmp.lt.s32.totalorder %s9, 9
    %p191 = pnand %p189, %p190
    %p192 = pneg %p191
    // Predicated region
    $region29: #{_lambda_.25} parent=5 // pred_check
      _
    $region30: #{_lambda_.25} parent=5 // pred_check_branch
      %194 = sbr.rel (%p191) target = $region32
    $region31: #{_lambda_.25} parent=5 // pred_region
      %s195 = ssub.s32 %s9, 1
      %p196 = scmp.lt.s32.totalorder %s19, 7
      %s197 = scalar_select %p196, %s19, 7
      %p198 = scmp.lt.s32.totalorder %s20, 0
      %s199 = scalar_select %p198, %s20, 0
      %s200 = sadd.s32 %s199, %s197
      %s201 = smul.addr %s200, 4
      %s202 = scalar_lea.vmem %s0, %s201
      %p203 = pneg %p56
      %p204 = pneg %p53
      %p205 = scmp.lt.s32.totalorder %s19, 7
      %s206 = scalar_select %p205, %s19, 7
      %p207 = scmp.lt.s32.totalorder %s21, 0
      %s208 = scalar_select %p207, %s21, 0
      %s209 = sadd.s32 %s208, %s206
      %s210 = smul.addr %s209, 4
      %s211 = scalar_lea.vmem %s1, %s210
      %p212 = pneg %p84
      %p213 = pneg %p81
      %p214 = scmp.lt.s32.totalorder %s19, 7
      %s215 = scalar_select %p214, %s19, 7
      %p216 = scmp.lt.s32.totalorder %s21, 0
      %s217 = scalar_select %p216, %s21, 0
      %s218 = sadd.s32 %s217, %s215
      %s219 = smul.addr %s218, 4
      %s220 = scalar_lea.vmem %s2, %s219
      %p221 = pneg %p112
      %p222 = pneg %p109
      %p223 = pneg %p140
      %p224 = pneg %p137
      %p225 = scmp.lt.s32.totalorder %s19, 7
      %s226 = scalar_select %p225, %s19, 7
      %p227 = scmp.lt.s32.totalorder %s20, 0
      %s228 = scalar_select %p227, %s20, 0
      %s229 = sadd.s32 %s228, %s226
      %s230 = smul.addr %s229, 4
      %s231 = scalar_lea.vmem %s3, %s230
      %p232 = scmp.lt.s32.totalorder %s19, 7
      %s233 = scalar_select %p232, %s19, 7
      %p234 = scmp.lt.s32.totalorder %s20, 0
      %s235 = scalar_select %p234, %s20, 0
      %s236 = sadd.s32 %s235, %s233
      %s237 = smul.addr %s236, 4
      %s238 = scalar_lea.vmem %s0, %s237
      %p239 = scmp.lt.s32.totalorder %s19, 7
      %s240 = scalar_select %p239, %s19, 7
      %p241 = scmp.lt.s32.totalorder %s21, 0
      %s242 = scalar_select %p241, %s21, 0
      %s243 = sadd.s32 %s242, %s240
      %s244 = smul.addr %s243, 4
      %s245 = scalar_lea.vmem %s1, %s244
      %p246 = scmp.lt.s32.totalorder %s19, 7
      %s247 = scalar_select %p246, %s19, 7
      %p248 = scmp.lt.s32.totalorder %s21, 0
      %s249 = scalar_select %p248, %s21, 0
      %s250 = sadd.s32 %s249, %s247
      %s251 = smul.addr %s250, 4
      %s252 = scalar_lea.vmem %s2, %s251
      %p253 = scmp.lt.s32.totalorder %s19, 7
      %s254 = scalar_select %p253, %s19, 7
      %p255 = scmp.lt.s32.totalorder %s20, 0
      %s256 = scalar_select %p255, %s20, 0
      %s257 = sadd.s32 %s256, %s254
      %s258 = smul.addr %s257, 4
      %s259 = scalar_lea.vmem %s3, %s258
      %p261 = scmp.eq.s32.totalorder %s21, 0
      // Predicated region
      $region33: #{_lambda_.25} parent=31 // pred_check
        %p262 = pneg %p261
      $region34: #{_lambda_.25} parent=31 // pred_check_branch
        %264 = sbr.rel (%p262) target = $region36
      $region35: #{_lambda_.25} parent=31 // pred_region
        %vm265 = vcmask 7168
        %266 = vst.msk [vmem:[#allocation2] sm:$0xff] %vm265, -inf
        %267 = vst.msk [vmem:[#allocation3] sm:$0xff] %vm265, 0.0
        %vm268 = vcmask 64512
        %269 = vst.msk [vmem:[#allocation4] sm:$0xff] %vm268, 0.0
      $region36: #{_lambda_.25} parent=31 // pred_fallthru
        _
      %v270 = vld [vmem:[%s238] sm:$0xf]
      %v271 = vld [vmem:[%s245] sm:$0xf]
      %vm272 = vcmask 64512
      %v274 = vsel %vm272, %v270, 0
      %v277 = vsel %vm272, %v271, 0
      %279 = vmatpush.bf16.xpose.msra.mxu0 0
      %280 = vmatpush.bf16.xpose.msra.mxu0 0
      %281 = vmatpush.bf16.xpose.msra.mxu0 0
      %282 = vmatpush.bf16.xpose.msra.mxu0 0
      %283 = vmatpush.bf16.xpose.msra.mxu0 0
      %284 = vmatpush.bf16.xpose.msra.mxu0 0
      %285 = vmatpush.bf16.xpose.msra.mxu0 0
      %286 = vmatpush.bf16.xpose.msra.mxu0 %v277
      %287 = vmatmul.bf16.gmra.mxu0 %v274
      %v288 = vpop.f32.mrf.mxu0
      %v289 = vadd.f32 0.0, %v288
      %v290 = vpop.f32.mrf.mxu0
      %291 = vdwg.mxu0
      %v292 = vmul.f32 %v289, 0.35355338
      %v293 = vld [vmem:[#allocation2] sm:$0xff]
      %v294 = vsel %vm272, %v292, -inf
      %295 = vmax.xlane.f32.xlu0 %v294
      %v296 = vpop.xlane.xlu0 %295
      %v297 = vmax.f32 %v293, %v296
      %v298 = vsub.f32 %v293, %v297
      %v299 = vmul.f32 %v298, 1.442695
      %v300 = vpow.pop %v299
      %302 = vset.pattern.permute.xlu0 0
      %303 = vperm.xlu0 %302, %v297
      %v304 = vpop.permute.xlu0 %303
      %v306 = vsub.f32 %v292, %v304
      %v307 = vmul.f32 %v306, 1.442695
      %v308 = vpow.pop %v307
      %v309 = vld [vmem:[#allocation3] sm:$0xff]
      %v310 = vmul.f32 %v300, %v309
      %v311 = vsel %vm272, %v308, 0.0
      %312 = vadd.xlane.f32.xlu0 %v311
      %v313 = vpop.xlane.xlu0 %312
      %v314 = vadd.f32 %v310, %v313
      %vm315 = vcmask 7168
      %316 = vst.msk [vmem:[#allocation3] sm:$0xff] %vm315, %v314
      %v317 = vld [vmem:[#allocation4] sm:$0xff]
      %319 = vset.pattern.permute.xlu0 0
      %320 = vperm.xlu0 %319, %v300
      %v321 = vpop.permute.xlu0 %320
      %v323 = vmul.f32 %v321, %v317
      %v324 = vpack.c.bf16 %v308, %v308
      %v325 = vld [vmem:[%s252] sm:$0xf]
      %v327 = vsel %vm272, %v324, 0
      %vm329 = vcmask 1043456
      %v331 = vsel %vm329, %v325, 0
      %333 = vmatpush.bf16.msra.mxu0 0
      %334 = vmatpush.bf16.msra.mxu0 0
      %335 = vmatpush.bf16.msra.mxu0 0
      %336 = vmatpush.bf16.msra.mxu0 0
      %337 = vmatpush.bf16.msra.mxu0 0
      %338 = vmatpush.bf16.msra.mxu0 0
      %339 = vmatpush.bf16.msra.mxu0 0
      %340 = vmatpush.bf16.msra.mxu0 %v331
      %341 = vmatmul.bf16.gmra.mxu0 %v327
      %v342 = vpop.f32.mrf.mxu0
      %v343 = vadd.f32 0.0, %v342
      %v344 = vpop.f32.mrf.mxu0
      %345 = vdwg.mxu0
      %v346 = vadd.f32 %v323, %v343
      %347 = vst.msk [vmem:[#allocation4] sm:$0xff] %vm272, %v346
      %348 = vst.msk [vmem:[#allocation2] sm:$0xff] %vm315, %v297
      // Predicated region
      $region37: #{_lambda_.25} parent=31 // pred_check
        %p349 = pneg %p261
      $region38: #{_lambda_.25} parent=31 // pred_check_branch
        %351 = sbr.rel (%p349) target = $region40
      $region39: #{_lambda_.25} parent=31 // pred_region
        %v352 = vld [vmem:[#allocation4] sm:$0xff]
        %v353 = vld [vmem:[#allocation3] sm:$0xff]
        %v354 = vrcp.pop %v353
        %356 = vset.pattern.permute.xlu0 0
        %357 = vperm.xlu0 %356, %v354
        %v358 = vpop.permute.xlu0 %357
        %v360 = vmul.f32 %v352, %v358
        %v361 = vpack.c.bf16 %v360, %v360
        %vm362 = vcmask 60416
        %363 = vst.msk [vmem:[%s259] sm:$0xf] %vm362, %v361
      $region40: #{_lambda_.25} parent=31 // pred_fallthru
        _
      %p364 = scmp.lt.s32.totalorder %s19, 7
      %s365 = scalar_select %p364, %s19, 7
      %p366 = scmp.lt.s32.totalorder %s20, 0
      %s367 = scalar_select %p366, %s20, 0
      %s368 = sadd.s32 %s367, %s365
      %s369 = smul.addr %s368, 4
      %s370 = scalar_lea.vmem %s3, %s369
      // Predicated region
      $region41: #{_lambda_.25} parent=31 // pred_check
        %p371 = pneg %p137
      $region42: #{_lambda_.25} parent=31 // pred_check_branch
        %373 = sbr.rel (%p371) target = $region44
      $region43: #{_lambda_.25} parent=31 // pred_region
        _
      $region44: #{_lambda_.25} parent=31 // pred_fallthru
        _
    $region32: #{_lambda_.25} parent=5 // pred_fallthru
      _
    %p374 = scmp.le.s32.totalorder 2, %s9
    // Predicated region
    $region45: #{_lambda_.25} parent=5 // pred_check
      %p375 = pneg %p374
    $region46: #{_lambda_.25} parent=5 // pred_check_branch
      %377 = sbr.rel (%p375) target = $region48
    $region47: #{_lambda_.25} parent=5 // pred_region
      %s378 = ssub.s32 %s9, 2
      // Predicated region
      $region49: #{_lambda_.25} parent=47 // pred_check
        %p379 = pneg %p143
      $region50: #{_lambda_.25} parent=47 // pred_check_branch
        %381 = sbr.rel (%p379) target = $region52
      $region51: #{_lambda_.25} parent=47 // pred_region
        %p382 = scmp.lt.s32.totalorder %s22, 7
        %s383 = scalar_select %p382, %s22, 7
        %p384 = scmp.lt.s32.totalorder %s23, 0
        %s385 = scalar_select %p384, %s23, 0
        %s386 = sadd.s32 %s385, %s383
        %s387 = smul.addr %s386, 4
        %s388 = scalar_lea.vmem %s3, %s387
      $region52: #{_lambda_.25} parent=47 // pred_fallthru
        _
    $region48: #{_lambda_.25} parent=5 // pred_fallthru
      _
  $region6: #{_lambda_.25} parent=0 // loop_footer
    %s13 = sadd.s32 1, %s9
  $region7: #{_lambda_.25} parent=0 // loop_footer_branch
    %8 = sbr.rel target = $region3
  $region8: #{_lambda_.25} parent=0 // loop_exit
    _

// kernel: _lambda_.26
$region0: #{_lambda_.26}
  #allocation0 [shape = 'u32[]', space=smem, size = 0x4, offset = 0x4, fixed_abs, tag = 'smem constant byte address 0x4 - core index']
  #allocation1 [shape = 'u32[72,128]{1,0:T(1,128)}', space=vmem, size = 0x9000, scoped, tag = 'internal scratch']
  #allocation2 [shape = 'f32[16,32]{1,0:T(8,128)}', space=vmem, size = 0x2000, scoped, tag = 'scratch operand']
  %s0 = inlined_call_operand.vmem [shape: bf16[16,32], index: 0, kind: input, shape index: {}]
  %s1 = inlined_call_operand.vmem [shape: bf16[32,32], index: 1, kind: input, shape index: {}]
  %s2 = inlined_call_operand.vmem [shape: f32[1,32], index: 2, kind: input, shape index: {}]
  %s3 = inlined_call_operand.vmem [shape: f32[16,32], index: 3, kind: input, shape index: {}]
  %s4 = inlined_call_operand.vmem [shape: bf16[16,32], index: 4, kind: output, shape index: {}]
  %s5 = sld [smem:[#allocation0]]
  $region34: #{_lambda_.26} parent=0
    _
  %s7 = ssub.s32 1, %s5
  %s8 = scalar_select 0, %s7, %s5
  // Predicated region
  $region2: #{_lambda_.26} parent=0 // pred_check
    _
  $region3: #{_lambda_.26} parent=0 // pred_check_branch
    %10 = sbr.rel (0) target = $region5
  $region4: #{_lambda_.26} parent=0 // pred_region
    _
  $region5: #{_lambda_.26} parent=0 // pred_fallthru
    _
  // Predicated region
  $region6: #{_lambda_.26} parent=0 // pred_check
    _
  $region7: #{_lambda_.26} parent=0 // pred_check_branch
    %12 = sbr.rel (0) target = $region9
  $region8: #{_lambda_.26} parent=0 // pred_region
    _
  $region9: #{_lambda_.26} parent=0 // pred_fallthru
    _
  // Predicated region
  $region10: #{_lambda_.26} parent=0 // pred_check
    _
  $region11: #{_lambda_.26} parent=0 // pred_check_branch
    %14 = sbr.rel (0) target = $region13
  $region12: #{_lambda_.26} parent=0 // pred_region
    _
  $region13: #{_lambda_.26} parent=0 // pred_fallthru
    _
  // Predicated region
  $region14: #{_lambda_.26} parent=0 // pred_check
    _
  $region15: #{_lambda_.26} parent=0 // pred_check_branch
    %16 = sbr.rel (0) target = $region17
  $region16: #{_lambda_.26} parent=0 // pred_region
    _
  $region17: #{_lambda_.26} parent=0 // pred_fallthru
    _
  %p18 = scmp.eq.s32.totalorder 0, 0
  // Predicated region
  $region18: #{_lambda_.26} parent=0 // pred_check
    %p19 = pneg %p18
  $region19: #{_lambda_.26} parent=0 // pred_check_branch
    %21 = sbr.rel (%p19) target = $region21
  $region20: #{_lambda_.26} parent=0 // pred_region
    %vm22 = vcmask 261120
    %23 = vst.msk [vmem:[#allocation2] sm:$0xff] %vm22, 0.0
    %24 = vst.msk [vmem:[#allocation2 + $0x8] sm:$0xff] %vm22, 0.0
  $region21: #{_lambda_.26} parent=0 // pred_fallthru
    _
  %v25 = vld [vmem:[%s0] sm:$0xf]
  %v26 = vld [vmem:[%s0 + $0x4] sm:$0xf]
  %v27 = vld [vmem:[#allocation2] sm:$0xff]
  %v28 = vld [vmem:[#allocation2 + $0x8] sm:$0xff]
  %v29 = vld [vmem:[%s1] sm:$0xf]
  %v30 = vld [vmem:[%s1 + $0x4] sm:$0xf]
  %v31 = vld [vmem:[%s1 + $0x8] sm:$0xf]
  %v32 = vld [vmem:[%s1 + $0xc] sm:$0xf]
  %v35 = vunpack.c.l.b16 %v25
  %v36 = vunpack.c.l.b16 %v26
  %v37 = vpack.c.b16 %v36, %v35
  %v42 = vunpack.c.l.b16 %v29
  %v43 = vunpack.c.l.b16 %v30
  %v44 = vunpack.c.l.b16 %v31
  %v45 = vunpack.c.l.b16 %v32
  %v46 = vpack.c.b16 %v43, %v42
  %v47 = vpack.c.b16 %v45, %v44
  %vm50 = vcmask 261120
  %v52 = vsel %vm50, %v37, 0
  %54 = vmatpush.bf16.msra.mxu0 0
  %55 = vmatpush.bf16.msra.mxu0 0
  %56 = vmatpush.bf16.msra.mxu0 0
  %57 = vmatpush.bf16.msra.mxu0 0
  %58 = vmatpush.bf16.msra.mxu0 0
  %59 = vmatpush.bf16.msra.mxu0 0
  %60 = vmatpush.bf16.msra.mxu0 %v47
  %61 = vmatpush.bf16.msra.mxu0 %v46
  %62 = vmatmul.bf16.gmra.mxu0 %v52
  %v63 = vpop.f32.mrf.mxu0
  %v64 = vadd.f32 0.0, %v63
  %v65 = vpop.f32.mrf.mxu0
  %v66 = vadd.f32 0.0, %v65
  %67 = vdwg.mxu0
  %v68 = vadd.f32 %v27, %v64
  %v69 = vadd.f32 %v28, %v66
  %70 = vst.msk [vmem:[#allocation2] sm:$0xff] %vm50, %v68
  %71 = vst.msk [vmem:[#allocation2 + $0x8] sm:$0xff] %vm50, %v69
  // Predicated region
  $region22: #{_lambda_.26} parent=0 // pred_check
    %p72 = pneg %p18
  $region23: #{_lambda_.26} parent=0 // pred_check_branch
    %74 = sbr.rel (%p72) target = $region25
  $region24: #{_lambda_.26} parent=0 // pred_region
    %v75 = vld [vmem:[#allocation2] sm:$0xff]
    %v76 = vld [vmem:[#allocation2 + $0x8] sm:$0xff]
    %v77 = vld [vmem:[%s2] sm:$0x1]
    %v79 = vperm.slane %v77, 0
    %v81 = vadd.f32 %v75, %v79
    %v82 = vadd.f32 %v76, %v79
    %v83 = vld [vmem:[%s3] sm:$0xff]
    %v84 = vld [vmem:[%s3 + $0x8] sm:$0xff]
    %v85 = vadd.f32 %v81, %v83
    %v86 = vadd.f32 %v82, %v84
    %v87 = vpack.c.bf16 %v85, %v85
    %v88 = vpack.c.bf16 %v86, %v86
    %vm89 = vcmask 257024
    %90 = vst.msk [vmem:[%s4] sm:$0xf] %vm89, %v87
    %91 = vst.msk [vmem:[%s4 + $0x4] sm:$0xf] %vm89, %v88
  $region25: #{_lambda_.26} parent=0 // pred_fallthru
    _
  // Predicated region
  $region26: #{_lambda_.26} parent=0 // pred_check
    _
  $region27: #{_lambda_.26} parent=0 // pred_check_branch
    %93 = sbr.rel (0) target = $region29
  $region28: #{_lambda_.26} parent=0 // pred_region
    _
  $region29: #{_lambda_.26} parent=0 // pred_fallthru
    _
  // Predicated region
  $region30: #{_lambda_.26} parent=0 // pred_check
    _
  $region31: #{_lambda_.26} parent=0 // pred_check_branch
    %95 = sbr.rel (0) target = $region33
  $region32: #{_lambda_.26} parent=0 // pred_region
    _
  $region33: #{_lambda_.26} parent=0 // pred_fallthru
    _

// kernel: _lambda_.27
$region0: #{_lambda_.27}
  #allocation0 [shape = 'u32[]', space=smem, size = 0x4, offset = 0x4, fixed_abs, tag = 'smem constant byte address 0x4 - core index']
  #allocation1 [shape = 'u32[72,128]{1,0:T(1,128)}', space=vmem, size = 0x9000, scoped, tag = 'internal scratch']
  #allocation2 [shape = 'f32[16,96]{1,0:T(8,128)}', space=vmem, size = 0x2000, scoped, tag = 'scratch operand']
  %s0 = inlined_call_operand.vmem [shape: bf16[16,32], index: 0, kind: input, shape index: {}]
  %s1 = inlined_call_operand.vmem [shape: bf16[32,96], index: 1, kind: input, shape index: {}]
  %s2 = inlined_call_operand.vmem [shape: f32[1,96], index: 2, kind: input, shape index: {}]
  %s3 = inlined_call_operand.vmem [shape: bf16[16,96], index: 3, kind: output, shape index: {}]
  %s4 = sld [smem:[#allocation0]]
  $region30: #{_lambda_.27} parent=0
    _
  %s6 = ssub.s32 1, %s4
  %s7 = scalar_select 0, %s6, %s4
  // Predicated region
  $region2: #{_lambda_.27} parent=0 // pred_check
    _
  $region3: #{_lambda_.27} parent=0 // pred_check_branch
    %9 = sbr.rel (0) target = $region5
  $region4: #{_lambda_.27} parent=0 // pred_region
    _
  $region5: #{_lambda_.27} parent=0 // pred_fallthru
    _
  // Predicated region
  $region6: #{_lambda_.27} parent=0 // pred_check
    _
  $region7: #{_lambda_.27} parent=0 // pred_check_branch
    %11 = sbr.rel (0) target = $region9
  $region8: #{_lambda_.27} parent=0 // pred_region
    _
  $region9: #{_lambda_.27} parent=0 // pred_fallthru
    _
  // Predicated region
  $region10: #{_lambda_.27} parent=0 // pred_check
    _
  $region11: #{_lambda_.27} parent=0 // pred_check_branch
    %13 = sbr.rel (0) target = $region13
  $region12: #{_lambda_.27} parent=0 // pred_region
    _
  $region13: #{_lambda_.27} parent=0 // pred_fallthru
    _
  %p15 = scmp.eq.s32.totalorder 0, 0
  // Predicated region
  $region14: #{_lambda_.27} parent=0 // pred_check
    %p16 = pneg %p15
  $region15: #{_lambda_.27} parent=0 // pred_check_branch
    %18 = sbr.rel (%p16) target = $region17
  $region16: #{_lambda_.27} parent=0 // pred_region
    %vm19 = vcmask 785408
    %20 = vst.msk [vmem:[#allocation2] sm:$0xff] %vm19, 0.0
    %21 = vst.msk [vmem:[#allocation2 + $0x8] sm:$0xff] %vm19, 0.0
  $region17: #{_lambda_.27} parent=0 // pred_fallthru
    _
  %v22 = vld [vmem:[%s0] sm:$0xf]
  %v23 = vld [vmem:[%s0 + $0x4] sm:$0xf]
  %v24 = vld [vmem:[#allocation2] sm:$0xff]
  %v25 = vld [vmem:[#allocation2 + $0x8] sm:$0xff]
  %v26 = vld [vmem:[%s1] sm:$0xf]
  %v27 = vld [vmem:[%s1 + $0x4] sm:$0xf]
  %v28 = vld [vmem:[%s1 + $0x8] sm:$0xf]
  %v29 = vld [vmem:[%s1 + $0xc] sm:$0xf]
  %v32 = vunpack.c.l.b16 %v22
  %v33 = vunpack.c.l.b16 %v23
  %v34 = vpack.c.b16 %v33, %v32
  %v39 = vunpack.c.l.b16 %v26
  %v40 = vunpack.c.l.b16 %v27
  %v41 = vunpack.c.l.b16 %v28
  %v42 = vunpack.c.l.b16 %v29
  %v43 = vpack.c.b16 %v40, %v39
  %v44 = vpack.c.b16 %v42, %v41
  %vm47 = vcmask 261120
  %v49 = vsel %vm47, %v34, 0
  %51 = vmatpush.bf16.msra.mxu0 0
  %52 = vmatpush.bf16.msra.mxu0 0
  %53 = vmatpush.bf16.msra.mxu0 0
  %54 = vmatpush.bf16.msra.mxu0 0
  %55 = vmatpush.bf16.msra.mxu0 0
  %56 = vmatpush.bf16.msra.mxu0 0
  %57 = vmatpush.bf16.msra.mxu0 %v44
  %58 = vmatpush.bf16.msra.mxu0 %v43
  %59 = vmatmul.bf16.gmra.mxu0 %v49
  %v60 = vpop.f32.mrf.mxu0
  %v61 = vadd.f32 0.0, %v60
  %v62 = vpop.f32.mrf.mxu0
  %v63 = vadd.f32 0.0, %v62
  %64 = vdwg.mxu0
  %v65 = vadd.f32 %v24, %v61
  %v66 = vadd.f32 %v25, %v63
  %vm67 = vcmask 785408
  %68 = vst.msk [vmem:[#allocation2] sm:$0xff] %vm67, %v65
  %69 = vst.msk [vmem:[#allocation2 + $0x8] sm:$0xff] %vm67, %v66
  // Predicated region
  $region18: #{_lambda_.27} parent=0 // pred_check
    %p70 = pneg %p15
  $region19: #{_lambda_.27} parent=0 // pred_check_branch
    %72 = sbr.rel (%p70) target = $region21
  $region20: #{_lambda_.27} parent=0 // pred_region
    %v73 = vld [vmem:[#allocation2] sm:$0xff]
    %v74 = vld [vmem:[#allocation2 + $0x8] sm:$0xff]
    %v75 = vld [vmem:[%s2] sm:$0x1]
    %v77 = vperm.slane %v75, 0
    %v79 = vadd.f32 %v73, %v77
    %v80 = vadd.f32 %v74, %v77
    %v81 = vpack.c.bf16 %v79, %v79
    %v82 = vpack.c.bf16 %v80, %v80
    %vm83 = vcmask 781312
    %84 = vst.msk [vmem:[%s3] sm:$0xf] %vm83, %v81
    %85 = vst.msk [vmem:[%s3 + $0x4] sm:$0xf] %vm83, %v82
  $region21: #{_lambda_.27} parent=0 // pred_fallthru
    _
  // Predicated region
  $region22: #{_lambda_.27} parent=0 // pred_check
    _
  $region23: #{_lambda_.27} parent=0 // pred_check_branch
    %87 = sbr.rel (0) target = $region25
  $region24: #{_lambda_.27} parent=0 // pred_region
    _
  $region25: #{_lambda_.27} parent=0 // pred_fallthru
    _
  // Predicated region
  $region26: #{_lambda_.27} parent=0 // pred_check
    _
  $region27: #{_lambda_.27} parent=0 // pred_check_branch
    %89 = sbr.rel (0) target = $region29
  $region28: #{_lambda_.27} parent=0 // pred_region
    _
  $region29: #{_lambda_.27} parent=0 // pred_fallthru
    _

// kernel: _lambda_.28
$region0: #{_lambda_.28}
  #allocation0 [shape = 'u32[]', space=smem, size = 0x4, offset = 0x4, fixed_abs, tag = 'smem constant byte address 0x4 - core index']
  #allocation1 [shape = 'u32[72,128]{1,0:T(1,128)}', space=vmem, size = 0x9000, scoped, tag = 'internal scratch']
  #allocation2 [shape = 'f32[8,1]{1,0:T(8,128)}', space=vmem, size = 0x1000, scoped, tag = 'scratch operand']
  #allocation3 [shape = 'f32[8,1]{1,0:T(8,128)}', space=vmem, size = 0x1000, scoped, tag = 'scratch operand']
  #allocation4 [shape = 'f32[8,8]{1,0:T(8,128)}', space=vmem, size = 0x1000, scoped, tag = 'scratch operand']
  %s0 = inlined_call_operand.vmem [shape: bf16[8,8,8], index: 0, kind: input, shape index: {}]
  %s1 = inlined_call_operand.vmem [shape: bf16[8,8,8], index: 1, kind: input, shape index: {}]
  %s2 = inlined_call_operand.vmem [shape: bf16[8,8,8], index: 2, kind: input, shape index: {}]
  %s3 = inlined_call_operand.vmem [shape: bf16[8,8,8], index: 3, kind: output, shape index: {}]
  %s4 = sld [smem:[#allocation0]]
  $region57: #{_lambda_.28} parent=0
    _
  %s6 = ssub.s32 1, %s4
  %s7 = scalar_select 0, %s6, %s4
  loop: start=0, step=1, limit=10
  $region2: #{_lambda_.28} parent=0 // loop_pre_header
    _
  $region3: #{_lambda_.28} parent=0 // loop_header
    %s9 = sphi 0, %s13
    %p10 = scmp.ge.s32.totalorder %s9, 10
    %s16 = sphi 0, %s35
    %s17 = sphi 0, %s31
    %s18 = sphi 0, %s27
    %s19 = sphi 0, %s16
    %s20 = sphi 0, %s17
    %s21 = sphi 0, %s18
    %s22 = sphi 0, %s19
    %s23 = sphi 0, %s20
    %s24 = sphi 0, %s21
    %s40 = sphi 0, %s42
    %s43 = sphi 0, %s40
    %s44 = sphi 0, %s43
    %s60 = sphi 0, %s44
    %s68 = sphi 0, %s70
    %s71 = sphi 0, %s68
    %s72 = sphi 0, %s71
    %s88 = sphi 0, %s72
    %s96 = sphi 0, %s98
    %s99 = sphi 0, %s96
    %s100 = sphi 0, %s99
    %s116 = sphi 0, %s100
    %s124 = sphi 0, %s126
    %s127 = sphi 0, %s124
    %s128 = sphi 0, %s127
    %s144 = sphi 0, %s128
  $region4: #{_lambda_.28} parent=0 // loop_header_branch
    %12 = sbr.rel (%p10) target = $region8
  $region5: #{_lambda_.28} parent=0 // loop_body
    %s14 = ssub.s32 %s9, 1
    %s15 = ssub.s32 %s9, 2
    %s25 = sadd.s32 1, %s18
    %p26 = scmp.ge.s32.totalorder %s25, 1
    %s27 = scalar_select %p26, 0, %s25
    %s28 = sadd.s32 1, %s17
    %s29 = scalar_select %p26, %s28, %s17
    %p30 = scmp.ge.s32.totalorder %s29, 1
    %s31 = scalar_select %p30, 0, %s29
    %s32 = sadd.s32 1, %s16
    %s33 = scalar_select %p30, %s32, %s16
    %p34 = scmp.ge.s32.totalorder %s33, 8
    %s35 = scalar_select %p34, 0, %s33
    %s36 = ssub.s32 %s16, %s35
    %s37 = ssub.s32 %s17, %s31
    %s38 = sor.u32 %s36, %s37
    %p39 = scmp.eq.s32.totalorder %s38, 0
    %s41 = sadd.s32 %s40, 1
    %s42 = scalar_select %p39, %s40, %s41
    %p45 = pneg %p39
    %p46 = scmp.eq.s32.totalorder %s9, 7
    %p47 = por %p45, %p46
    %p48 = scmp.ne.s32.totalorder %s40, %s43
    %p49 = scmp.eq.s32.totalorder %s9, 0
    %p50 = por %p48, %p49
    %p51 = scmp.ne.s32.totalorder %s40, %s43
    %p52 = scmp.eq.s32.totalorder %s14, 7
    %p53 = por %p51, %p52
    %p54 = scmp.ne.s32.totalorder %s43, %s44
    %p55 = scmp.eq.s32.totalorder %s14, 0
    %p56 = por %p54, %p55
    %p57 = scmp.ne.s32.totalorder %s43, %s44
    %p58 = scmp.eq.s32.totalorder %s15, 7
    %p59 = por %p57, %p58
    %p61 = scmp.ne.s32.totalorder %s44, %s60
    %p62 = scmp.eq.s32.totalorder %s15, 0
    %p63 = por %p61, %p62
    %s64 = ssub.s32 %s16, %s35
    %s65 = ssub.s32 %s18, %s27
    %s66 = sor.u32 %s64, %s65
    %p67 = scmp.eq.s32.totalorder %s66, 0
    %s69 = sadd.s32 %s68, 1
    %s70 = scalar_select %p67, %s68, %s69
    %p73 = pneg %p67
    %p74 = scmp.eq.s32.totalorder %s9, 7
    %p75 = por %p73, %p74
    %p76 = scmp.ne.s32.totalorder %s68, %s71
    %p77 = scmp.eq.s32.totalorder %s9, 0
    %p78 = por %p76, %p77
    %p79 = scmp.ne.s32.totalorder %s68, %s71
    %p80 = scmp.eq.s32.totalorder %s14, 7
    %p81 = por %p79, %p80
    %p82 = scmp.ne.s32.totalorder %s71, %s72
    %p83 = scmp.eq.s32.totalorder %s14, 0
    %p84 = por %p82, %p83
    %p85 = scmp.ne.s32.totalorder %s71, %s72
    %p86 = scmp.eq.s32.totalorder %s15, 7
    %p87 = por %p85, %p86
    %p89 = scmp.ne.s32.totalorder %s72, %s88
    %p90 = scmp.eq.s32.totalorder %s15, 0
    %p91 = por %p89, %p90
    %s92 = ssub.s32 %s16, %s35
    %s93 = ssub.s32 %s18, %s27
    %s94 = sor.u32 %s92, %s93
    %p95 = scmp.eq.s32.totalorder %s94, 0
    %s97 = sadd.s32 %s96, 1
    %s98 = scalar_select %p95, %s96, %s97
    %p101 = pneg %p95
    %p102 = scmp.eq.s32.totalorder %s9, 7
    %p103 = por %p101, %p102
    %p104 = scmp.ne.s32.totalorder %s96, %s99
    %p105 = scmp.eq.s32.totalorder %s9, 0
    %p106 = por %p104, %p105
    %p107 = scmp.ne.s32.totalorder %s96, %s99
    %p108 = scmp.eq.s32.totalorder %s14, 7
    %p109 = por %p107, %p108
    %p110 = scmp.ne.s32.totalorder %s99, %s100
    %p111 = scmp.eq.s32.totalorder %s14, 0
    %p112 = por %p110, %p111
    %p113 = scmp.ne.s32.totalorder %s99, %s100
    %p114 = scmp.eq.s32.totalorder %s15, 7
    %p115 = por %p113, %p114
    %p117 = scmp.ne.s32.totalorder %s100, %s116
    %p118 = scmp.eq.s32.totalorder %s15, 0
    %p119 = por %p117, %p118
    %s120 = ssub.s32 %s16, %s35
    %s121 = ssub.s32 %s17, %s31
    %s122 = sor.u32 %s120, %s121
    %p123 = scmp.eq.s32.totalorder %s122, 0
    %s125 = sadd.s32 %s124, 1
    %s126 = scalar_select %p123, %s124, %s125
    %p129 = pneg %p123
    %p130 = scmp.eq.s32.totalorder %s9, 7
    %p131 = por %p129, %p130
    %p132 = scmp.ne.s32.totalorder %s124, %s127
    %p133 = scmp.eq.s32.totalorder %s9, 0
    %p134 = por %p132, %p133
    %p135 = scmp.ne.s32.totalorder %s124, %s127
    %p136 = scmp.eq.s32.totalorder %s14, 7
    %p137 = por %p135, %p136
    %p138 = scmp.ne.s32.totalorder %s127, %s128
    %p139 = scmp.eq.s32.totalorder %s14, 0
    %p140 = por %p138, %p139
    %p141 = scmp.ne.s32.totalorder %s127, %s128
    %p142 = scmp.eq.s32.totalorder %s15, 7
    %p143 = por %p141, %p142
    %p145 = scmp.ne.s32.totalorder %s128, %s144
    %p146 = scmp.eq.s32.totalorder %s15, 0
    %p147 = por %p145, %p146
    %p148 = scmp.le.s32.totalorder 1, %s9
    %p149 = scmp.lt.s32.totalorder %s9, 9
    %p150 = pnand %p148, %p149
    %p151 = pneg %p150
    // Predicated region
    $region9: #{_lambda_.28} parent=5 // pred_check
      _
    $region10: #{_lambda_.28} parent=5 // pred_check_branch
      %153 = sbr.rel (%p150) target = $region12
    $region11: #{_lambda_.28} parent=5 // pred_region
      %s154 = ssub.s32 %s9, 1
    $region12: #{_lambda_.28} parent=5 // pred_fallthru
      _
    %p155 = scmp.lt.s32.totalorder %s9, 8
    // Predicated region
    $region13: #{_lambda_.28} parent=5 // pred_check
      %p156 = pneg %p155
    $region14: #{_lambda_.28} parent=5 // pred_check_branch
      %158 = sbr.rel (%p156) target = $region16
    $region15: #{_lambda_.28} parent=5 // pred_region
      // Predicated region
      $region17: #{_lambda_.28} parent=15 // pred_check
        %p159 = pneg %p50
      $region18: #{_lambda_.28} parent=15 // pred_check_branch
        %161 = sbr.rel (%p159) target = $region20
      $region19: #{_lambda_.28} parent=15 // pred_region
        %p162 = scmp.lt.s32.totalorder %s16, 7
        %s163 = scalar_select %p162, %s16, 7
        %p164 = scmp.lt.s32.totalorder %s17, 0
        %s165 = scalar_select %p164, %s17, 0
        %s166 = sadd.s32 %s165, %s163
        %s167 = smul.addr %s166, 4
        %s168 = scalar_lea.vmem %s0, %s167
      $region20: #{_lambda_.28} parent=15 // pred_fallthru
        _
      // Predicated region
      $region21: #{_lambda_.28} parent=15 // pred_check
        %p169 = pneg %p78
      $region22: #{_lambda_.28} parent=15 // pred_check_branch
        %171 = sbr.rel (%p169) target = $region24
      $region23: #{_lambda_.28} parent=15 // pred_region
        %p172 = scmp.lt.s32.totalorder %s16, 7
        %s173 = scalar_select %p172, %s16, 7
        %p174 = scmp.lt.s32.totalorder %s18, 0
        %s175 = scalar_select %p174, %s18, 0
        %s176 = sadd.s32 %s175, %s173
        %s177 = smul.addr %s176, 4
        %s178 = scalar_lea.vmem %s1, %s177
      $region24: #{_lambda_.28} parent=15 // pred_fallthru
        _
      // Predicated region
      $region25: #{_lambda_.28} parent=15 // pred_check
        %p179 = pneg %p106
      $region26: #{_lambda_.28} parent=15 // pred_check_branch
        %181 = sbr.rel (%p179) target = $region28
      $region27: #{_lambda_.28} parent=15 // pred_region
        %p182 = scmp.lt.s32.totalorder %s16, 7
        %s183 = scalar_select %p182, %s16, 7
        %p184 = scmp.lt.s32.totalorder %s18, 0
        %s185 = scalar_select %p184, %s18, 0
        %s186 = sadd.s32 %s185, %s183
        %s187 = smul.addr %s186, 4
        %s188 = scalar_lea.vmem %s2, %s187
      $region28: #{_lambda_.28} parent=15 // pred_fallthru
        _
    $region16: #{_lambda_.28} parent=5 // pred_fallthru
      _
    %p189 = scmp.le.s32.totalorder 1, %s9
    %p190 = scmp.lt.s32.totalorder %s9, 9
    %p191 = pnand %p189, %p190
    %p192 = pneg %p191
    // Predicated region
    $region29: #{_lambda_.28} parent=5 // pred_check
      _
    $region30: #{_lambda_.28} parent=5 // pred_check_branch
      %194 = sbr.rel (%p191) target = $region32
    $region31: #{_lambda_.28} parent=5 // pred_region
      %s195 = ssub.s32 %s9, 1
      %p196 = scmp.lt.s32.totalorder %s19, 7
      %s197 = scalar_select %p196, %s19, 7
      %p198 = scmp.lt.s32.totalorder %s20, 0
      %s199 = scalar_select %p198, %s20, 0
      %s200 = sadd.s32 %s199, %s197
      %s201 = smul.addr %s200, 4
      %s202 = scalar_lea.vmem %s0, %s201
      %p203 = pneg %p56
      %p204 = pneg %p53
      %p205 = scmp.lt.s32.totalorder %s19, 7
      %s206 = scalar_select %p205, %s19, 7
      %p207 = scmp.lt.s32.totalorder %s21, 0
      %s208 = scalar_select %p207, %s21, 0
      %s209 = sadd.s32 %s208, %s206
      %s210 = smul.addr %s209, 4
      %s211 = scalar_lea.vmem %s1, %s210
      %p212 = pneg %p84
      %p213 = pneg %p81
      %p214 = scmp.lt.s32.totalorder %s19, 7
      %s215 = scalar_select %p214, %s19, 7
      %p216 = scmp.lt.s32.totalorder %s21, 0
      %s217 = scalar_select %p216, %s21, 0
      %s218 = sadd.s32 %s217, %s215
      %s219 = smul.addr %s218, 4
      %s220 = scalar_lea.vmem %s2, %s219
      %p221 = pneg %p112
      %p222 = pneg %p109
      %p223 = pneg %p140
      %p224 = pneg %p137
      %p225 = scmp.lt.s32.totalorder %s19, 7
      %s226 = scalar_select %p225, %s19, 7
      %p227 = scmp.lt.s32.totalorder %s20, 0
      %s228 = scalar_select %p227, %s20, 0
      %s229 = sadd.s32 %s228, %s226
      %s230 = smul.addr %s229, 4
      %s231 = scalar_lea.vmem %s3, %s230
      %p232 = scmp.lt.s32.totalorder %s19, 7
      %s233 = scalar_select %p232, %s19, 7
      %p234 = scmp.lt.s32.totalorder %s20, 0
      %s235 = scalar_select %p234, %s20, 0
      %s236 = sadd.s32 %s235, %s233
      %s237 = smul.addr %s236, 4
      %s238 = scalar_lea.vmem %s0, %s237
      %p239 = scmp.lt.s32.totalorder %s19, 7
      %s240 = scalar_select %p239, %s19, 7
      %p241 = scmp.lt.s32.totalorder %s21, 0
      %s242 = scalar_select %p241, %s21, 0
      %s243 = sadd.s32 %s242, %s240
      %s244 = smul.addr %s243, 4
      %s245 = scalar_lea.vmem %s1, %s244
      %p246 = scmp.lt.s32.totalorder %s19, 7
      %s247 = scalar_select %p246, %s19, 7
      %p248 = scmp.lt.s32.totalorder %s21, 0
      %s249 = scalar_select %p248, %s21, 0
      %s250 = sadd.s32 %s249, %s247
      %s251 = smul.addr %s250, 4
      %s252 = scalar_lea.vmem %s2, %s251
      %p253 = scmp.lt.s32.totalorder %s19, 7
      %s254 = scalar_select %p253, %s19, 7
      %p255 = scmp.lt.s32.totalorder %s20, 0
      %s256 = scalar_select %p255, %s20, 0
      %s257 = sadd.s32 %s256, %s254
      %s258 = smul.addr %s257, 4
      %s259 = scalar_lea.vmem %s3, %s258
      %p261 = scmp.eq.s32.totalorder %s21, 0
      // Predicated region
      $region33: #{_lambda_.28} parent=31 // pred_check
        %p262 = pneg %p261
      $region34: #{_lambda_.28} parent=31 // pred_check_branch
        %264 = sbr.rel (%p262) target = $region36
      $region35: #{_lambda_.28} parent=31 // pred_region
        %vm265 = vcmask 7168
        %266 = vst.msk [vmem:[#allocation2] sm:$0xff] %vm265, -inf
        %267 = vst.msk [vmem:[#allocation3] sm:$0xff] %vm265, 0.0
        %vm268 = vcmask 64512
        %269 = vst.msk [vmem:[#allocation4] sm:$0xff] %vm268, 0.0
      $region36: #{_lambda_.28} parent=31 // pred_fallthru
        _
      %s270 = smul.u32 %s21, 8
      %s271 = smul.u32 %s20, 8
      %s272 = sadd.s32 %s271, 7
      %p273 = scmp.le.s32.totalorder %s270, %s272
      // Predicated region
      $region37: #{_lambda_.28} parent=31 // pred_check
        %p274 = pneg %p273
      $region38: #{_lambda_.28} parent=31 // pred_check_branch
        %276 = sbr.rel (%p274) target = $region40
      $region39: #{_lambda_.28} parent=31 // pred_region
        %v277 = vld [vmem:[%s238] sm:$0xf]
        %v278 = vld [vmem:[%s245] sm:$0xf]
        %vm279 = vcmask 64512
        %v281 = vsel %vm279, %v277, 0
        %v284 = vsel %vm279, %v278, 0
        %286 = vmatpush.bf16.xpose.msra.mxu0 0
        %287 = vmatpush.bf16.xpose.msra.mxu0 0
        %288 = vmatpush.bf16.xpose.msra.mxu0 0
        %289 = vmatpush.bf16.xpose.msra.mxu0 0
        %290 = vmatpush.bf16.xpose.msra.mxu0 0
        %291 = vmatpush.bf16.xpose.msra.mxu0 0
        %292 = vmatpush.bf16.xpose.msra.mxu0 0
        %293 = vmatpush.bf16.xpose.msra.mxu0 %v284
        %294 = vmatmul.bf16.gmra.mxu0 %v281
        %v295 = vpop.f32.mrf.mxu0
        %v296 = vadd.f32 0.0, %v295
        %v297 = vpop.f32.mrf.mxu0
        %298 = vdwg.mxu0
        %v299 = vmul.f32 %v296, 0.35355338
        %v300 = vlaneseq
        %v301 = vshrl.u32 %v300, 7
        %v302 = vstv %s271
        %v303 = vadd.s32 %v302, %v301
        %v304 = vlaneseq
        %v305 = vand.u32 %v304, 127
        %v306 = vstv %s270
        %v307 = vadd.s32 %v306, %v305
        %vm308 = vcmp.gt.s32.totalorder %v307, %v303
        %v309 = vsel %vm308, -1e+30, %v299
        %v310 = vld [vmem:[#allocation2] sm:$0xff]
        %v311 = vsel %vm279, %v309, -inf
        %312 = vmax.xlane.f32.xlu0 %v311
        %v313 = vpop.xlane.xlu0 %312
        %v314 = vmax.f32 %v310, %v313
        %v315 = vsub.f32 %v310, %v314
        %v316 = vmul.f32 %v315, 1.442695
        %v317 = vpow.pop %v316
        %319 = vset.pattern.permute.xlu0 0
        %320 = vperm.xlu0 %319, %v314
        %v321 = vpop.permute.xlu0 %320
        %v323 = vsub.f32 %v309, %v321
        %v324 = vmul.f32 %v323, 1.442695
        %v325 = vpow.pop %v324
        %v326 = vld [vmem:[#allocation3] sm:$0xff]
        %v327 = vmul.f32 %v317, %v326
        %v328 = vsel %vm279, %v325, 0.0
        %329 = vadd.xlane.f32.xlu0 %v328
        %v330 = vpop.xlane.xlu0 %329
        %v331 = vadd.f32 %v327, %v330
        %vm332 = vcmask 7168
        %333 = vst.msk [vmem:[#allocation3] sm:$0xff] %vm332, %v331
        %v334 = vld [vmem:[#allocation4] sm:$0xff]
        %336 = vset.pattern.permute.xlu0 0
        %337 = vperm.xlu0 %336, %v317
        %v338 = vpop.permute.xlu0 %337
        %v340 = vmul.f32 %v338, %v334
        %v341 = vpack.c.bf16 %v325, %v325
        %v342 = vld [vmem:[%s252] sm:$0xf]
        %v344 = vsel %vm279, %v341, 0
        %vm346 = vcmask 1043456
        %v348 = vsel %vm346, %v342, 0
        %350 = vmatpush.bf16.msra.mxu0 0
        %351 = vmatpush.bf16.msra.mxu0 0
        %352 = vmatpush.bf16.msra.mxu0 0
        %353 = vmatpush.bf16.msra.mxu0 0
        %354 = vmatpush.bf16.msra.mxu0 0
        %355 = vmatpush.bf16.msra.mxu0 0
        %356 = vmatpush.bf16.msra.mxu0 0
        %357 = vmatpush.bf16.msra.mxu0 %v348
        %358 = vmatmul.bf16.gmra.mxu0 %v344
        %v359 = vpop.f32.mrf.mxu0
        %v360 = vadd.f32 0.0, %v359
        %v361 = vpop.f32.mrf.mxu0
        %362 = vdwg.mxu0
        %v363 = vadd.f32 %v340, %v360
        %364 = vst.msk [vmem:[#allocation4] sm:$0xff] %vm279, %v363
        %365 = vst.msk [vmem:[#allocation2] sm:$0xff] %vm332, %v314
      $region40: #{_lambda_.28} parent=31 // pred_fallthru
        _
      // Predicated region
      $region41: #{_lambda_.28} parent=31 // pred_check
        %p366 = pneg %p261
      $region42: #{_lambda_.28} parent=31 // pred_check_branch
        %368 = sbr.rel (%p366) target = $region44
      $region43: #{_lambda_.28} parent=31 // pred_region
        %v369 = vld [vmem:[#allocation4] sm:$0xff]
        %v370 = vld [vmem:[#allocation3] sm:$0xff]
        %v371 = vrcp.pop %v370
        %373 = vset.pattern.permute.xlu0 0
        %374 = vperm.xlu0 %373, %v371
        %v375 = vpop.permute.xlu0 %374
        %v377 = vmul.f32 %v369, %v375
        %v378 = vpack.c.bf16 %v377, %v377
        %vm379 = vcmask 60416
        %380 = vst.msk [vmem:[%s259] sm:$0xf] %vm379, %v378
      $region44: #{_lambda_.28} parent=31 // pred_fallthru
        _
      %p381 = scmp.lt.s32.totalorder %s19, 7
      %s382 = scalar_select %p381, %s19, 7
      %p383 = scmp.lt.s32.totalorder %s20, 0
      %s384 = scalar_select %p383, %s20, 0
      %s385 = sadd.s32 %s384, %s382
      %s386 = smul.addr %s385, 4
      %s387 = scalar_lea.vmem %s3, %s386
      // Predicated region
      $region45: #{_lambda_.28} parent=31 // pred_check
        %p388 = pneg %p137
      $region46: #{_lambda_.28} parent=31 // pred_check_branch
        %390 = sbr.rel (%p388) target = $region48
      $region47: #{_lambda_.28} parent=31 // pred_region
        _
      $region48: #{_lambda_.28} parent=31 // pred_fallthru
        _
    $region32: #{_lambda_.28} parent=5 // pred_fallthru
      _
    %p391 = scmp.le.s32.totalorder 2, %s9
    // Predicated region
    $region49: #{_lambda_.28} parent=5 // pred_check
      %p392 = pneg %p391
    $region50: #{_lambda_.28} parent=5 // pred_check_branch
      %394 = sbr.rel (%p392) target = $region52
    $region51: #{_lambda_.28} parent=5 // pred_region
      %s395 = ssub.s32 %s9, 2
      // Predicated region
      $region53: #{_lambda_.28} parent=51 // pred_check
        %p396 = pneg %p143
      $region54: #{_lambda_.28} parent=51 // pred_check_branch
        %398 = sbr.rel (%p396) target = $region56
      $region55: #{_lambda_.28} parent=51 // pred_region
        %p399 = scmp.lt.s32.totalorder %s22, 7
        %s400 = scalar_select %p399, %s22, 7
        %p401 = scmp.lt.s32.totalorder %s23, 0
        %s402 = scalar_select %p401, %s23, 0
        %s403 = sadd.s32 %s402, %s400
        %s404 = smul.addr %s403, 4
        %s405 = scalar_lea.vmem %s3, %s404
      $region56: #{_lambda_.28} parent=51 // pred_fallthru
        _
    $region52: #{_lambda_.28} parent=5 // pred_fallthru
      _
  $region6: #{_lambda_.28} parent=0 // loop_footer
    %s13 = sadd.s32 1, %s9
  $region7: #{_lambda_.28} parent=0 // loop_footer_branch
    %8 = sbr.rel target = $region3
  $region8: #{_lambda_.28} parent=0 // loop_exit
    _

// kernel: _lambda_.30
$region0: #{_lambda_.30}
  #allocation0 [shape = 'u32[]', space=smem, size = 0x4, offset = 0x4, fixed_abs, tag = 'smem constant byte address 0x4 - core index']
  #allocation1 [shape = 'u32[72,128]{1,0:T(1,128)}', space=vmem, size = 0x9000, scoped, tag = 'internal scratch']
  #allocation2 [shape = 'f32[16,32]{1,0:T(8,128)}', space=vmem, size = 0x2000, scoped, tag = 'scratch operand']
  %s0 = inlined_call_operand.vmem [shape: bf16[16,32], index: 0, kind: input, shape index: {}]
  %s1 = inlined_call_operand.vmem [shape: bf16[32,32], index: 1, kind: input, shape index: {}]
  %s2 = inlined_call_operand.vmem [shape: f32[1,32], index: 2, kind: input, shape index: {}]
  %s3 = inlined_call_operand.vmem [shape: bf16[16,32], index: 3, kind: output, shape index: {}]
  %s4 = sld [smem:[#allocation0]]
  $region30: #{_lambda_.30} parent=0
    _
  %s6 = ssub.s32 1, %s4
  %s7 = scalar_select 0, %s6, %s4
  // Predicated region
  $region2: #{_lambda_.30} parent=0 // pred_check
    _
  $region3: #{_lambda_.30} parent=0 // pred_check_branch
    %9 = sbr.rel (0) target = $region5
  $region4: #{_lambda_.30} parent=0 // pred_region
    _
  $region5: #{_lambda_.30} parent=0 // pred_fallthru
    _
  // Predicated region
  $region6: #{_lambda_.30} parent=0 // pred_check
    _
  $region7: #{_lambda_.30} parent=0 // pred_check_branch
    %11 = sbr.rel (0) target = $region9
  $region8: #{_lambda_.30} parent=0 // pred_region
    _
  $region9: #{_lambda_.30} parent=0 // pred_fallthru
    _
  // Predicated region
  $region10: #{_lambda_.30} parent=0 // pred_check
    _
  $region11: #{_lambda_.30} parent=0 // pred_check_branch
    %13 = sbr.rel (0) target = $region13
  $region12: #{_lambda_.30} parent=0 // pred_region
    _
  $region13: #{_lambda_.30} parent=0 // pred_fallthru
    _
  %p15 = scmp.eq.s32.totalorder 0, 0
  // Predicated region
  $region14: #{_lambda_.30} parent=0 // pred_check
    %p16 = pneg %p15
  $region15: #{_lambda_.30} parent=0 // pred_check_branch
    %18 = sbr.rel (%p16) target = $region17
  $region16: #{_lambda_.30} parent=0 // pred_region
    %vm19 = vcmask 261120
    %20 = vst.msk [vmem:[#allocation2] sm:$0xff] %vm19, 0.0
    %21 = vst.msk [vmem:[#allocation2 + $0x8] sm:$0xff] %vm19, 0.0
  $region17: #{_lambda_.30} parent=0 // pred_fallthru
    _
  %v22 = vld [vmem:[%s0] sm:$0xf]
  %v23 = vld [vmem:[%s0 + $0x4] sm:$0xf]
  %v24 = vld [vmem:[#allocation2] sm:$0xff]
  %v25 = vld [vmem:[#allocation2 + $0x8] sm:$0xff]
  %v26 = vld [vmem:[%s1] sm:$0xf]
  %v27 = vld [vmem:[%s1 + $0x4] sm:$0xf]
  %v28 = vld [vmem:[%s1 + $0x8] sm:$0xf]
  %v29 = vld [vmem:[%s1 + $0xc] sm:$0xf]
  %v32 = vunpack.c.l.b16 %v22
  %v33 = vunpack.c.l.b16 %v23
  %v34 = vpack.c.b16 %v33, %v32
  %v39 = vunpack.c.l.b16 %v26
  %v40 = vunpack.c.l.b16 %v27
  %v41 = vunpack.c.l.b16 %v28
  %v42 = vunpack.c.l.b16 %v29
  %v43 = vpack.c.b16 %v40, %v39
  %v44 = vpack.c.b16 %v42, %v41
  %vm47 = vcmask 261120
  %v49 = vsel %vm47, %v34, 0
  %51 = vmatpush.bf16.msra.mxu0 0
  %52 = vmatpush.bf16.msra.mxu0 0
  %53 = vmatpush.bf16.msra.mxu0 0
  %54 = vmatpush.bf16.msra.mxu0 0
  %55 = vmatpush.bf16.msra.mxu0 0
  %56 = vmatpush.bf16.msra.mxu0 0
  %57 = vmatpush.bf16.msra.mxu0 %v44
  %58 = vmatpush.bf16.msra.mxu0 %v43
  %59 = vmatmul.bf16.gmra.mxu0 %v49
  %v60 = vpop.f32.mrf.mxu0
  %v61 = vadd.f32 0.0, %v60
  %v62 = vpop.f32.mrf.mxu0
  %v63 = vadd.f32 0.0, %v62
  %64 = vdwg.mxu0
  %v65 = vadd.f32 %v24, %v61
  %v66 = vadd.f32 %v25, %v63
  %67 = vst.msk [vmem:[#allocation2] sm:$0xff] %vm47, %v65
  %68 = vst.msk [vmem:[#allocation2 + $0x8] sm:$0xff] %vm47, %v66
  // Predicated region
  $region18: #{_lambda_.30} parent=0 // pred_check
    %p69 = pneg %p15
  $region19: #{_lambda_.30} parent=0 // pred_check_branch
    %71 = sbr.rel (%p69) target = $region21
  $region20: #{_lambda_.30} parent=0 // pred_region
    %v72 = vld [vmem:[#allocation2] sm:$0xff]
    %v73 = vld [vmem:[#allocation2 + $0x8] sm:$0xff]
    %v74 = vld [vmem:[%s2] sm:$0x1]
    %v76 = vperm.slane %v74, 0
    %v78 = vadd.f32 %v72, %v76
    %v79 = vadd.f32 %v73, %v76
    %v80 = vpack.c.bf16 %v78, %v78
    %v81 = vpack.c.bf16 %v79, %v79
    %vm82 = vcmask 257024
    %83 = vst.msk [vmem:[%s3] sm:$0xf] %vm82, %v80
    %84 = vst.msk [vmem:[%s3 + $0x4] sm:$0xf] %vm82, %v81
  $region21: #{_lambda_.30} parent=0 // pred_fallthru
    _
  // Predicated region
  $region22: #{_lambda_.30} parent=0 // pred_check
    _
  $region23: #{_lambda_.30} parent=0 // pred_check_branch
    %86 = sbr.rel (0) target = $region25
  $region24: #{_lambda_.30} parent=0 // pred_region
    _
  $region25: #{_lambda_.30} parent=0 // pred_fallthru
    _
  // Predicated region
  $region26: #{_lambda_.30} parent=0 // pred_check
    _
  $region27: #{_lambda_.30} parent=0 // pred_check_branch
    %88 = sbr.rel (0) target = $region29
  $region28: #{_lambda_.30} parent=0 // pred_region
    _
  $region29: #{_lambda_.30} parent=0 // pred_fallthru
    _

// kernel: _lambda_.29
$region0: #{_lambda_.29}
  #allocation0 [shape = 'u32[]', space=smem, size = 0x4, offset = 0x4, fixed_abs, tag = 'smem constant byte address 0x4 - core index']
  #allocation1 [shape = 'u32[72,128]{1,0:T(1,128)}', space=vmem, size = 0x9000, scoped, tag = 'internal scratch']
  #allocation2 [shape = 'f32[16,32]{1,0:T(8,128)}', space=vmem, size = 0x2000, scoped, tag = 'scratch operand']
  %s0 = inlined_call_operand.vmem [shape: bf16[16,32], index: 0, kind: input, shape index: {}]
  %s1 = inlined_call_operand.vmem [shape: bf16[32,32], index: 1, kind: input, shape index: {}]
  %s2 = inlined_call_operand.vmem [shape: f32[1,32], index: 2, kind: input, shape index: {}]
  %s3 = inlined_call_operand.vmem [shape: bf16[16,32], index: 3, kind: input, shape index: {}]
  %s4 = inlined_call_operand.vmem [shape: f32[1,32], index: 4, kind: input, shape index: {}]
  %s5 = inlined_call_operand.vmem [shape: f32[1,32], index: 5, kind: input, shape index: {}]
  %s6 = inlined_call_operand.vmem [shape: bf16[16,32], index: 6, kind: output, shape index: {}]
  %s7 = sld [smem:[#allocation0]]
  $region42: #{_lambda_.29} parent=0
    _
  %s9 = ssub.s32 1, %s7
  %s10 = scalar_select 0, %s9, %s7
  // Predicated region
  $region2: #{_lambda_.29} parent=0 // pred_check
    _
  $region3: #{_lambda_.29} parent=0 // pred_check_branch
    %12 = sbr.rel (0) target = $region5
  $region4: #{_lambda_.29} parent=0 // pred_region
    _
  $region5: #{_lambda_.29} parent=0 // pred_fallthru
    _
  // Predicated region
  $region6: #{_lambda_.29} parent=0 // pred_check
    _
  $region7: #{_lambda_.29} parent=0 // pred_check_branch
    %14 = sbr.rel (0) target = $region9
  $region8: #{_lambda_.29} parent=0 // pred_region
    _
  $region9: #{_lambda_.29} parent=0 // pred_fallthru
    _
  // Predicated region
  $region10: #{_lambda_.29} parent=0 // pred_check
    _
  $region11: #{_lambda_.29} parent=0 // pred_check_branch
    %16 = sbr.rel (0) target = $region13
  $region12: #{_lambda_.29} parent=0 // pred_region
    _
  $region13: #{_lambda_.29} parent=0 // pred_fallthru
    _
  // Predicated region
  $region14: #{_lambda_.29} parent=0 // pred_check
    _
  $region15: #{_lambda_.29} parent=0 // pred_check_branch
    %18 = sbr.rel (0) target = $region17
  $region16: #{_lambda_.29} parent=0 // pred_region
    _
  $region17: #{_lambda_.29} parent=0 // pred_fallthru
    _
  // Predicated region
  $region18: #{_lambda_.29} parent=0 // pred_check
    _
  $region19: #{_lambda_.29} parent=0 // pred_check_branch
    %20 = sbr.rel (0) target = $region21
  $region20: #{_lambda_.29} parent=0 // pred_region
    _
  $region21: #{_lambda_.29} parent=0 // pred_fallthru
    _
  // Predicated region
  $region22: #{_lambda_.29} parent=0 // pred_check
    _
  $region23: #{_lambda_.29} parent=0 // pred_check_branch
    %22 = sbr.rel (0) target = $region25
  $region24: #{_lambda_.29} parent=0 // pred_region
    _
  $region25: #{_lambda_.29} parent=0 // pred_fallthru
    _
  %p24 = scmp.eq.s32.totalorder 0, 0
  // Predicated region
  $region26: #{_lambda_.29} parent=0 // pred_check
    %p25 = pneg %p24
  $region27: #{_lambda_.29} parent=0 // pred_check_branch
    %27 = sbr.rel (%p25) target = $region29
  $region28: #{_lambda_.29} parent=0 // pred_region
    %vm28 = vcmask 261120
    %29 = vst.msk [vmem:[#allocation2] sm:$0xff] %vm28, 0.0
    %30 = vst.msk [vmem:[#allocation2 + $0x8] sm:$0xff] %vm28, 0.0
  $region29: #{_lambda_.29} parent=0 // pred_fallthru
    _
  %v31 = vld [vmem:[%s0] sm:$0xf]
  %v32 = vld [vmem:[%s0 + $0x4] sm:$0xf]
  %v33 = vld [vmem:[#allocation2] sm:$0xff]
  %v34 = vld [vmem:[#allocation2 + $0x8] sm:$0xff]
  %v35 = vld [vmem:[%s1] sm:$0xf]
  %v36 = vld [vmem:[%s1 + $0x4] sm:$0xf]
  %v37 = vld [vmem:[%s1 + $0x8] sm:$0xf]
  %v38 = vld [vmem:[%s1 + $0xc] sm:$0xf]
  %v41 = vunpack.c.l.b16 %v31
  %v42 = vunpack.c.l.b16 %v32
  %v43 = vpack.c.b16 %v42, %v41
  %v48 = vunpack.c.l.b16 %v35
  %v49 = vunpack.c.l.b16 %v36
  %v50 = vunpack.c.l.b16 %v37
  %v51 = vunpack.c.l.b16 %v38
  %v52 = vpack.c.b16 %v49, %v48
  %v53 = vpack.c.b16 %v51, %v50
  %vm56 = vcmask 261120
  %v58 = vsel %vm56, %v43, 0
  %60 = vmatpush.bf16.msra.mxu0 0
  %61 = vmatpush.bf16.msra.mxu0 0
  %62 = vmatpush.bf16.msra.mxu0 0
  %63 = vmatpush.bf16.msra.mxu0 0
  %64 = vmatpush.bf16.msra.mxu0 0
  %65 = vmatpush.bf16.msra.mxu0 0
  %66 = vmatpush.bf16.msra.mxu0 %v53
  %67 = vmatpush.bf16.msra.mxu0 %v52
  %68 = vmatmul.bf16.gmra.mxu0 %v58
  %v69 = vpop.f32.mrf.mxu0
  %v70 = vadd.f32 0.0, %v69
  %v71 = vpop.f32.mrf.mxu0
  %v72 = vadd.f32 0.0, %v71
  %73 = vdwg.mxu0
  %v74 = vadd.f32 %v33, %v70
  %v75 = vadd.f32 %v34, %v72
  %76 = vst.msk [vmem:[#allocation2] sm:$0xff] %vm56, %v74
  %77 = vst.msk [vmem:[#allocation2 + $0x8] sm:$0xff] %vm56, %v75
  // Predicated region
  $region30: #{_lambda_.29} parent=0 // pred_check
    %p78 = pneg %p24
  $region31: #{_lambda_.29} parent=0 // pred_check_branch
    %80 = sbr.rel (%p78) target = $region33
  $region32: #{_lambda_.29} parent=0 // pred_region
    %v81 = vld [vmem:[#allocation2] sm:$0xff]
    %v82 = vld [vmem:[#allocation2 + $0x8] sm:$0xff]
    %v83 = vld [vmem:[%s2] sm:$0x1]
    %v85 = vperm.slane %v83, 0
    %v87 = vadd.f32 %v81, %v85
    %v88 = vadd.f32 %v82, %v85
    %v89 = vld [vmem:[%s3] sm:$0xf]
    %v90 = vld [vmem:[%s3 + $0x4] sm:$0xf]
    %v91 = vunpack.c.l.bf16 %v89
    %v92 = vunpack.c.l.bf16 %v90
    %v93 = vadd.f32 %v87, %v91
    %v94 = vadd.f32 %v88, %v92
    %v95 = vsel %vm56, %v93, 0.0
    %96 = vadd.xlane.f32.xlu0 %v95
    %v97 = vpop.xlane.xlu0 %96
    %v98 = vsel %vm56, %v94, 0.0
    %99 = vadd.xlane.f32.xlu0 %v98
    %v100 = vpop.xlane.xlu0 %99
    %v101 = vrcp.pop 32.0
    %v102 = vmul.f32 32.0, %v101
    %v103 = vsub.f32 1.0, %v102
    %v104 = vmul.f32 %v101, %v103
    %v105 = vadd.f32 %v101, %v104
    %vm106 = vweird.f32 %v101
    %v107 = vsel %vm106, %v101, %v105
    %v108 = vmul.f32 %v97, %v107
    %v109 = vmul.f32 %v100, %v107
    %v110 = vsub.f32 %v93, %v108
    %v111 = vsub.f32 %v94, %v109
    %v112 = vmul.f32 %v110, %v110
    %v113 = vmul.f32 %v111, %v111
    %v114 = vsel %vm56, %v112, 0.0
    %115 = vadd.xlane.f32.xlu0 %v114
    %v116 = vpop.xlane.xlu0 %115
    %v117 = vsel %vm56, %v113, 0.0
    %118 = vadd.xlane.f32.xlu0 %v117
    %v119 = vpop.xlane.xlu0 %118
    %v120 = vmul.f32 %v116, %v107
    %v121 = vmul.f32 %v119, %v107
    %v122 = vadd.f32 %v120, 1e-05
    %v123 = vadd.f32 %v121, 1e-05
    %v124 = vrsqrt.pop %v122
    %v125 = vmul.f32 %v124, %v122
    %v126 = vmul.f32 %v125, %v124
    %v127 = vmul.f32 0.5, %v126
    %v128 = vsub.f32 1.5, %v127
    %v129 = vmul.f32 %v124, %v128
    %vm130 = vweird.f32 %v122
    %vm131 = vweird.f32 %v124
    %vm132 = vmor %vm130, %vm131
    %v133 = vsel %vm132, %v124, %v129
    %v134 = vrsqrt.pop %v123
    %v135 = vmul.f32 %v134, %v123
    %v136 = vmul.f32 %v135, %v134
    %v137 = vmul.f32 0.5, %v136
    %v138 = vsub.f32 1.5, %v137
    %v139 = vmul.f32 %v134, %v138
    %vm140 = vweird.f32 %v123
    %vm141 = vweird.f32 %v134
    %vm142 = vmor %vm140, %vm141
    %v143 = vsel %vm142, %v134, %v139
    %v144 = vmul.f32 %v110, %v133
    %v145 = vmul.f32 %v111, %v143
    %v146 = vld [vmem:[%s4] sm:$0x1]
    %v148 = vperm.slane %v146, 0
    %v150 = vmul.f32 %v144, %v148
    %v151 = vmul.f32 %v145, %v148
    %v152 = vld [vmem:[%s5] sm:$0x1]
    %v154 = vperm.slane %v152, 0
    %v156 = vadd.f32 %v150, %v154
    %v157 = vadd.f32 %v151, %v154
    %v158 = vpack.c.bf16 %v156, %v156
    %v159 = vpack.c.bf16 %v157, %v157
    %vm160 = vcmask 257024
    %161 = vst.msk [vmem:[%s6] sm:$0xf] %vm160, %v158
    %162 = vst.msk [vmem:[%s6 + $0x4] sm:$0xf] %vm160, %v159
  $region33: #{_lambda_.29} parent=0 // pred_fallthru
    _
  // Predicated region
  $region34: #{_lambda_.29} parent=0 // pred_check
    _
  $region35: #{_lambda_.29} parent=0 // pred_check_branch
    %164 = sbr.rel (0) target = $region37
  $region36: #{_lambda_.29} parent=0 // pred_region
    _
  $region37: #{_lambda_.29} parent=0 // pred_fallthru
    _
  // Predicated region
  $region38: #{_lambda_.29} parent=0 // pred_check
    _
  $region39: #{_lambda_.29} parent=0 // pred_check_branch
    %166 = sbr.rel (0) target = $region41
  $region40: #{_lambda_.29} parent=0 // pred_region
    _
  $region41: #{_lambda_.29} parent=0 // pred_fallthru
    _

// kernel: _lambda_.31
$region0: #{_lambda_.31}
  #allocation0 [shape = 'u32[]', space=smem, size = 0x4, offset = 0x4, fixed_abs, tag = 'smem constant byte address 0x4 - core index']
  #allocation1 [shape = 'u32[72,128]{1,0:T(1,128)}', space=vmem, size = 0x9000, scoped, tag = 'internal scratch']
  #allocation2 [shape = 'f32[16,64]{1,0:T(8,128)}', space=vmem, size = 0x2000, scoped, tag = 'scratch operand']
  %s0 = inlined_call_operand.vmem [shape: bf16[16,32], index: 0, kind: input, shape index: {}]
  %s1 = inlined_call_operand.vmem [shape: bf16[32,64], index: 1, kind: input, shape index: {}]
  %s2 = inlined_call_operand.vmem [shape: f32[1,64], index: 2, kind: input, shape index: {}]
  %s3 = inlined_call_operand.vmem [shape: bf16[16,64], index: 3, kind: output, shape index: {}]
  %s4 = sld [smem:[#allocation0]]
  $region30: #{_lambda_.31} parent=0
    _
  %s6 = ssub.s32 1, %s4
  %s7 = scalar_select 0, %s6, %s4
  // Predicated region
  $region2: #{_lambda_.31} parent=0 // pred_check
    _
  $region3: #{_lambda_.31} parent=0 // pred_check_branch
    %9 = sbr.rel (0) target = $region5
  $region4: #{_lambda_.31} parent=0 // pred_region
    _
  $region5: #{_lambda_.31} parent=0 // pred_fallthru
    _
  // Predicated region
  $region6: #{_lambda_.31} parent=0 // pred_check
    _
  $region7: #{_lambda_.31} parent=0 // pred_check_branch
    %11 = sbr.rel (0) target = $region9
  $region8: #{_lambda_.31} parent=0 // pred_region
    _
  $region9: #{_lambda_.31} parent=0 // pred_fallthru
    _
  // Predicated region
  $region10: #{_lambda_.31} parent=0 // pred_check
    _
  $region11: #{_lambda_.31} parent=0 // pred_check_branch
    %13 = sbr.rel (0) target = $region13
  $region12: #{_lambda_.31} parent=0 // pred_region
    _
  $region13: #{_lambda_.31} parent=0 // pred_fallthru
    _
  %p15 = scmp.eq.s32.totalorder 0, 0
  // Predicated region
  $region14: #{_lambda_.31} parent=0 // pred_check
    %p16 = pneg %p15
  $region15: #{_lambda_.31} parent=0 // pred_check_branch
    %18 = sbr.rel (%p16) target = $region17
  $region16: #{_lambda_.31} parent=0 // pred_region
    %vm19 = vcmask 523264
    %20 = vst.msk [vmem:[#allocation2] sm:$0xff] %vm19, 0.0
    %21 = vst.msk [vmem:[#allocation2 + $0x8] sm:$0xff] %vm19, 0.0
  $region17: #{_lambda_.31} parent=0 // pred_fallthru
    _
  %v22 = vld [vmem:[%s0] sm:$0xf]
  %v23 = vld [vmem:[%s0 + $0x4] sm:$0xf]
  %v24 = vld [vmem:[#allocation2] sm:$0xff]
  %v25 = vld [vmem:[#allocation2 + $0x8] sm:$0xff]
  %v26 = vld [vmem:[%s1] sm:$0xf]
  %v27 = vld [vmem:[%s1 + $0x4] sm:$0xf]
  %v28 = vld [vmem:[%s1 + $0x8] sm:$0xf]
  %v29 = vld [vmem:[%s1 + $0xc] sm:$0xf]
  %v32 = vunpack.c.l.b16 %v22
  %v33 = vunpack.c.l.b16 %v23
  %v34 = vpack.c.b16 %v33, %v32
  %v39 = vunpack.c.l.b16 %v26
  %v40 = vunpack.c.l.b16 %v27
  %v41 = vunpack.c.l.b16 %v28
  %v42 = vunpack.c.l.b16 %v29
  %v43 = vpack.c.b16 %v40, %v39
  %v44 = vpack.c.b16 %v42, %v41
  %vm47 = vcmask 261120
  %v49 = vsel %vm47, %v34, 0
  %51 = vmatpush.bf16.msra.mxu0 0
  %52 = vmatpush.bf16.msra.mxu0 0
  %53 = vmatpush.bf16.msra.mxu0 0
  %54 = vmatpush.bf16.msra.mxu0 0
  %55 = vmatpush.bf16.msra.mxu0 0
  %56 = vmatpush.bf16.msra.mxu0 0
  %57 = vmatpush.bf16.msra.mxu0 %v44
  %58 = vmatpush.bf16.msra.mxu0 %v43
  %59 = vmatmul.bf16.gmra.mxu0 %v49
  %v60 = vpop.f32.mrf.mxu0
  %v61 = vadd.f32 0.0, %v60
  %v62 = vpop.f32.mrf.mxu0
  %v63 = vadd.f32 0.0, %v62
  %64 = vdwg.mxu0
  %v65 = vadd.f32 %v24, %v61
  %v66 = vadd.f32 %v25, %v63
  %vm67 = vcmask 523264
  %68 = vst.msk [vmem:[#allocation2] sm:$0xff] %vm67, %v65
  %69 = vst.msk [vmem:[#allocation2 + $0x8] sm:$0xff] %vm67, %v66
  // Predicated region
  $region18: #{_lambda_.31} parent=0 // pred_check
    %p70 = pneg %p15
  $region19: #{_lambda_.31} parent=0 // pred_check_branch
    %72 = sbr.rel (%p70) target = $region21
  $region20: #{_lambda_.31} parent=0 // pred_region
    %v73 = vld [vmem:[#allocation2] sm:$0xff]
    %v74 = vld [vmem:[#allocation2 + $0x8] sm:$0xff]
    %v75 = vld [vmem:[%s2] sm:$0x1]
    %v77 = vperm.slane %v75, 0
    %v79 = vadd.f32 %v73, %v77
    %v80 = vadd.f32 %v74, %v77
    %v81 = vpack.c.bf16 %v79, %v79
    %v82 = vpack.c.bf16 %v80, %v80
    %vm83 = vcmask 519168
    %84 = vst.msk [vmem:[%s3] sm:$0xf] %vm83, %v81
    %85 = vst.msk [vmem:[%s3 + $0x4] sm:$0xf] %vm83, %v82
  $region21: #{_lambda_.31} parent=0 // pred_fallthru
    _
  // Predicated region
  $region22: #{_lambda_.31} parent=0 // pred_check
    _
  $region23: #{_lambda_.31} parent=0 // pred_check_branch
    %87 = sbr.rel (0) target = $region25
  $region24: #{_lambda_.31} parent=0 // pred_region
    _
  $region25: #{_lambda_.31} parent=0 // pred_fallthru
    _
  // Predicated region
  $region26: #{_lambda_.31} parent=0 // pred_check
    _
  $region27: #{_lambda_.31} parent=0 // pred_check_branch
    %89 = sbr.rel (0) target = $region29
  $region28: #{_lambda_.31} parent=0 // pred_region
    _
  $region29: #{_lambda_.31} parent=0 // pred_fallthru
    _

// kernel: _lambda_.34
$region0: #{_lambda_.34}
  #allocation0 [shape = 'u32[]', space=smem, size = 0x4, offset = 0x4, fixed_abs, tag = 'smem constant byte address 0x4 - core index']
  #allocation1 [shape = 'u32[72,128]{1,0:T(1,128)}', space=vmem, size = 0x9000, scoped, tag = 'internal scratch']
  %s0 = inlined_call_operand.vmem [shape: bf16[16,32], index: 0, kind: input, shape index: {}]
  %s1 = inlined_call_operand.vmem [shape: bf16[32,128], index: 1, kind: input, shape index: {}]
  %s2 = inlined_call_operand.vmem [shape: f32[1,128], index: 2, kind: input, shape index: {}]
  %s3 = inlined_call_operand.vmem [shape: bf16[128,32], index: 3, kind: input, shape index: {}]
  %s4 = inlined_call_operand.vmem [shape: f32[1,32], index: 4, kind: input, shape index: {}]
  %s5 = inlined_call_operand.vmem [shape: f32[1,32], index: 5, kind: input, shape index: {}]
  %s6 = inlined_call_operand.vmem [shape: f32[1,32], index: 6, kind: input, shape index: {}]
  %s7 = inlined_call_operand.vmem [shape: bf16[16,32], index: 7, kind: output, shape index: {}]
  %s8 = sld [smem:[#allocation0]]
  $region38: #{_lambda_.34} parent=0
    _
  %s10 = ssub.s32 1, %s8
  %s11 = scalar_select 0, %s10, %s8
  // Predicated region
  $region2: #{_lambda_.34} parent=0 // pred_check
    _
  $region3: #{_lambda_.34} parent=0 // pred_check_branch
    %13 = sbr.rel (0) target = $region5
  $region4: #{_lambda_.34} parent=0 // pred_region
    _
  $region5: #{_lambda_.34} parent=0 // pred_fallthru
    _
  // Predicated region
  $region6: #{_lambda_.34} parent=0 // pred_check
    _
  $region7: #{_lambda_.34} parent=0 // pred_check_branch
    %15 = sbr.rel (0) target = $region9
  $region8: #{_lambda_.34} parent=0 // pred_region
    _
  $region9: #{_lambda_.34} parent=0 // pred_fallthru
    _
  // Predicated region
  $region10: #{_lambda_.34} parent=0 // pred_check
    _
  $region11: #{_lambda_.34} parent=0 // pred_check_branch
    %17 = sbr.rel (0) target = $region13
  $region12: #{_lambda_.34} parent=0 // pred_region
    _
  $region13: #{_lambda_.34} parent=0 // pred_fallthru
    _
  // Predicated region
  $region14: #{_lambda_.34} parent=0 // pred_check
    _
  $region15: #{_lambda_.34} parent=0 // pred_check_branch
    %19 = sbr.rel (0) target = $region17
  $region16: #{_lambda_.34} parent=0 // pred_region
    _
  $region17: #{_lambda_.34} parent=0 // pred_fallthru
    _
  // Predicated region
  $region18: #{_lambda_.34} parent=0 // pred_check
    _
  $region19: #{_lambda_.34} parent=0 // pred_check_branch
    %21 = sbr.rel (0) target = $region21
  $region20: #{_lambda_.34} parent=0 // pred_region
    _
  $region21: #{_lambda_.34} parent=0 // pred_fallthru
    _
  // Predicated region
  $region22: #{_lambda_.34} parent=0 // pred_check
    _
  $region23: #{_lambda_.34} parent=0 // pred_check_branch
    %23 = sbr.rel (0) target = $region25
  $region24: #{_lambda_.34} parent=0 // pred_region
    _
  $region25: #{_lambda_.34} parent=0 // pred_fallthru
    _
  // Predicated region
  $region26: #{_lambda_.34} parent=0 // pred_check
    _
  $region27: #{_lambda_.34} parent=0 // pred_check_branch
    %25 = sbr.rel (0) target = $region29
  $region28: #{_lambda_.34} parent=0 // pred_region
    _
  $region29: #{_lambda_.34} parent=0 // pred_fallthru
    _
  %v27 = vld [vmem:[%s0] sm:$0xf]
  %v28 = vld [vmem:[%s0 + $0x4] sm:$0xf]
  %v29 = vunpack.c.l.bf16 %v27
  %v30 = vunpack.c.l.bf16 %v28
  %v31 = vld [vmem:[%s1] sm:$0xf]
  %v32 = vld [vmem:[%s1 + $0x4] sm:$0xf]
  %v33 = vld [vmem:[%s1 + $0x8] sm:$0xf]
  %v34 = vld [vmem:[%s1 + $0xc] sm:$0xf]
  %v35 = vld [vmem:[%s2] sm:$0x1]
  %v37 = vperm.slane %v35, 0
  %v41 = vunpack.c.l.b16 %v27
  %v42 = vunpack.c.l.b16 %v28
  %v43 = vpack.c.b16 %v42, %v41
  %v48 = vunpack.c.l.b16 %v31
  %v49 = vunpack.c.l.b16 %v32
  %v50 = vunpack.c.l.b16 %v33
  %v51 = vunpack.c.l.b16 %v34
  %v52 = vpack.c.b16 %v49, %v48
  %v53 = vpack.c.b16 %v51, %v50
  %vm56 = vcmask 261120
  %v58 = vsel %vm56, %v43, 0
  %60 = vmatpush.bf16.msra.mxu0 0
  %61 = vmatpush.bf16.msra.mxu0 0
  %62 = vmatpush.bf16.msra.mxu0 0
  %63 = vmatpush.bf16.msra.mxu0 0
  %64 = vmatpush.bf16.msra.mxu0 0
  %65 = vmatpush.bf16.msra.mxu0 0
  %66 = vmatpush.bf16.msra.mxu0 %v53
  %67 = vmatpush.bf16.msra.mxu0 %v52
  %68 = vmatmul.bf16.gmra.mxu0 %v58
  %v69 = vpop.f32.mrf.mxu0
  %v70 = vadd.f32 %v37, %v69
  %v71 = vpop.f32.mrf.mxu0
  %v72 = vadd.f32 %v37, %v71
  %73 = vdwg.mxu0
  %v74 = vmax.f32 %v70, 0.0
  %v75 = vmax.f32 %v72, 0.0
  %v76 = vpack.c.bf16 %v75, %v74
  %v77 = vld [vmem:[%s3] sm:$0xf]
  %v78 = vld [vmem:[%s3 + $0x4] sm:$0xf]
  %v79 = vld [vmem:[%s3 + $0x8] sm:$0xf]
  %v80 = vld [vmem:[%s3 + $0xc] sm:$0xf]
  %v81 = vld [vmem:[%s3 + $0x10] sm:$0xf]
  %v82 = vld [vmem:[%s3 + $0x14] sm:$0xf]
  %v83 = vld [vmem:[%s3 + $0x18] sm:$0xf]
  %v84 = vld [vmem:[%s3 + $0x1c] sm:$0xf]
  %v85 = vld [vmem:[%s3 + $0x20] sm:$0xf]
  %v86 = vld [vmem:[%s3 + $0x24] sm:$0xf]
  %v87 = vld [vmem:[%s3 + $0x28] sm:$0xf]
  %v88 = vld [vmem:[%s3 + $0x2c] sm:$0xf]
  %v89 = vld [vmem:[%s3 + $0x30] sm:$0xf]
  %v90 = vld [vmem:[%s3 + $0x34] sm:$0xf]
  %v91 = vld [vmem:[%s3 + $0x38] sm:$0xf]
  %v92 = vld [vmem:[%s3 + $0x3c] sm:$0xf]
  %v93 = vld [vmem:[%s4] sm:$0x1]
  %v95 = vperm.slane %v93, 0
  %v113 = vunpack.c.l.b16 %v77
  %v114 = vunpack.c.l.b16 %v78
  %v115 = vunpack.c.l.b16 %v79
  %v116 = vunpack.c.l.b16 %v80
  %v117 = vunpack.c.l.b16 %v81
  %v118 = vunpack.c.l.b16 %v82
  %v119 = vunpack.c.l.b16 %v83
  %v120 = vunpack.c.l.b16 %v84
  %v121 = vunpack.c.l.b16 %v85
  %v122 = vunpack.c.l.b16 %v86
  %v123 = vunpack.c.l.b16 %v87
  %v124 = vunpack.c.l.b16 %v88
  %v125 = vunpack.c.l.b16 %v89
  %v126 = vunpack.c.l.b16 %v90
  %v127 = vunpack.c.l.b16 %v91
  %v128 = vunpack.c.l.b16 %v92
  %v129 = vpack.c.b16 %v114, %v113
  %v130 = vpack.c.b16 %v116, %v115
  %v131 = vpack.c.b16 %v118, %v117
  %v132 = vpack.c.b16 %v120, %v119
  %v133 = vpack.c.b16 %v122, %v121
  %v134 = vpack.c.b16 %v124, %v123
  %v135 = vpack.c.b16 %v126, %v125
  %v136 = vpack.c.b16 %v128, %v127
  %145 = vmatpush.bf16.msra.mxu0 %v136
  %146 = vmatpush.bf16.msra.mxu0 %v135
  %147 = vmatpush.bf16.msra.mxu0 %v134
  %148 = vmatpush.bf16.msra.mxu0 %v133
  %149 = vmatpush.bf16.msra.mxu0 %v132
  %150 = vmatpush.bf16.msra.mxu0 %v131
  %151 = vmatpush.bf16.msra.mxu0 %v130
  %152 = vmatpush.bf16.msra.mxu0 %v129
  %153 = vmatmul.bf16.gmra.mxu0 %v76
  %v154 = vpop.f32.mrf.mxu0
  %v155 = vadd.f32 %v95, %v154
  %v156 = vpop.f32.mrf.mxu0
  %v157 = vadd.f32 %v95, %v156
  %158 = vdwg.mxu0
  %v159 = vadd.f32 %v155, %v29
  %v160 = vadd.f32 %v157, %v30
  %v161 = vsel %vm56, %v159, 0.0
  %162 = vadd.xlane.f32.xlu0 %v161
  %v163 = vpop.xlane.xlu0 %162
  %v164 = vsel %vm56, %v160, 0.0
  %165 = vadd.xlane.f32.xlu0 %v164
  %v166 = vpop.xlane.xlu0 %165
  %v167 = vrcp.pop 32.0
  %v168 = vmul.f32 32.0, %v167
  %v169 = vsub.f32 1.0, %v168
  %v170 = vmul.f32 %v167, %v169
  %v171 = vadd.f32 %v167, %v170
  %vm172 = vweird.f32 %v167
  %v173 = vsel %vm172, %v167, %v171
  %v174 = vmul.f32 %v163, %v173
  %v175 = vmul.f32 %v166, %v173
  %v176 = vsub.f32 %v159, %v174
  %v177 = vsub.f32 %v160, %v175
  %v178 = vmul.f32 %v176, %v176
  %v179 = vmul.f32 %v177, %v177
  %v180 = vsel %vm56, %v178, 0.0
  %181 = vadd.xlane.f32.xlu0 %v180
  %v182 = vpop.xlane.xlu0 %181
  %v183 = vsel %vm56, %v179, 0.0
  %184 = vadd.xlane.f32.xlu0 %v183
  %v185 = vpop.xlane.xlu0 %184
  %v186 = vmul.f32 %v182, %v173
  %v187 = vmul.f32 %v185, %v173
  %v188 = vadd.f32 %v186, 1e-05
  %v189 = vadd.f32 %v187, 1e-05
  %v190 = vrsqrt.pop %v188
  %v191 = vmul.f32 %v190, %v188
  %v192 = vmul.f32 %v191, %v190
  %v193 = vmul.f32 0.5, %v192
  %v194 = vsub.f32 1.5, %v193
  %v195 = vmul.f32 %v190, %v194
  %vm196 = vweird.f32 %v188
  %vm197 = vweird.f32 %v190
  %vm198 = vmor %vm196, %vm197
  %v199 = vsel %vm198, %v190, %v195
  %v200 = vrsqrt.pop %v189
  %v201 = vmul.f32 %v200, %v189
  %v202 = vmul.f32 %v201, %v200
  %v203 = vmul.f32 0.5, %v202
  %v204 = vsub.f32 1.5, %v203
  %v205 = vmul.f32 %v200, %v204
  %vm206 = vweird.f32 %v189
  %vm207 = vweird.f32 %v200
  %vm208 = vmor %vm206, %vm207
  %v209 = vsel %vm208, %v200, %v205
  %v210 = vmul.f32 %v176, %v199
  %v211 = vmul.f32 %v177, %v209
  %v212 = vld [vmem:[%s5] sm:$0x1]
  %v214 = vperm.slane %v212, 0
  %v216 = vmul.f32 %v210, %v214
  %v217 = vmul.f32 %v211, %v214
  %v218 = vld [vmem:[%s6] sm:$0x1]
  %v220 = vperm.slane %v218, 0
  %v222 = vadd.f32 %v216, %v220
  %v223 = vadd.f32 %v217, %v220
  %v224 = vpack.c.bf16 %v222, %v222
  %v225 = vpack.c.bf16 %v223, %v223
  %vm226 = vcmask 257024
  %227 = vst.msk [vmem:[%s7] sm:$0xf] %vm226, %v224
  %228 = vst.msk [vmem:[%s7 + $0x4] sm:$0xf] %vm226, %v225
  // Predicated region
  $region30: #{_lambda_.34} parent=0 // pred_check
    _
  $region31: #{_lambda_.34} parent=0 // pred_check_branch
    %230 = sbr.rel (0) target = $region33
  $region32: #{_lambda_.34} parent=0 // pred_region
    _
  $region33: #{_lambda_.34} parent=0 // pred_fallthru
    _
  // Predicated region
  $region34: #{_lambda_.34} parent=0 // pred_check
    _
  $region35: #{_lambda_.34} parent=0 // pred_check_branch
    %232 = sbr.rel (0) target = $region37
  $region36: #{_lambda_.34} parent=0 // pred_region
    _
  $region37: #{_lambda_.34} parent=0 // pred_fallthru
    _

// kernel: _lambda_.43
$region0: #{_lambda_.43}
  #allocation0 [shape = 'u32[]', space=smem, size = 0x4, offset = 0x4, fixed_abs, tag = 'smem constant byte address 0x4 - core index']
  #allocation1 [shape = 'u32[72,128]{1,0:T(1,128)}', space=vmem, size = 0x9000, scoped, tag = 'internal scratch']
  #allocation2 [shape = 'f32[16,256]{1,0:T(8,128)}', space=vmem, size = 0x4000, scoped, tag = 'scratch operand']
  %s0 = inlined_call_operand.vmem [shape: bf16[16,32], index: 0, kind: input, shape index: {}]
  %s1 = inlined_call_operand.vmem [shape: bf16[32,256], index: 1, kind: input, shape index: {}]
  %s2 = inlined_call_operand.vmem [shape: f32[1,256], index: 2, kind: input, shape index: {}]
  %s3 = inlined_call_operand.vmem [shape: f32[1,32], index: 3, kind: input, shape index: {}]
  %s4 = inlined_call_operand.vmem [shape: f32[1,32], index: 4, kind: input, shape index: {}]
  %s5 = inlined_call_operand.hbm [shape: f32[16,256], index: 5, kind: output, shape index: {}]
  %s6 = sld [smem:[#allocation0]]
  $region38: #{_lambda_.43} parent=0
    _
  %s8 = ssub.s32 1, %s6
  %s9 = scalar_select 0, %s8, %s6
  $region1: #{_lambda_.43} parent=0
    #allocation3 [shape = 'u8[16384]{0}', space=vmem, size = 0x4000, scoped, tag = 'output window, operand 0, single buffered']
    #allocation4 [shape = 's32[1]{0}', space=sflag, size = 0x4, scoped, tag = 'scoped memory for _lambda_.43']
    %10 = vsyncpa [#allocation4], 0
    // Predicated region
    $region2: #{_lambda_.43} parent=1 // pred_check
      _
    $region3: #{_lambda_.43} parent=1 // pred_check_branch
      %12 = sbr.rel (0) target = $region5
    $region4: #{_lambda_.43} parent=1 // pred_region
      _
    $region5: #{_lambda_.43} parent=1 // pred_fallthru
      _
    // Predicated region
    $region6: #{_lambda_.43} parent=1 // pred_check
      _
    $region7: #{_lambda_.43} parent=1 // pred_check_branch
      %14 = sbr.rel (0) target = $region9
    $region8: #{_lambda_.43} parent=1 // pred_region
      _
    $region9: #{_lambda_.43} parent=1 // pred_fallthru
      _
    // Predicated region
    $region10: #{_lambda_.43} parent=1 // pred_check
      _
    $region11: #{_lambda_.43} parent=1 // pred_check_branch
      %16 = sbr.rel (0) target = $region13
    $region12: #{_lambda_.43} parent=1 // pred_region
      _
    $region13: #{_lambda_.43} parent=1 // pred_fallthru
      _
    // Predicated region
    $region14: #{_lambda_.43} parent=1 // pred_check
      _
    $region15: #{_lambda_.43} parent=1 // pred_check_branch
      %18 = sbr.rel (0) target = $region17
    $region16: #{_lambda_.43} parent=1 // pred_region
      _
    $region17: #{_lambda_.43} parent=1 // pred_fallthru
      _
    // Predicated region
    $region18: #{_lambda_.43} parent=1 // pred_check
      _
    $region19: #{_lambda_.43} parent=1 // pred_check_branch
      %20 = sbr.rel (0) target = $region21
    $region20: #{_lambda_.43} parent=1 // pred_region
      _
    $region21: #{_lambda_.43} parent=1 // pred_fallthru
      _
    %p22 = scmp.eq.s32.totalorder 0, 0
    // Predicated region
    $region22: #{_lambda_.43} parent=1 // pred_check
      %p23 = pneg %p22
    $region23: #{_lambda_.43} parent=1 // pred_check_branch
      %25 = sbr.rel (%p23) target = $region25
    $region24: #{_lambda_.43} parent=1 // pred_region
      %26 = vst [vmem:[#allocation2] sm:$0xff] 0.0
      %27 = vst [vmem:[#allocation2 + $0x8] sm:$0xff] 0.0
      %28 = vst [vmem:[#allocation2 + $0x10] sm:$0xff] 0.0
      %29 = vst [vmem:[#allocation2 + $0x18] sm:$0xff] 0.0
    $region25: #{_lambda_.43} parent=1 // pred_fallthru
      _
    %v30 = vld [vmem:[%s0] sm:$0xf]
    %v31 = vld [vmem:[%s0 + $0x4] sm:$0xf]
    %v32 = vunpack.c.l.bf16 %v30
    %v33 = vunpack.c.l.bf16 %v31
    %vm34 = vcmask 261120
    %v35 = vsel %vm34, %v32, 0.0
    %36 = vadd.xlane.f32.xlu0 %v35
    %v37 = vpop.xlane.xlu0 %36
    %v38 = vsel %vm34, %v33, 0.0
    %39 = vadd.xlane.f32.xlu0 %v38
    %v40 = vpop.xlane.xlu0 %39
    %v41 = vrcp.pop 32.0
    %v42 = vmul.f32 32.0, %v41
    %v43 = vsub.f32 1.0, %v42
    %v44 = vmul.f32 %v41, %v43
    %v45 = vadd.f32 %v41, %v44
    %vm46 = vweird.f32 %v41
    %v47 = vsel %vm46, %v41, %v45
    %v48 = vmul.f32 %v37, %v47
    %v49 = vmul.f32 %v40, %v47
    %v50 = vsub.f32 %v32, %v48
    %v51 = vsub.f32 %v33, %v49
    %v52 = vmul.f32 %v50, %v50
    %v53 = vmul.f32 %v51, %v51
    %v54 = vsel %vm34, %v52, 0.0
    %55 = vadd.xlane.f32.xlu0 %v54
    %v56 = vpop.xlane.xlu0 %55
    %v57 = vsel %vm34, %v53, 0.0
    %58 = vadd.xlane.f32.xlu0 %v57
    %v59 = vpop.xlane.xlu0 %58
    %v60 = vmul.f32 %v56, %v47
    %v61 = vmul.f32 %v59, %v47
    %v62 = vadd.f32 %v60, 1e-06
    %v63 = vadd.f32 %v61, 1e-06
    %v64 = vrsqrt.pop %v62
    %v65 = vmul.f32 %v64, %v62
    %v66 = vmul.f32 %v65, %v64
    %v67 = vmul.f32 0.5, %v66
    %v68 = vsub.f32 1.5, %v67
    %v69 = vmul.f32 %v64, %v68
    %vm70 = vweird.f32 %v62
    %vm71 = vweird.f32 %v64
    %vm72 = vmor %vm70, %vm71
    %v73 = vsel %vm72, %v64, %v69
    %v74 = vrsqrt.pop %v63
    %v75 = vmul.f32 %v74, %v63
    %v76 = vmul.f32 %v75, %v74
    %v77 = vmul.f32 0.5, %v76
    %v78 = vsub.f32 1.5, %v77
    %v79 = vmul.f32 %v74, %v78
    %vm80 = vweird.f32 %v63
    %vm81 = vweird.f32 %v74
    %vm82 = vmor %vm80, %vm81
    %v83 = vsel %vm82, %v74, %v79
    %v84 = vmul.f32 %v50, %v73
    %v85 = vmul.f32 %v51, %v83
    %v86 = vld [vmem:[%s3] sm:$0x1]
    %v88 = vperm.slane %v86, 0
    %v90 = vmul.f32 %v84, %v88
    %v91 = vmul.f32 %v85, %v88
    %v92 = vld [vmem:[%s4] sm:$0x1]
    %v94 = vperm.slane %v92, 0
    %v96 = vadd.f32 %v90, %v94
    %v97 = vadd.f32 %v91, %v94
    %v98 = vpack.c.bf16 %v97, %v96
    %v99 = vld [vmem:[#allocation2] sm:$0xff]
    %v100 = vld [vmem:[#allocation2 + $0x8] sm:$0xff]
    %v101 = vld [vmem:[#allocation2 + $0x10] sm:$0xff]
    %v102 = vld [vmem:[#allocation2 + $0x18] sm:$0xff]
    %v103 = vld [vmem:[%s1] sm:$0xff]
    %v104 = vld [vmem:[%s1 + $0x8] sm:$0xff]
    %v105 = vld [vmem:[%s1 + $0x10] sm:$0xff]
    %v106 = vld [vmem:[%s1 + $0x18] sm:$0xff]
    %v111 = vunpack.c.l.b16 %v103
    %v112 = vunpack.c.h.b16 %v103
    %v113 = vunpack.c.l.b16 %v104
    %v114 = vunpack.c.h.b16 %v104
    %v115 = vunpack.c.l.b16 %v105
    %v116 = vunpack.c.h.b16 %v105
    %v117 = vunpack.c.l.b16 %v106
    %v118 = vunpack.c.h.b16 %v106
    %v119 = vpack.c.b16 %v113, %v111
    %v120 = vpack.c.b16 %v114, %v112
    %v121 = vpack.c.b16 %v117, %v115
    %v122 = vpack.c.b16 %v118, %v116
    %v128 = vsel %vm34, %v98, 0
    %130 = vmatpush.bf16.msra.mxu0 0
    %131 = vmatpush.bf16.msra.mxu0 0
    %132 = vmatpush.bf16.msra.mxu0 0
    %133 = vmatpush.bf16.msra.mxu0 0
    %134 = vmatpush.bf16.msra.mxu0 0
    %135 = vmatpush.bf16.msra.mxu0 0
    %136 = vmatpush.bf16.msra.mxu0 %v121
    %137 = vmatpush.bf16.msra.mxu0 %v119
    %138 = vmatmul.bf16.gmra.mxu0 %v128
    %v139 = vpop.f32.mrf.mxu0
    %v140 = vadd.f32 0.0, %v139
    %v141 = vpop.f32.mrf.mxu0
    %v142 = vadd.f32 0.0, %v141
    %143 = vdwg.mxu0
    %144 = vmatpush.bf16.msra.mxu0 0
    %145 = vmatpush.bf16.msra.mxu0 0
    %146 = vmatpush.bf16.msra.mxu0 0
    %147 = vmatpush.bf16.msra.mxu0 0
    %148 = vmatpush.bf16.msra.mxu0 0
    %149 = vmatpush.bf16.msra.mxu0 0
    %150 = vmatpush.bf16.msra.mxu0 %v122
    %151 = vmatpush.bf16.msra.mxu0 %v120
    %152 = vmatmul.bf16.gmra.mxu0 %v128
    %v153 = vpop.f32.mrf.mxu0
    %v154 = vadd.f32 0.0, %v153
    %v155 = vpop.f32.mrf.mxu0
    %v156 = vadd.f32 0.0, %v155
    %157 = vdwg.mxu0
    %v158 = vadd.f32 %v99, %v140
    %v159 = vadd.f32 %v100, %v154
    %v160 = vadd.f32 %v101, %v142
    %v161 = vadd.f32 %v102, %v156
    %162 = vst [vmem:[#allocation2] sm:$0xff] %v158
    %163 = vst [vmem:[#allocation2 + $0x8] sm:$0xff] %v159
    %164 = vst [vmem:[#allocation2 + $0x10] sm:$0xff] %v160
    %165 = vst [vmem:[#allocation2 + $0x18] sm:$0xff] %v161
    // Predicated region
    $region26: #{_lambda_.43} parent=1 // pred_check
      %p166 = pneg %p22
    $region27: #{_lambda_.43} parent=1 // pred_check_branch
      %168 = sbr.rel (%p166) target = $region29
    $region28: #{_lambda_.43} parent=1 // pred_region
      %v169 = vld [vmem:[#allocation2] sm:$0xff]
      %v170 = vld [vmem:[#allocation2 + $0x8] sm:$0xff]
      %v171 = vld [vmem:[#allocation2 + $0x10] sm:$0xff]
      %v172 = vld [vmem:[#allocation2 + $0x18] sm:$0xff]
      %v173 = vld [vmem:[%s2] sm:$0x3]
      %v175 = vperm.slane %v173, 0
      %v176 = vperm.slane %v173, 1
      %v179 = vadd.f32 %v169, %v175
      %v180 = vadd.f32 %v170, %v176
      %v181 = vadd.f32 %v171, %v175
      %v182 = vadd.f32 %v172, %v176
      %183 = vst [vmem:[#allocation3] sm:$0xff] %v179
      %184 = vst [vmem:[#allocation3 + $0x8] sm:$0xff] %v180
      %185 = vst [vmem:[#allocation3 + $0x10] sm:$0xff] %v181
      %186 = vst [vmem:[#allocation3 + $0x18] sm:$0xff] %v182
    $region29: #{_lambda_.43} parent=1 // pred_fallthru
      _
    // Predicated region
    $region30: #{_lambda_.43} parent=1 // pred_check
      _
    $region31: #{_lambda_.43} parent=1 // pred_check_branch
      %188 = sbr.rel (0) target = $region33
    $region32: #{_lambda_.43} parent=1 // pred_region
      %190 = vsyncadd [#allocation4], 0
      %s191 = sshll.u32 [#allocation3], 4
      %s192 = int_to_ptr.vmem [resolvable:$true] %s191
      %s193 = sshll.u32 %s5, 4
      %s194 = int_to_ptr.hbm [resolvable:$true] %s193
      %199 = dma.vmem_to_hbm [thread:$0]  %s192, 512, %s194, [#allocation4], 256, 256, 16
    $region33: #{_lambda_.43} parent=1 // pred_fallthru
      _
    // Predicated region
    $region34: #{_lambda_.43} parent=1 // pred_check
      _
    $region35: #{_lambda_.43} parent=1 // pred_check_branch
      %201 = sbr.rel (0) target = $region37
    $region36: #{_lambda_.43} parent=1 // pred_region
      %203 = dma.done [#allocation4], 512
    $region37: #{_lambda_.43} parent=1 // pred_fallthru
      _
    %204 = vsyncpa [#allocation4], 1

</llo_original>
